<compile_context>
chip_gen: v7x
topology: tpu7x:2x2x1
jax: 0.10.0
libtpu: 0.0.40
codegen_flags: <defaults>
</compile_context>

<pallas_src>
import jax
import jax.numpy as jnp
from jax.experimental import pallas as pl
from jax.experimental.pallas import tpu as pltpu


_PARAM_ORDER = (
    "ew1_e", "ew1_d", "eb1", "ew2", "eb2",
    "nw1_xi", "nw1_xj", "nw1_ef", "nb1", "nw2", "nb2",
    "cw1", "cb1", "cw2_row", "ln_g", "ln_b",
)


def _silu(v):
    return v * jax.nn.sigmoid(v)


def egnn_fused_kernel(
    # graph data (constant across the layer grid)
    x_ref, pos_ref, gi_ref, gj_ref, ea_ref, invdeg_ref,
    # edge_mlp  (first linear split: edge_attr part + dist row)
    ew1_e_ref, ew1_d_ref, eb1_ref, ew2_ref, eb2_ref,
    # node_mlp  (first linear split: x_i part + x_j part + edge_feature part)
    nw1_xi_ref, nw1_xj_ref, nw1_ef_ref, nb1_ref, nw2_ref, nb2_ref,
    # coord_mlp (cw2 stored transposed as a row -> lane reduce instead of K=1 matmul)
    cw1_ref, cb1_ref, cw2r_ref,
    # layer norm
    lng_ref, lnb_ref,
    # carried outputs (VMEM-resident across the layer grid)
    xo_ref, po_ref,
):
    f32 = jnp.float32
    l = pl.program_id(0)

    # Seed the resident carry buffers from the inputs at layer 0.
    @pl.when(l == 0)
    def _init():
        xo_ref[...] = x_ref[...]
        po_ref[...] = pos_ref[...]

    x = xo_ref[...]                      # [N, D]
    pos = po_ref[...]                    # [N, 3]
    gi = gi_ref[...]                     # [E, N] one-hot of target node (edge_index[1])
    gj = gj_ref[...]                     # [E, N] one-hot of source node (edge_index[0])
    ea = ea_ref[...]                     # [E, edge_dim]
    inv_deg = invdeg_ref[...]            # [N, 1]  1 / max(in-degree, 1)

    n_nodes = x.shape[0]
    denom = max(n_nodes - 1, 1)          # torch.std uses Bessel; guard N==1

    # --- position normalization ---
    pos_mean = jnp.mean(pos, axis=0, keepdims=True)
    pos_var = jnp.sum((pos - pos_mean) ** 2, axis=0, keepdims=True) / denom
    pos_std = jnp.maximum(jnp.sqrt(pos_var), 1e-8)
    posn = (pos - pos_mean) / pos_std

    # --- node-level projections of x for the node_mlp's x_i / x_j slices
    #     (done at node width N, then gathered; exact row selection) ---
    xi_proj = jnp.dot(x, nw1_xi_ref[...], preferred_element_type=f32)   # [N, H]
    xj_proj = jnp.dot(x, nw1_xj_ref[...], preferred_element_type=f32)   # [N, H]

    # --- gather endpoints via one-hot matmuls (exact selects) ---
    xi_e = jnp.dot(gi, xi_proj, preferred_element_type=f32)   # [E, H]
    xj_e = jnp.dot(gj, xj_proj, preferred_element_type=f32)   # [E, H]
    p_i = jnp.dot(gi, posn, preferred_element_type=f32)       # [E, 3]
    p_j = jnp.dot(gj, posn, preferred_element_type=f32)       # [E, 3]
    rel = p_i - p_j
    dist = jnp.sqrt(jnp.sum(rel * rel, axis=1, keepdims=True))           # [E, 1]

    # --- edge_mlp( cat([edge_attr, dist]) ): concat folded into split weights,
    #     the K=1 dist column done on the VPU as a broadcast outer product ---
    h = (jnp.dot(ea, ew1_e_ref[...], preferred_element_type=f32)
         + dist * ew1_d_ref[...]
         + eb1_ref[...])
    h = _silu(h)
    ef = jnp.dot(h, ew2_ref[...], preferred_element_type=f32) + eb2_ref[...]   # [E, H]

    # --- node_mlp( cat([x_i, x_j, ef]) ): concat folded into split weights,
    #     x_i / x_j contributions already projected at node level ---
    h = (xi_e + xj_e
         + jnp.dot(ef, nw1_ef_ref[...], preferred_element_type=f32)
         + nb1_ref[...])
    h = _silu(h)
    msg = jnp.dot(h, nw2_ref[...], preferred_element_type=f32) + nb2_ref[...]  # [E, D]

    # --- scatter-mean over target nodes: gi^T @ msg without materializing gi^T ---
    agg = jax.lax.dot_general(gi, msg, (((0,), (0,)), ((), ())),
                              preferred_element_type=f32)          # [N, D] (sum)
    agg = agg * inv_deg                                             # mean, 0 if deg==0

    # --- residual + LayerNorm (eps = 1e-5, torch default) ---
    y = agg + x
    mu = jnp.mean(y, axis=-1, keepdims=True)
    var = jnp.mean((y - mu) ** 2, axis=-1, keepdims=True)
    out = (y - mu) * jax.lax.rsqrt(var + 1e-5) * lng_ref[...] + lnb_ref[...]   # [N, D]

    # --- coordinate update.  coord_mlp only sees the TARGET node, so it runs
    #     entirely at node level; the per-node scalar then multiplies the
    #     scatter-sum of rel_pos:  sum_e cm_e*rel_e  ==  cm_node * (gi^T @ rel).
    hc = _silu(jnp.dot(out, cw1_ref[...], preferred_element_type=f32) + cb1_ref[...])
    cm_node = jnp.sum(hc * cw2r_ref[...], axis=-1, keepdims=True)   # [N, 1] Linear(H,1)
    rel_agg = jax.lax.dot_general(gi, rel, (((0,), (0,)), ((), ())),
                                  preferred_element_type=f32)       # [N, 3] (sum)
    pos_update = cm_node * rel_agg                                   # [N, 3]

    xo_ref[...] = out
    po_ref[...] = pos + pos_update * pos_std


def _const_index_map(ndim):
    return lambda l: (0,) * ndim


def _layer_index_map(ntail):
    return lambda l: (l,) + (0,) * ntail


@jax.jit
def egnn_forward(x, pos, gi, gj, edge_attr, inv_deg, params):
    """Runs all EGNN layers in one fused pallas_call. `params` are layer-stacked."""
    num_layers = params["ew2"].shape[0]

    data_inputs = (x, pos, gi, gj, edge_attr, inv_deg)
    weight_inputs = tuple(params[k] for k in _PARAM_ORDER)

    in_specs = (
        [pl.BlockSpec(a.shape, _const_index_map(a.ndim)) for a in data_inputs]
        + [pl.BlockSpec((None,) + a.shape[1:], _layer_index_map(a.ndim - 1))
           for a in weight_inputs]
    )
    out_specs = (
        pl.BlockSpec(x.shape, _const_index_map(2)),
        pl.BlockSpec(pos.shape, _const_index_map(2)),
    )

    # Size the scoped VMEM limit from what is actually resident (data + two
    # buffered copies of the streamed weights + resident outputs + headroom);
    # cap at 64 MiB so the request stays below physical VMEM on every chip.
    total_bytes = sum(int(a.size) * a.dtype.itemsize
                      for a in data_inputs + weight_inputs)
    total_bytes += int(x.size) * 4 + int(pos.size) * 4    # resident outputs
    vmem_limit = int(min(max(3 * total_bytes + (4 << 20), 16 << 20), 64 << 20))

    return pl.pallas_call(
        egnn_fused_kernel,
        out_shape=(
            jax.ShapeDtypeStruct(x.shape, jnp.float32),
            jax.ShapeDtypeStruct(pos.shape, jnp.float32),
        ),
        grid_spec=pltpu.PrefetchScalarGridSpec(
            num_scalar_prefetch=0,
            grid=(num_layers,),
            in_specs=in_specs,
            out_specs=out_specs,
        ),
        compiler_params=pltpu.CompilerParams(
            dimension_semantics=("arbitrary",),   # layers are a sequential carry
            vmem_limit_bytes=vmem_limit,
        ),
    )(*data_inputs, *weight_inputs)


def init_layer_params(key, node_dim, edge_dim, hidden_dim):
    ks = jax.random.split(key, 12)

    def w(k, shape, fan_in):
        return (jax.random.normal(k, shape, jnp.float32)
                / jnp.sqrt(fan_in)).astype(jnp.float32)

    # edge_mlp: Linear(edge_dim+1, H), SiLU, Linear(H, H)
    ew1 = w(ks[0], (edge_dim + 1, hidden_dim), edge_dim + 1)
    # node_mlp: Linear(2*node_dim+H, H), SiLU, Linear(H, node_dim)
    nw1 = w(ks[1], (2 * node_dim + hidden_dim, hidden_dim), 2 * node_dim + hidden_dim)
    return {
        "ew1_e": ew1[:edge_dim, :],
        "ew1_d": ew1[edge_dim:, :],                                   # [1, H] (dist row)
        "eb1": w(ks[2], (1, hidden_dim), edge_dim + 1),
        "ew2": w(ks[3], (hidden_dim, hidden_dim), hidden_dim),
        "eb2": w(ks[4], (1, hidden_dim), hidden_dim),
        "nw1_xi": nw1[:node_dim, :],
        "nw1_xj": nw1[node_dim:2 * node_dim, :],
        "nw1_ef": nw1[2 * node_dim:, :],
        "nb1": w(ks[5], (1, hidden_dim), 2 * node_dim + hidden_dim),
        "nw2": w(ks[6], (hidden_dim, node_dim), hidden_dim),
        "nb2": w(ks[7], (1, node_dim), hidden_dim),
        # coord_mlp: Linear(node_dim, H), SiLU, Linear(H, 1, bias=False)
        # (input width is node_dim; reference module requires node_dim == hidden_dim)
        "cw1": w(ks[8], (node_dim, hidden_dim), node_dim),
        "cb1": w(ks[9], (1, hidden_dim), node_dim),
        "cw2_row": w(ks[10], (1, hidden_dim), hidden_dim),            # Linear(H,1).T
        # LayerNorm(node_dim): default init
        "ln_g": jnp.ones((1, node_dim), jnp.float32),
        "ln_b": jnp.zeros((1, node_dim), jnp.float32),
    }


def egnn_reference(x, pos, edge_index, edge_attr, per_layer_params):
    """Pure-JAX reference (same math, gather/scatter via indexing)."""
    src, tgt = edge_index[0], edge_index[1]
    n = x.shape[0]
    for p in per_layer_params:
        pos_mean = jnp.mean(pos, axis=0, keepdims=True)
        pos_std = jnp.maximum(jnp.std(pos, axis=0, ddof=1, keepdims=True), 1e-8)
        posn = (pos - pos_mean) / pos_std
        x_i, x_j = x[tgt], x[src]
        rel = posn[tgt] - posn[src]
        dist = jnp.sqrt(jnp.sum(rel * rel, axis=1, keepdims=True))
        ew1 = jnp.concatenate([p["ew1_e"], p["ew1_d"]], axis=0)
        h = jax.nn.silu(jnp.concatenate([edge_attr, dist], -1) @ ew1 + p["eb1"])
        ef = h @ p["ew2"] + p["eb2"]
        nw1 = jnp.concatenate([p["nw1_xi"], p["nw1_xj"], p["nw1_ef"]], axis=0)
        h = jax.nn.silu(jnp.concatenate([x_i, x_j, ef], -1) @ nw1 + p["nb1"])
        msg = h @ p["nw2"] + p["nb2"]
        agg = jnp.zeros((n, msg.shape[1]), jnp.float32).at[tgt].add(msg)
        deg = jnp.zeros((n,), jnp.float32).at[tgt].add(1.0)
        agg = agg / jnp.maximum(deg, 1.0)[:, None]
        y = agg + x
        mu = jnp.mean(y, -1, keepdims=True)
        var = jnp.mean((y - mu) ** 2, -1, keepdims=True)
        out = (y - mu) * jax.lax.rsqrt(var + 1e-5) * p["ln_g"] + p["ln_b"]
        hc = jax.nn.silu(out[tgt] @ p["cw1"] + p["cb1"])
        cm = jnp.sum(hc * p["cw2_row"], axis=-1, keepdims=True)
        pupd = jnp.zeros((n, 3), jnp.float32).at[tgt].add(cm * rel)
        x = out
        pos = pos + pupd * pos_std
    return x, pos


if __name__ == "__main__":
    # Demo sizes: node_dim == hidden_dim (required by the reference coord_mlp).
    node_dim, edge_dim, hidden_dim, num_layers = 32, 4, 32, 4
    num_nodes, num_edges = 16, 48

    key = jax.random.PRNGKey(0)
    k_x, k_pos, k_ei, k_ea, k_params = jax.random.split(key, 5)

    x = jax.random.normal(k_x, (num_nodes, node_dim), jnp.float32)
    pos = jax.random.normal(k_pos, (num_nodes, 3), jnp.float32)
    edge_index = jax.random.randint(k_ei, (2, num_edges), 0, num_nodes)  # (src, tgt)
    edge_attr = jax.random.normal(k_ea, (num_edges, edge_dim), jnp.float32)

    # One-hot incidence matrices (0/1 exact): x_j = x[src], x_i = x[tgt].
    gj = jax.nn.one_hot(edge_index[0], num_nodes, dtype=jnp.float32)    # [E, N]
    gi = jax.nn.one_hot(edge_index[1], num_nodes, dtype=jnp.float32)    # [E, N]
    deg = jnp.sum(gi, axis=0)
    inv_deg = (1.0 / jnp.maximum(deg, 1.0)).reshape(num_nodes, 1)       # [N, 1]

    per_layer = [init_layer_params(k, node_dim, edge_dim, hidden_dim)
                 for k in jax.random.split(k_params, num_layers)]
    params = {k: jnp.stack([p[k] for p in per_layer], axis=0) for k in _PARAM_ORDER}

    x_out, pos_out = egnn_forward(x, pos, gi, gj, edge_attr, inv_deg, params)
    jax.block_until_ready((x_out, pos_out))

    assert x_out.shape == (num_nodes, node_dim)
    assert pos_out.shape == (num_nodes, 3)
    assert bool(jnp.all(jnp.isfinite(x_out))) and bool(jnp.all(jnp.isfinite(pos_out)))

    # Cross-check against the pure-JAX reference (loose tol: matmul precision).
    x_ref, pos_ref = egnn_reference(x, pos, edge_index, edge_attr, per_layer)
    assert bool(jnp.allclose(x_out, x_ref, atol=5e-2, rtol=5e-2))
    assert bool(jnp.allclose(pos_out, pos_ref, atol=5e-2, rtol=5e-2))

    print("KERNEL_OK")
</pallas_src>

<mosaic_0001>
module attributes {stable_mosaic.version = 11 : i64} {
  func.func @egnn_fused_kernel(%arg0: i32, %arg1: memref<16x32xf32, #tpu.memory_space<vmem>>, %arg2: memref<16x3xf32, #tpu.memory_space<vmem>>, %arg3: memref<48x16xf32, #tpu.memory_space<vmem>>, %arg4: memref<48x16xf32, #tpu.memory_space<vmem>>, %arg5: memref<48x4xf32, #tpu.memory_space<vmem>>, %arg6: memref<16x1xf32, #tpu.memory_space<vmem>>, %arg7: memref<1x4x32xf32, #tpu.memory_space<vmem>>, %arg8: memref<1x1x32xf32, #tpu.memory_space<vmem>>, %arg9: memref<1x1x32xf32, #tpu.memory_space<vmem>>, %arg10: memref<1x32x32xf32, #tpu.memory_space<vmem>>, %arg11: memref<1x1x32xf32, #tpu.memory_space<vmem>>, %arg12: memref<1x32x32xf32, #tpu.memory_space<vmem>>, %arg13: memref<1x32x32xf32, #tpu.memory_space<vmem>>, %arg14: memref<1x32x32xf32, #tpu.memory_space<vmem>>, %arg15: memref<1x1x32xf32, #tpu.memory_space<vmem>>, %arg16: memref<1x32x32xf32, #tpu.memory_space<vmem>>, %arg17: memref<1x1x32xf32, #tpu.memory_space<vmem>>, %arg18: memref<1x32x32xf32, #tpu.memory_space<vmem>>, %arg19: memref<1x1x32xf32, #tpu.memory_space<vmem>>, %arg20: memref<1x1x32xf32, #tpu.memory_space<vmem>>, %arg21: memref<1x1x32xf32, #tpu.memory_space<vmem>>, %arg22: memref<1x1x32xf32, #tpu.memory_space<vmem>>, %arg23: memref<16x32xf32, #tpu.memory_space<vmem>>, %arg24: memref<16x3xf32, #tpu.memory_space<vmem>>) attributes {dimension_semantics = [#tpu.dimension_semantics<arbitrary>], iteration_bounds = array<i64: 4>, scalar_prefetch = 0 : i64, scratch_operands = 0 : i64, tpu.core_type = #tpu.core_type<tc>, window_params = [{pipeline_mode = #tpu.pipeline_mode<synchronous>, transform_indices = @transform_0, window_bounds = array<i64: 16, 32>}, {pipeline_mode = #tpu.pipeline_mode<synchronous>, transform_indices = @transform_1, window_bounds = array<i64: 16, 3>}, {pipeline_mode = #tpu.pipeline_mode<synchronous>, transform_indices = @transform_2, window_bounds = array<i64: 48, 16>}, {pipeline_mode = #tpu.pipeline_mode<synchronous>, transform_indices = @transform_3, window_bounds = array<i64: 48, 16>}, {pipeline_mode = #tpu.pipeline_mode<synchronous>, transform_indices = @transform_4, window_bounds = array<i64: 48, 4>}, {pipeline_mode = #tpu.pipeline_mode<synchronous>, transform_indices = @transform_5, window_bounds = array<i64: 16, 1>}, {transform_indices = @transform_6, window_bounds = array<i64: 1, 4, 32>}, {transform_indices = @transform_7, window_bounds = array<i64: 1, 1, 32>}, {transform_indices = @transform_8, window_bounds = array<i64: 1, 1, 32>}, {transform_indices = @transform_9, window_bounds = array<i64: 1, 32, 32>}, {transform_indices = @transform_10, window_bounds = array<i64: 1, 1, 32>}, {transform_indices = @transform_11, window_bounds = array<i64: 1, 32, 32>}, {transform_indices = @transform_12, window_bounds = array<i64: 1, 32, 32>}, {transform_indices = @transform_13, window_bounds = array<i64: 1, 32, 32>}, {transform_indices = @transform_14, window_bounds = array<i64: 1, 1, 32>}, {transform_indices = @transform_15, window_bounds = array<i64: 1, 32, 32>}, {transform_indices = @transform_16, window_bounds = array<i64: 1, 1, 32>}, {transform_indices = @transform_17, window_bounds = array<i64: 1, 32, 32>}, {transform_indices = @transform_18, window_bounds = array<i64: 1, 1, 32>}, {transform_indices = @transform_19, window_bounds = array<i64: 1, 1, 32>}, {transform_indices = @transform_20, window_bounds = array<i64: 1, 1, 32>}, {transform_indices = @transform_21, window_bounds = array<i64: 1, 1, 32>}, {pipeline_mode = #tpu.pipeline_mode<synchronous>, transform_indices = @transform_22, window_bounds = array<i64: 16, 32>}, {pipeline_mode = #tpu.pipeline_mode<synchronous>, transform_indices = @transform_23, window_bounds = array<i64: 16, 3>}]} {
    %c0_i32 = arith.constant 0 : i32
    %0 = arith.cmpi eq, %arg0, %c0_i32 : i32
    %1 = arith.extui %0 : i1 to i32
    %c0_i32_0 = arith.constant 0 : i32
    %2 = arith.cmpi ne, %1, %c0_i32_0 : i32
    scf.if %2 {
      %c0_91 = arith.constant 0 : index
      %c0_92 = arith.constant 0 : index
      %147 = vector.load %arg1[%c0_91, %c0_92] : memref<16x32xf32, #tpu.memory_space<vmem>>, vector<16x32xf32>
      %c0_93 = arith.constant 0 : index
      %c0_94 = arith.constant 0 : index
      %148 = vector.load %arg23[%c0_93, %c0_94] : memref<16x32xf32, #tpu.memory_space<vmem>>, vector<16x32xf32>
      tpu.vector_store %arg23[%c0_93, %c0_94], %147 {strides = array<i32>} : memref<16x32xf32, #tpu.memory_space<vmem>>, vector<16x32xf32>,
      %c0_95 = arith.constant 0 : index
      %c0_96 = arith.constant 0 : index
      %149 = vector.load %arg2[%c0_95, %c0_96] : memref<16x3xf32, #tpu.memory_space<vmem>>, vector<16x3xf32>
      %c0_97 = arith.constant 0 : index
      %c0_98 = arith.constant 0 : index
      %150 = vector.load %arg24[%c0_97, %c0_98] : memref<16x3xf32, #tpu.memory_space<vmem>>, vector<16x3xf32>
      tpu.vector_store %arg24[%c0_97, %c0_98], %149 {strides = array<i32>} : memref<16x3xf32, #tpu.memory_space<vmem>>, vector<16x3xf32>,
    } else {
    }
    %c0 = arith.constant 0 : index
    %c0_1 = arith.constant 0 : index
    %3 = vector.load %arg23[%c0, %c0_1] : memref<16x32xf32, #tpu.memory_space<vmem>>, vector<16x32xf32>
    %c0_2 = arith.constant 0 : index
    %c0_3 = arith.constant 0 : index
    %4 = vector.load %arg24[%c0_2, %c0_3] : memref<16x3xf32, #tpu.memory_space<vmem>>, vector<16x3xf32>
    %c0_4 = arith.constant 0 : index
    %c0_5 = arith.constant 0 : index
    %5 = vector.load %arg3[%c0_4, %c0_5] : memref<48x16xf32, #tpu.memory_space<vmem>>, vector<48x16xf32>
    %c0_6 = arith.constant 0 : index
    %c0_7 = arith.constant 0 : index
    %6 = vector.load %arg4[%c0_6, %c0_7] : memref<48x16xf32, #tpu.memory_space<vmem>>, vector<48x16xf32>
    %c0_8 = arith.constant 0 : index
    %c0_9 = arith.constant 0 : index
    %7 = vector.load %arg5[%c0_8, %c0_9] : memref<48x4xf32, #tpu.memory_space<vmem>>, vector<48x4xf32>
    %c0_10 = arith.constant 0 : index
    %c0_11 = arith.constant 0 : index
    %8 = vector.load %arg6[%c0_10, %c0_11] : memref<16x1xf32, #tpu.memory_space<vmem>>, vector<16x1xf32>
    %cst = arith.constant dense<0.000000e+00> : vector<3xf32>
    %9 = vector.multi_reduction <add>, %4, %cst [0] : vector<16x3xf32> to vector<3xf32>
    %10 = vector.shape_cast %9 : vector<3xf32> to vector<1x3xf32>
    %cst_12 = arith.constant 1.600000e+01 : f32
    %11 = vector.broadcast %cst_12 : f32 to vector<1x3xf32>
    %12 = arith.divf %10, %11 : vector<1x3xf32>
    %13 = vector.broadcast %12 : vector<1x3xf32> to vector<16x3xf32>
    %14 = arith.subf %4, %13 : vector<16x3xf32>
    %15 = arith.mulf %14, %14 : vector<16x3xf32>
    %cst_13 = arith.constant dense<0.000000e+00> : vector<3xf32>
    %16 = vector.multi_reduction <add>, %15, %cst_13 [0] : vector<16x3xf32> to vector<3xf32>
    %17 = vector.shape_cast %16 : vector<3xf32> to vector<1x3xf32>
    %cst_14 = arith.constant 1.500000e+01 : f32
    %18 = vector.broadcast %cst_14 : f32 to vector<1x3xf32>
    %19 = arith.divf %17, %18 : vector<1x3xf32>
    %20 = math.sqrt %19 : vector<1x3xf32>
    %cst_15 = arith.constant 9.99999993E-9 : f32
    %21 = vector.broadcast %cst_15 : f32 to vector<1x3xf32>
    %22 = arith.maximumf %20, %21 : vector<1x3xf32>
    %23 = vector.broadcast %12 : vector<1x3xf32> to vector<16x3xf32>
    %24 = arith.subf %4, %23 : vector<16x3xf32>
    %25 = vector.broadcast %22 : vector<1x3xf32> to vector<16x3xf32>
    %26 = arith.divf %24, %25 : vector<16x3xf32>
    %c0_16 = arith.constant 0 : index
    %c0_17 = arith.constant 0 : index
    %c0_18 = arith.constant 0 : index
    %27 = vector.load %arg12[%c0_16, %c0_17, %c0_18] : memref<1x32x32xf32, #tpu.memory_space<vmem>>, vector<1x32x32xf32>
    %28 = vector.shape_cast %27 : vector<1x32x32xf32> to vector<32x32xf32>
    %cst_19 = arith.constant dense<0.000000e+00> : vector<16x32xf32>
    %29 = tpu.matmul %3, %28, %cst_19 {dimension_numbers = #tpu.dot_dimension_numbers<[1], [0], [0], [1], [0, 0, 1, 1], [], []>} : vector<16x32xf32>, vector<32x32xf32>, vector<16x32xf32> -> vector<16x32xf32>
    %c0_20 = arith.constant 0 : index
    %c0_21 = arith.constant 0 : index
    %c0_22 = arith.constant 0 : index
    %30 = vector.load %arg13[%c0_20, %c0_21, %c0_22] : memref<1x32x32xf32, #tpu.memory_space<vmem>>, vector<1x32x32xf32>
    %31 = vector.shape_cast %30 : vector<1x32x32xf32> to vector<32x32xf32>
    %cst_23 = arith.constant dense<0.000000e+00> : vector<16x32xf32>
    %32 = tpu.matmul %3, %31, %cst_23 {dimension_numbers = #tpu.dot_dimension_numbers<[1], [0], [0], [1], [0, 0, 1, 1], [], []>} : vector<16x32xf32>, vector<32x32xf32>, vector<16x32xf32> -> vector<16x32xf32>
    %cst_24 = arith.constant dense<0.000000e+00> : vector<48x32xf32>
    %33 = tpu.matmul %5, %29, %cst_24 {dimension_numbers = #tpu.dot_dimension_numbers<[1], [0], [0], [1], [0, 0, 1, 1], [], []>} : vector<48x16xf32>, vector<16x32xf32>, vector<48x32xf32> -> vector<48x32xf32>
    %cst_25 = arith.constant dense<0.000000e+00> : vector<48x32xf32>
    %34 = tpu.matmul %6, %32, %cst_25 {dimension_numbers = #tpu.dot_dimension_numbers<[1], [0], [0], [1], [0, 0, 1, 1], [], []>} : vector<48x16xf32>, vector<16x32xf32>, vector<48x32xf32> -> vector<48x32xf32>
    %cst_26 = arith.constant dense<0.000000e+00> : vector<48x3xf32>
    %35 = tpu.matmul %5, %26, %cst_26 {dimension_numbers = #tpu.dot_dimension_numbers<[1], [0], [0], [1], [0, 0, 1, 1], [], []>} : vector<48x16xf32>, vector<16x3xf32>, vector<48x3xf32> -> vector<48x3xf32>
    %cst_27 = arith.constant dense<0.000000e+00> : vector<48x3xf32>
    %36 = tpu.matmul %6, %26, %cst_27 {dimension_numbers = #tpu.dot_dimension_numbers<[1], [0], [0], [1], [0, 0, 1, 1], [], []>} : vector<48x16xf32>, vector<16x3xf32>, vector<48x3xf32> -> vector<48x3xf32>
    %37 = arith.subf %35, %36 : vector<48x3xf32>
    %38 = arith.mulf %37, %37 : vector<48x3xf32>
    %cst_28 = arith.constant dense<0.000000e+00> : vector<48xf32>
    %39 = vector.multi_reduction <add>, %38, %cst_28 [1] : vector<48x3xf32> to vector<48xf32>
    %40 = vector.shape_cast %39 : vector<48xf32> to vector<48x1xf32>
    %41 = math.sqrt %40 : vector<48x1xf32>
    %c0_29 = arith.constant 0 : index
    %c0_30 = arith.constant 0 : index
    %c0_31 = arith.constant 0 : index
    %42 = vector.load %arg7[%c0_29, %c0_30, %c0_31] : memref<1x4x32xf32, #tpu.memory_space<vmem>>, vector<1x4x32xf32>
    %43 = vector.shape_cast %42 : vector<1x4x32xf32> to vector<4x32xf32>
    %cst_32 = arith.constant dense<0.000000e+00> : vector<48x32xf32>
    %44 = tpu.matmul %7, %43, %cst_32 {dimension_numbers = #tpu.dot_dimension_numbers<[1], [0], [0], [1], [0, 0, 1, 1], [], []>} : vector<48x4xf32>, vector<4x32xf32>, vector<48x32xf32> -> vector<48x32xf32>
    %c0_33 = arith.constant 0 : index
    %c0_34 = arith.constant 0 : index
    %c0_35 = arith.constant 0 : index
    %45 = vector.load %arg8[%c0_33, %c0_34, %c0_35] : memref<1x1x32xf32, #tpu.memory_space<vmem>>, vector<1x1x32xf32>
    %46 = vector.shape_cast %45 : vector<1x1x32xf32> to vector<1x32xf32>
    %47 = vector.broadcast %41 : vector<48x1xf32> to vector<48x32xf32>
    %48 = vector.broadcast %46 : vector<1x32xf32> to vector<48x32xf32>
    %49 = arith.mulf %47, %48 : vector<48x32xf32>
    %50 = arith.addf %44, %49 : vector<48x32xf32>
    %c0_36 = arith.constant 0 : index
    %c0_37 = arith.constant 0 : index
    %c0_38 = arith.constant 0 : index
    %51 = vector.load %arg9[%c0_36, %c0_37, %c0_38] : memref<1x1x32xf32, #tpu.memory_space<vmem>>, vector<1x1x32xf32>
    %52 = vector.shape_cast %51 : vector<1x1x32xf32> to vector<1x32xf32>
    %53 = vector.broadcast %52 : vector<1x32xf32> to vector<48x32xf32>
    %54 = arith.addf %50, %53 : vector<48x32xf32>
    %55 = arith.negf %54 : vector<48x32xf32>
    %56 = math.exp %55 : vector<48x32xf32>
    %cst_39 = arith.constant 1.000000e+00 : f32
    %57 = vector.broadcast %cst_39 : f32 to vector<48x32xf32>
    %58 = arith.addf %57, %56 : vector<48x32xf32>
    %59 = arith.divf %57, %58 : vector<48x32xf32>
    %60 = arith.mulf %54, %59 : vector<48x32xf32>
    %c0_40 = arith.constant 0 : index
    %c0_41 = arith.constant 0 : index
    %c0_42 = arith.constant 0 : index
    %61 = vector.load %arg10[%c0_40, %c0_41, %c0_42] : memref<1x32x32xf32, #tpu.memory_space<vmem>>, vector<1x32x32xf32>
    %62 = vector.shape_cast %61 : vector<1x32x32xf32> to vector<32x32xf32>
    %cst_43 = arith.constant dense<0.000000e+00> : vector<48x32xf32>
    %63 = tpu.matmul %60, %62, %cst_43 {dimension_numbers = #tpu.dot_dimension_numbers<[1], [0], [0], [1], [0, 0, 1, 1], [], []>} : vector<48x32xf32>, vector<32x32xf32>, vector<48x32xf32> -> vector<48x32xf32>
    %c0_44 = arith.constant 0 : index
    %c0_45 = arith.constant 0 : index
    %c0_46 = arith.constant 0 : index
    %64 = vector.load %arg11[%c0_44, %c0_45, %c0_46] : memref<1x1x32xf32, #tpu.memory_space<vmem>>, vector<1x1x32xf32>
    %65 = vector.shape_cast %64 : vector<1x1x32xf32> to vector<1x32xf32>
    %66 = vector.broadcast %65 : vector<1x32xf32> to vector<48x32xf32>
    %67 = arith.addf %63, %66 : vector<48x32xf32>
    %68 = arith.addf %33, %34 : vector<48x32xf32>
    %c0_47 = arith.constant 0 : index
    %c0_48 = arith.constant 0 : index
    %c0_49 = arith.constant 0 : index
    %69 = vector.load %arg14[%c0_47, %c0_48, %c0_49] : memref<1x32x32xf32, #tpu.memory_space<vmem>>, vector<1x32x32xf32>
    %70 = vector.shape_cast %69 : vector<1x32x32xf32> to vector<32x32xf32>
    %cst_50 = arith.constant dense<0.000000e+00> : vector<48x32xf32>
    %71 = tpu.matmul %67, %70, %cst_50 {dimension_numbers = #tpu.dot_dimension_numbers<[1], [0], [0], [1], [0, 0, 1, 1], [], []>} : vector<48x32xf32>, vector<32x32xf32>, vector<48x32xf32> -> vector<48x32xf32>
    %72 = arith.addf %68, %71 : vector<48x32xf32>
    %c0_51 = arith.constant 0 : index
    %c0_52 = arith.constant 0 : index
    %c0_53 = arith.constant 0 : index
    %73 = vector.load %arg15[%c0_51, %c0_52, %c0_53] : memref<1x1x32xf32, #tpu.memory_space<vmem>>, vector<1x1x32xf32>
    %74 = vector.shape_cast %73 : vector<1x1x32xf32> to vector<1x32xf32>
    %75 = vector.broadcast %74 : vector<1x32xf32> to vector<48x32xf32>
    %76 = arith.addf %72, %75 : vector<48x32xf32>
    %77 = arith.negf %76 : vector<48x32xf32>
    %78 = math.exp %77 : vector<48x32xf32>
    %cst_54 = arith.constant 1.000000e+00 : f32
    %79 = vector.broadcast %cst_54 : f32 to vector<48x32xf32>
    %80 = arith.addf %79, %78 : vector<48x32xf32>
    %81 = arith.divf %79, %80 : vector<48x32xf32>
    %82 = arith.mulf %76, %81 : vector<48x32xf32>
    %c0_55 = arith.constant 0 : index
    %c0_56 = arith.constant 0 : index
    %c0_57 = arith.constant 0 : index
    %83 = vector.load %arg16[%c0_55, %c0_56, %c0_57] : memref<1x32x32xf32, #tpu.memory_space<vmem>>, vector<1x32x32xf32>
    %84 = vector.shape_cast %83 : vector<1x32x32xf32> to vector<32x32xf32>
    %cst_58 = arith.constant dense<0.000000e+00> : vector<48x32xf32>
    %85 = tpu.matmul %82, %84, %cst_58 {dimension_numbers = #tpu.dot_dimension_numbers<[1], [0], [0], [1], [0, 0, 1, 1], [], []>} : vector<48x32xf32>, vector<32x32xf32>, vector<48x32xf32> -> vector<48x32xf32>
    %c0_59 = arith.constant 0 : index
    %c0_60 = arith.constant 0 : index
    %c0_61 = arith.constant 0 : index
    %86 = vector.load %arg17[%c0_59, %c0_60, %c0_61] : memref<1x1x32xf32, #tpu.memory_space<vmem>>, vector<1x1x32xf32>
    %87 = vector.shape_cast %86 : vector<1x1x32xf32> to vector<1x32xf32>
    %88 = vector.broadcast %87 : vector<1x32xf32> to vector<48x32xf32>
    %89 = arith.addf %85, %88 : vector<48x32xf32>
    %cst_62 = arith.constant dense<0.000000e+00> : vector<16x32xf32>
    %90 = tpu.matmul %5, %89, %cst_62 {dimension_numbers = #tpu.dot_dimension_numbers<[0], [0], [1], [1], [0, 1, 1, 1], [], []>} : vector<48x16xf32>, vector<48x32xf32>, vector<16x32xf32> -> vector<16x32xf32>
    %91 = vector.broadcast %8 : vector<16x1xf32> to vector<16x32xf32>
    %92 = arith.mulf %90, %91 : vector<16x32xf32>
    %93 = arith.addf %92, %3 : vector<16x32xf32>
    %cst_63 = arith.constant dense<0.000000e+00> : vector<16xf32>
    %94 = vector.multi_reduction <add>, %93, %cst_63 [1] : vector<16x32xf32> to vector<16xf32>
    %95 = vector.shape_cast %94 : vector<16xf32> to vector<16x1xf32>
    %cst_64 = arith.constant 3.200000e+01 : f32
    %96 = vector.broadcast %cst_64 : f32 to vector<16x1xf32>
    %97 = arith.divf %95, %96 : vector<16x1xf32>
    %98 = vector.broadcast %97 : vector<16x1xf32> to vector<16x32xf32>
    %99 = arith.subf %93, %98 : vector<16x32xf32>
    %100 = arith.mulf %99, %99 : vector<16x32xf32>
    %cst_65 = arith.constant dense<0.000000e+00> : vector<16xf32>
    %101 = vector.multi_reduction <add>, %100, %cst_65 [1] : vector<16x32xf32> to vector<16xf32>
    %102 = vector.shape_cast %101 : vector<16xf32> to vector<16x1xf32>
    %cst_66 = arith.constant 3.200000e+01 : f32
    %103 = vector.broadcast %cst_66 : f32 to vector<16x1xf32>
    %104 = arith.divf %102, %103 : vector<16x1xf32>
    %105 = vector.broadcast %97 : vector<16x1xf32> to vector<16x32xf32>
    %106 = arith.subf %93, %105 : vector<16x32xf32>
    %cst_67 = arith.constant 9.99999974E-6 : f32
    %107 = vector.broadcast %cst_67 : f32 to vector<16x1xf32>
    %108 = arith.addf %104, %107 : vector<16x1xf32>
    %109 = math.rsqrt %108 : vector<16x1xf32>
    %110 = vector.broadcast %109 : vector<16x1xf32> to vector<16x32xf32>
    %111 = arith.mulf %106, %110 : vector<16x32xf32>
    %c0_68 = arith.constant 0 : index
    %c0_69 = arith.constant 0 : index
    %c0_70 = arith.constant 0 : index
    %112 = vector.load %arg21[%c0_68, %c0_69, %c0_70] : memref<1x1x32xf32, #tpu.memory_space<vmem>>, vector<1x1x32xf32>
    %113 = vector.shape_cast %112 : vector<1x1x32xf32> to vector<1x32xf32>
    %114 = vector.broadcast %113 : vector<1x32xf32> to vector<16x32xf32>
    %115 = arith.mulf %111, %114 : vector<16x32xf32>
    %c0_71 = arith.constant 0 : index
    %c0_72 = arith.constant 0 : index
    %c0_73 = arith.constant 0 : index
    %116 = vector.load %arg22[%c0_71, %c0_72, %c0_73] : memref<1x1x32xf32, #tpu.memory_space<vmem>>, vector<1x1x32xf32>
    %117 = vector.shape_cast %116 : vector<1x1x32xf32> to vector<1x32xf32>
    %118 = vector.broadcast %117 : vector<1x32xf32> to vector<16x32xf32>
    %119 = arith.addf %115, %118 : vector<16x32xf32>
    %c0_74 = arith.constant 0 : index
    %c0_75 = arith.constant 0 : index
    %c0_76 = arith.constant 0 : index
    %120 = vector.load %arg18[%c0_74, %c0_75, %c0_76] : memref<1x32x32xf32, #tpu.memory_space<vmem>>, vector<1x32x32xf32>
    %121 = vector.shape_cast %120 : vector<1x32x32xf32> to vector<32x32xf32>
    %cst_77 = arith.constant dense<0.000000e+00> : vector<16x32xf32>
    %122 = tpu.matmul %119, %121, %cst_77 {dimension_numbers = #tpu.dot_dimension_numbers<[1], [0], [0], [1], [0, 0, 1, 1], [], []>} : vector<16x32xf32>, vector<32x32xf32>, vector<16x32xf32> -> vector<16x32xf32>
    %c0_78 = arith.constant 0 : index
    %c0_79 = arith.constant 0 : index
    %c0_80 = arith.constant 0 : index
    %123 = vector.load %arg19[%c0_78, %c0_79, %c0_80] : memref<1x1x32xf32, #tpu.memory_space<vmem>>, vector<1x1x32xf32>
    %124 = vector.shape_cast %123 : vector<1x1x32xf32> to vector<1x32xf32>
    %125 = vector.broadcast %124 : vector<1x32xf32> to vector<16x32xf32>
    %126 = arith.addf %122, %125 : vector<16x32xf32>
    %127 = arith.negf %126 : vector<16x32xf32>
    %128 = math.exp %127 : vector<16x32xf32>
    %cst_81 = arith.constant 1.000000e+00 : f32
    %129 = vector.broadcast %cst_81 : f32 to vector<16x32xf32>
    %130 = arith.addf %129, %128 : vector<16x32xf32>
    %131 = arith.divf %129, %130 : vector<16x32xf32>
    %132 = arith.mulf %126, %131 : vector<16x32xf32>
    %c0_82 = arith.constant 0 : index
    %c0_83 = arith.constant 0 : index
    %c0_84 = arith.constant 0 : index
    %133 = vector.load %arg20[%c0_82, %c0_83, %c0_84] : memref<1x1x32xf32, #tpu.memory_space<vmem>>, vector<1x1x32xf32>
    %134 = vector.shape_cast %133 : vector<1x1x32xf32> to vector<1x32xf32>
    %135 = vector.broadcast %134 : vector<1x32xf32> to vector<16x32xf32>
    %136 = arith.mulf %132, %135 : vector<16x32xf32>
    %cst_85 = arith.constant dense<0.000000e+00> : vector<16xf32>
    %137 = vector.multi_reduction <add>, %136, %cst_85 [1] : vector<16x32xf32> to vector<16xf32>
    %138 = vector.shape_cast %137 : vector<16xf32> to vector<16x1xf32>
    %cst_86 = arith.constant dense<0.000000e+00> : vector<16x3xf32>
    %139 = tpu.matmul %5, %37, %cst_86 {dimension_numbers = #tpu.dot_dimension_numbers<[0], [0], [1], [1], [0, 1, 1, 1], [], []>} : vector<48x16xf32>, vector<48x3xf32>, vector<16x3xf32> -> vector<16x3xf32>
    %140 = vector.broadcast %138 : vector<16x1xf32> to vector<16x3xf32>
    %141 = arith.mulf %140, %139 : vector<16x3xf32>
    %c0_87 = arith.constant 0 : index
    %c0_88 = arith.constant 0 : index
    %142 = vector.load %arg23[%c0_87, %c0_88] : memref<16x32xf32, #tpu.memory_space<vmem>>, vector<16x32xf32>
    tpu.vector_store %arg23[%c0_87, %c0_88], %119 {strides = array<i32>} : memref<16x32xf32, #tpu.memory_space<vmem>>, vector<16x32xf32>,
    %143 = vector.broadcast %22 : vector<1x3xf32> to vector<16x3xf32>
    %144 = arith.mulf %141, %143 : vector<16x3xf32>
    %145 = arith.addf %4, %144 : vector<16x3xf32>
    %c0_89 = arith.constant 0 : index
    %c0_90 = arith.constant 0 : index
    %146 = vector.load %arg24[%c0_89, %c0_90] : memref<16x3xf32, #tpu.memory_space<vmem>>, vector<16x3xf32>
    tpu.vector_store %arg24[%c0_89, %c0_90], %145 {strides = array<i32>} : memref<16x3xf32, #tpu.memory_space<vmem>>, vector<16x3xf32>,
    return
  }
  func.func @transform_0(%arg0: i32) -> (i32, i32) {
    %c0_i32 = arith.constant 0 : i32
    %c0_i32_0 = arith.constant 0 : i32
    %c0_i32_1 = arith.constant 0 : i32
    return %c0_i32, %c0_i32_0 : i32, i32
  }
  func.func @transform_1(%arg0: i32) -> (i32, i32) {
    %c0_i32 = arith.constant 0 : i32
    %c0_i32_0 = arith.constant 0 : i32
    %c0_i32_1 = arith.constant 0 : i32
    return %c0_i32, %c0_i32_0 : i32, i32
  }
  func.func @transform_2(%arg0: i32) -> (i32, i32) {
    %c0_i32 = arith.constant 0 : i32
    %c0_i32_0 = arith.constant 0 : i32
    %c0_i32_1 = arith.constant 0 : i32
    return %c0_i32, %c0_i32_0 : i32, i32
  }
  func.func @transform_3(%arg0: i32) -> (i32, i32) {
    %c0_i32 = arith.constant 0 : i32
    %c0_i32_0 = arith.constant 0 : i32
    %c0_i32_1 = arith.constant 0 : i32
    return %c0_i32, %c0_i32_0 : i32, i32
  }
  func.func @transform_4(%arg0: i32) -> (i32, i32) {
    %c0_i32 = arith.constant 0 : i32
    %c0_i32_0 = arith.constant 0 : i32
    %c0_i32_1 = arith.constant 0 : i32
    return %c0_i32, %c0_i32_0 : i32, i32
  }
  func.func @transform_5(%arg0: i32) -> (i32, i32) {
    %c0_i32 = arith.constant 0 : i32
    %c0_i32_0 = arith.constant 0 : i32
    %c0_i32_1 = arith.constant 0 : i32
    return %c0_i32, %c0_i32_0 : i32, i32
  }
  func.func @transform_6(%arg0: i32) -> (i32, i32, i32) {
    %c0_i32 = arith.constant 0 : i32
    %c0_i32_0 = arith.constant 0 : i32
    %c0_i32_1 = arith.constant 0 : i32
    return %arg0, %c0_i32, %c0_i32_0 : i32, i32, i32
  }
  func.func @transform_7(%arg0: i32) -> (i32, i32, i32) {
    %c0_i32 = arith.constant 0 : i32
    %c0_i32_0 = arith.constant 0 : i32
    %c0_i32_1 = arith.constant 0 : i32
    return %arg0, %c0_i32, %c0_i32_0 : i32, i32, i32
  }
  func.func @transform_8(%arg0: i32) -> (i32, i32, i32) {
    %c0_i32 = arith.constant 0 : i32
    %c0_i32_0 = arith.constant 0 : i32
    %c0_i32_1 = arith.constant 0 : i32
    return %arg0, %c0_i32, %c0_i32_0 : i32, i32, i32
  }
  func.func @transform_9(%arg0: i32) -> (i32, i32, i32) {
    %c0_i32 = arith.constant 0 : i32
    %c0_i32_0 = arith.constant 0 : i32
    %c0_i32_1 = arith.constant 0 : i32
    return %arg0, %c0_i32, %c0_i32_0 : i32, i32, i32
  }
  func.func @transform_10(%arg0: i32) -> (i32, i32, i32) {
    %c0_i32 = arith.constant 0 : i32
    %c0_i32_0 = arith.constant 0 : i32
    %c0_i32_1 = arith.constant 0 : i32
    return %arg0, %c0_i32, %c0_i32_0 : i32, i32, i32
  }
  func.func @transform_11(%arg0: i32) -> (i32, i32, i32) {
    %c0_i32 = arith.constant 0 : i32
    %c0_i32_0 = arith.constant 0 : i32
    %c0_i32_1 = arith.constant 0 : i32
    return %arg0, %c0_i32, %c0_i32_0 : i32, i32, i32
  }
  func.func @transform_12(%arg0: i32) -> (i32, i32, i32) {
    %c0_i32 = arith.constant 0 : i32
    %c0_i32_0 = arith.constant 0 : i32
    %c0_i32_1 = arith.constant 0 : i32
    return %arg0, %c0_i32, %c0_i32_0 : i32, i32, i32
  }
  func.func @transform_13(%arg0: i32) -> (i32, i32, i32) {
    %c0_i32 = arith.constant 0 : i32
    %c0_i32_0 = arith.constant 0 : i32
    %c0_i32_1 = arith.constant 0 : i32
    return %arg0, %c0_i32, %c0_i32_0 : i32, i32, i32
  }
  func.func @transform_14(%arg0: i32) -> (i32, i32, i32) {
    %c0_i32 = arith.constant 0 : i32
    %c0_i32_0 = arith.constant 0 : i32
    %c0_i32_1 = arith.constant 0 : i32
    return %arg0, %c0_i32, %c0_i32_0 : i32, i32, i32
  }
  func.func @transform_15(%arg0: i32) -> (i32, i32, i32) {
    %c0_i32 = arith.constant 0 : i32
    %c0_i32_0 = arith.constant 0 : i32
    %c0_i32_1 = arith.constant 0 : i32
    return %arg0, %c0_i32, %c0_i32_0 : i32, i32, i32
  }
  func.func @transform_16(%arg0: i32) -> (i32, i32, i32) {
    %c0_i32 = arith.constant 0 : i32
    %c0_i32_0 = arith.constant 0 : i32
    %c0_i32_1 = arith.constant 0 : i32
    return %arg0, %c0_i32, %c0_i32_0 : i32, i32, i32
  }
  func.func @transform_17(%arg0: i32) -> (i32, i32, i32) {
    %c0_i32 = arith.constant 0 : i32
    %c0_i32_0 = arith.constant 0 : i32
    %c0_i32_1 = arith.constant 0 : i32
    return %arg0, %c0_i32, %c0_i32_0 : i32, i32, i32
  }
  func.func @transform_18(%arg0: i32) -> (i32, i32, i32) {
    %c0_i32 = arith.constant 0 : i32
    %c0_i32_0 = arith.constant 0 : i32
    %c0_i32_1 = arith.constant 0 : i32
    return %arg0, %c0_i32, %c0_i32_0 : i32, i32, i32
  }
  func.func @transform_19(%arg0: i32) -> (i32, i32, i32) {
    %c0_i32 = arith.constant 0 : i32
    %c0_i32_0 = arith.constant 0 : i32
    %c0_i32_1 = arith.constant 0 : i32
    return %arg0, %c0_i32, %c0_i32_0 : i32, i32, i32
  }
  func.func @transform_20(%arg0: i32) -> (i32, i32, i32) {
    %c0_i32 = arith.constant 0 : i32
    %c0_i32_0 = arith.constant 0 : i32
    %c0_i32_1 = arith.constant 0 : i32
    return %arg0, %c0_i32, %c0_i32_0 : i32, i32, i32
  }
  func.func @transform_21(%arg0: i32) -> (i32, i32, i32) {
    %c0_i32 = arith.constant 0 : i32
    %c0_i32_0 = arith.constant 0 : i32
    %c0_i32_1 = arith.constant 0 : i32
    return %arg0, %c0_i32, %c0_i32_0 : i32, i32, i32
  }
  func.func @transform_22(%arg0: i32) -> (i32, i32) {
    %c0_i32 = arith.constant 0 : i32
    %c0_i32_0 = arith.constant 0 : i32
    %c0_i32_1 = arith.constant 0 : i32
    return %c0_i32, %c0_i32_0 : i32, i32
  }
  func.func @transform_23(%arg0: i32) -> (i32, i32) {
    %c0_i32 = arith.constant 0 : i32
    %c0_i32_0 = arith.constant 0 : i32
    %c0_i32_1 = arith.constant 0 : i32
    return %c0_i32, %c0_i32_0 : i32, i32
  }
}

</mosaic_0001>

<llo_original>
// kernel: egnn_forward.1
$region0: #{egnn_forward.1}
  #allocation0 [shape = 'u32[]', space=smem, size = 0x4, offset = 0x4, fixed_abs, tag = 'smem constant byte address 0x4 - core index']
  #allocation1 [shape = 'u32[144,128]{1,0:T(1,128)}', space=vmem, size = 0x12000, scoped, tag = 'internal scratch']
  %s0 = inlined_call_operand.hbm [shape: f32[16,32], index: 0, kind: input, shape index: {}]
  %s1 = inlined_call_operand.vmem [shape: f32[16,3], index: 1, kind: input, shape index: {}]
  %s2 = inlined_call_operand.vmem [shape: f32[48,16], index: 2, kind: input, shape index: {}]
  %s3 = inlined_call_operand.vmem [shape: f32[48,16], index: 3, kind: input, shape index: {}]
  %s4 = inlined_call_operand.vmem [shape: f32[48,4], index: 4, kind: input, shape index: {}]
  %s5 = inlined_call_operand.vmem [shape: f32[16,1], index: 5, kind: input, shape index: {}]
  %s6 = inlined_call_operand.hbm [shape: f32[4,4,32], index: 6, kind: input, shape index: {}]
  %s7 = inlined_call_operand.hbm [shape: f32[4,1,32], index: 7, kind: input, shape index: {}]
  %s8 = inlined_call_operand.hbm [shape: f32[4,1,32], index: 8, kind: input, shape index: {}]
  %s9 = inlined_call_operand.vmem [shape: f32[4,32,32], index: 9, kind: input, shape index: {}]
  %s10 = inlined_call_operand.hbm [shape: f32[4,1,32], index: 10, kind: input, shape index: {}]
  %s11 = inlined_call_operand.vmem [shape: f32[4,32,32], index: 11, kind: input, shape index: {}]
  %s12 = inlined_call_operand.hbm [shape: f32[4,32,32], index: 12, kind: input, shape index: {}]
  %s13 = inlined_call_operand.hbm [shape: f32[4,32,32], index: 13, kind: input, shape index: {}]
  %s14 = inlined_call_operand.vmem [shape: f32[4,1,32], index: 14, kind: input, shape index: {}]
  %s15 = inlined_call_operand.hbm [shape: f32[4,32,32], index: 15, kind: input, shape index: {}]
  %s16 = inlined_call_operand.vmem [shape: f32[4,1,32], index: 16, kind: input, shape index: {}]
  %s17 = inlined_call_operand.hbm [shape: f32[4,32,32], index: 17, kind: input, shape index: {}]
  %s18 = inlined_call_operand.hbm [shape: f32[4,1,32], index: 18, kind: input, shape index: {}]
  %s19 = inlined_call_operand.hbm [shape: f32[4,1,32], index: 19, kind: input, shape index: {}]
  %s20 = inlined_call_operand.vmem [shape: f32[4,1,32], index: 20, kind: input, shape index: {}]
  %s21 = inlined_call_operand.hbm [shape: f32[4,1,32], index: 21, kind: input, shape index: {}]
  %s22 = inlined_call_operand.hbm [shape: f32[16,32], index: 22, kind: output, shape index: {0}]
  %s23 = inlined_call_operand.vmem [shape: f32[16,3], index: 23, kind: output, shape index: {1}]
  %24 = xla_tuple %s22, %s23
  %s25 = sld [smem:[#allocation0]]
  $region181: #{egnn_forward.1} parent=0
    _
  %s27 = ssub.s32 1, %s25
  %s28 = scalar_select 0, %s27, %s25
  $region1: #{egnn_forward.1} parent=0
    #allocation2 [shape = 'u8[8192]{0}', space=vmem, size = 0x2000, scoped, tag = 'input window, operand 0, single buffered']
    #allocation3 [shape = 's32[2]{0}', space=sflag, size = 0x8, scoped, tag = 'scoped memory for egnn_forward.1']
    #allocation4 [shape = 's32[2]{0}', space=sflag, size = 0x8, scoped, tag = 'scoped memory for egnn_forward.1']
    #allocation5 [shape = 'u8[4096]{0}', space=vmem, size = 0x1000, scoped, tag = 'input window, operand 6']
    #allocation6 [shape = 's32[2]{0}', space=sflag, size = 0x8, scoped, tag = 'scoped memory for egnn_forward.1']
    #allocation7 [shape = 'u8[1024]{0}', space=vmem, size = 0x400, scoped, tag = 'input window, operand 7']
    #allocation8 [shape = 'u8[1024]{0}', space=vmem, size = 0x400, scoped, tag = 'input window, operand 8']
    #allocation9 [shape = 's32[2]{0}', space=sflag, size = 0x8, scoped, tag = 'scoped memory for egnn_forward.1']
    #allocation10 [shape = 'u8[1024]{0}', space=vmem, size = 0x400, scoped, tag = 'input window, operand 10']
    #allocation11 [shape = 'u8[32768]{0}', space=vmem, size = 0x8000, scoped, tag = 'input window, operand 12']
    #allocation12 [shape = 's32[2]{0}', space=sflag, size = 0x8, scoped, tag = 'scoped memory for egnn_forward.1']
    #allocation13 [shape = 'u8[32768]{0}', space=vmem, size = 0x8000, scoped, tag = 'input window, operand 13']
    #allocation14 [shape = 'u8[32768]{0}', space=vmem, size = 0x8000, scoped, tag = 'input window, operand 15']
    #allocation15 [shape = 's32[2]{0}', space=sflag, size = 0x8, scoped, tag = 'scoped memory for egnn_forward.1']
    #allocation16 [shape = 'u8[32768]{0}', space=vmem, size = 0x8000, scoped, tag = 'input window, operand 17']
    #allocation17 [shape = 'u8[1024]{0}', space=vmem, size = 0x400, scoped, tag = 'input window, operand 18']
    #allocation18 [shape = 's32[2]{0}', space=sflag, size = 0x8, scoped, tag = 'scoped memory for egnn_forward.1']
    #allocation19 [shape = 'u8[1024]{0}', space=vmem, size = 0x400, scoped, tag = 'input window, operand 19']
    #allocation20 [shape = 'u8[1024]{0}', space=vmem, size = 0x400, scoped, tag = 'input window, operand 21']
    #allocation21 [shape = 's32[2]{0}', space=sflag, size = 0x8, scoped, tag = 'scoped memory for egnn_forward.1']
    #allocation22 [shape = 'u8[8192]{0}', space=vmem, size = 0x2000, scoped, tag = 'output window, operand 0, single buffered']
    %29 = vsyncpa [#allocation3], 0
    %30 = vsyncpa [#allocation6], 0
    %s31 = scalar_lea.sflag [#allocation6], 1
    %32 = vsyncpa %s31, 0
    %33 = vsyncpa [#allocation9], 0
    %s34 = scalar_lea.sflag [#allocation9], 1
    %35 = vsyncpa %s34, 0
    %36 = vsyncpa [#allocation12], 0
    %s37 = scalar_lea.sflag [#allocation12], 1
    %38 = vsyncpa %s37, 0
    %39 = vsyncpa [#allocation15], 0
    %s40 = scalar_lea.sflag [#allocation15], 1
    %41 = vsyncpa %s40, 0
    %42 = vsyncpa [#allocation18], 0
    %s43 = scalar_lea.sflag [#allocation18], 1
    %44 = vsyncpa %s43, 0
    %45 = vsyncpa [#allocation21], 0
    %s46 = scalar_lea.sflag [#allocation21], 1
    %47 = vsyncpa %s46, 0
    %48 = vsyncpa [#allocation4], 0
    loop: start=0, step=1, limit=6
    $region2: #{egnn_forward.1} parent=1 // loop_pre_header
      _
    $region3: #{egnn_forward.1} parent=1 // loop_header
      %s50 = sphi 0, %s54
      %p51 = scmp.ge.s32.totalorder %s50, 6
      %s58 = sphi 0, %s58
      %s60 = sphi 0, %s58
      %s61 = sphi 0, %s60
      %s75 = sphi 0, %s61
      %s79 = sphi 0, %s79
      %s81 = sphi 0, %s79
      %s82 = sphi 0, %s81
      %s96 = sphi 0, %s82
      %s100 = sphi 0, %s100
      %s102 = sphi 0, %s100
      %s103 = sphi 0, %s102
      %s117 = sphi 0, %s103
      %s121 = sphi 0, %s121
      %s123 = sphi 0, %s121
      %s124 = sphi 0, %s123
      %s138 = sphi 0, %s124
      %s142 = sphi 0, %s142
      %s144 = sphi 0, %s142
      %s145 = sphi 0, %s144
      %s159 = sphi 0, %s145
      %s163 = sphi 0, %s163
      %s165 = sphi 0, %s163
      %s166 = sphi 0, %s165
      %s180 = sphi 0, %s166
      %s186 = sphi 0, %s188
      %s189 = sphi 0, %s186
      %s190 = sphi 0, %s189
      %s206 = sphi 0, %s190
      %s212 = sphi 0, %s214
      %s215 = sphi 0, %s212
      %s216 = sphi 0, %s215
      %s232 = sphi 0, %s216
      %s238 = sphi 0, %s240
      %s241 = sphi 0, %s238
      %s242 = sphi 0, %s241
      %s258 = sphi 0, %s242
      %s264 = sphi 0, %s266
      %s267 = sphi 0, %s264
      %s268 = sphi 0, %s267
      %s284 = sphi 0, %s268
      %s290 = sphi 0, %s292
      %s293 = sphi 0, %s290
      %s294 = sphi 0, %s293
      %s310 = sphi 0, %s294
      %s316 = sphi 0, %s318
      %s319 = sphi 0, %s316
      %s320 = sphi 0, %s319
      %s336 = sphi 0, %s320
      %s342 = sphi 0, %s344
      %s345 = sphi 0, %s342
      %s346 = sphi 0, %s345
      %s362 = sphi 0, %s346
      %s368 = sphi 0, %s370
      %s371 = sphi 0, %s368
      %s372 = sphi 0, %s371
      %s388 = sphi 0, %s372
      %s394 = sphi 0, %s396
      %s397 = sphi 0, %s394
      %s398 = sphi 0, %s397
      %s414 = sphi 0, %s398
      %s420 = sphi 0, %s422
      %s423 = sphi 0, %s420
      %s424 = sphi 0, %s423
      %s440 = sphi 0, %s424
      %s446 = sphi 0, %s448
      %s449 = sphi 0, %s446
      %s450 = sphi 0, %s449
      %s466 = sphi 0, %s450
      %s472 = sphi 0, %s474
      %s475 = sphi 0, %s472
      %s476 = sphi 0, %s475
      %s492 = sphi 0, %s476
      %s498 = sphi 0, %s500
      %s501 = sphi 0, %s498
      %s502 = sphi 0, %s501
      %s518 = sphi 0, %s502
      %s524 = sphi 0, %s526
      %s527 = sphi 0, %s524
      %s528 = sphi 0, %s527
      %s544 = sphi 0, %s528
      %s550 = sphi 0, %s552
      %s553 = sphi 0, %s550
      %s554 = sphi 0, %s553
      %s570 = sphi 0, %s554
      %s576 = sphi 0, %s578
      %s579 = sphi 0, %s576
      %s580 = sphi 0, %s579
      %s596 = sphi 0, %s580
      %s600 = sphi 0, %s600
      %s602 = sphi 0, %s600
      %s603 = sphi 0, %s602
      %s617 = sphi 0, %s603
      %s621 = sphi 0, %s621
      %s623 = sphi 0, %s621
      %s624 = sphi 0, %s623
      %s638 = sphi 0, %s624
    $region4: #{egnn_forward.1} parent=1 // loop_header_branch
      %53 = sbr.rel (%p51) target = $region8
    $region5: #{egnn_forward.1} parent=1 // loop_body
      %s55 = ssub.s32 %s50, 1
      %s56 = ssub.s32 %s50, 2
      %s57 = sadd.s32 %s50, 1
      %s59 = sadd.s32 %s58, 1
      %p62 = scmp.eq.s32.totalorder %s50, 3
      %p63 = scmp.ne.s32.totalorder %s58, %s60
      %p64 = scmp.eq.s32.totalorder %s50, 0
      %p65 = por %p63, %p64
      %p66 = scmp.ne.s32.totalorder %s58, %s60
      %p67 = scmp.eq.s32.totalorder %s55, 3
      %p68 = por %p66, %p67
      %p69 = scmp.ne.s32.totalorder %s60, %s61
      %p70 = scmp.eq.s32.totalorder %s55, 0
      %p71 = por %p69, %p70
      %p72 = scmp.ne.s32.totalorder %s60, %s61
      %p73 = scmp.eq.s32.totalorder %s56, 3
      %p74 = por %p72, %p73
      %p76 = scmp.ne.s32.totalorder %s61, %s75
      %p77 = scmp.eq.s32.totalorder %s56, 0
      %p78 = por %p76, %p77
      %s80 = sadd.s32 %s79, 1
      %p83 = scmp.eq.s32.totalorder %s50, 3
      %p84 = scmp.ne.s32.totalorder %s79, %s81
      %p85 = scmp.eq.s32.totalorder %s50, 0
      %p86 = por %p84, %p85
      %p87 = scmp.ne.s32.totalorder %s79, %s81
      %p88 = scmp.eq.s32.totalorder %s55, 3
      %p89 = por %p87, %p88
      %p90 = scmp.ne.s32.totalorder %s81, %s82
      %p91 = scmp.eq.s32.totalorder %s55, 0
      %p92 = por %p90, %p91
      %p93 = scmp.ne.s32.totalorder %s81, %s82
      %p94 = scmp.eq.s32.totalorder %s56, 3
      %p95 = por %p93, %p94
      %p97 = scmp.ne.s32.totalorder %s82, %s96
      %p98 = scmp.eq.s32.totalorder %s56, 0
      %p99 = por %p97, %p98
      %s101 = sadd.s32 %s100, 1
      %p104 = scmp.eq.s32.totalorder %s50, 3
      %p105 = scmp.ne.s32.totalorder %s100, %s102
      %p106 = scmp.eq.s32.totalorder %s50, 0
      %p107 = por %p105, %p106
      %p108 = scmp.ne.s32.totalorder %s100, %s102
      %p109 = scmp.eq.s32.totalorder %s55, 3
      %p110 = por %p108, %p109
      %p111 = scmp.ne.s32.totalorder %s102, %s103
      %p112 = scmp.eq.s32.totalorder %s55, 0
      %p113 = por %p111, %p112
      %p114 = scmp.ne.s32.totalorder %s102, %s103
      %p115 = scmp.eq.s32.totalorder %s56, 3
      %p116 = por %p114, %p115
      %p118 = scmp.ne.s32.totalorder %s103, %s117
      %p119 = scmp.eq.s32.totalorder %s56, 0
      %p120 = por %p118, %p119
      %s122 = sadd.s32 %s121, 1
      %p125 = scmp.eq.s32.totalorder %s50, 3
      %p126 = scmp.ne.s32.totalorder %s121, %s123
      %p127 = scmp.eq.s32.totalorder %s50, 0
      %p128 = por %p126, %p127
      %p129 = scmp.ne.s32.totalorder %s121, %s123
      %p130 = scmp.eq.s32.totalorder %s55, 3
      %p131 = por %p129, %p130
      %p132 = scmp.ne.s32.totalorder %s123, %s124
      %p133 = scmp.eq.s32.totalorder %s55, 0
      %p134 = por %p132, %p133
      %p135 = scmp.ne.s32.totalorder %s123, %s124
      %p136 = scmp.eq.s32.totalorder %s56, 3
      %p137 = por %p135, %p136
      %p139 = scmp.ne.s32.totalorder %s124, %s138
      %p140 = scmp.eq.s32.totalorder %s56, 0
      %p141 = por %p139, %p140
      %s143 = sadd.s32 %s142, 1
      %p146 = scmp.eq.s32.totalorder %s50, 3
      %p147 = scmp.ne.s32.totalorder %s142, %s144
      %p148 = scmp.eq.s32.totalorder %s50, 0
      %p149 = por %p147, %p148
      %p150 = scmp.ne.s32.totalorder %s142, %s144
      %p151 = scmp.eq.s32.totalorder %s55, 3
      %p152 = por %p150, %p151
      %p153 = scmp.ne.s32.totalorder %s144, %s145
      %p154 = scmp.eq.s32.totalorder %s55, 0
      %p155 = por %p153, %p154
      %p156 = scmp.ne.s32.totalorder %s144, %s145
      %p157 = scmp.eq.s32.totalorder %s56, 3
      %p158 = por %p156, %p157
      %p160 = scmp.ne.s32.totalorder %s145, %s159
      %p161 = scmp.eq.s32.totalorder %s56, 0
      %p162 = por %p160, %p161
      %s164 = sadd.s32 %s163, 1
      %p167 = scmp.eq.s32.totalorder %s50, 3
      %p168 = scmp.ne.s32.totalorder %s163, %s165
      %p169 = scmp.eq.s32.totalorder %s50, 0
      %p170 = por %p168, %p169
      %p171 = scmp.ne.s32.totalorder %s163, %s165
      %p172 = scmp.eq.s32.totalorder %s55, 3
      %p173 = por %p171, %p172
      %p174 = scmp.ne.s32.totalorder %s165, %s166
      %p175 = scmp.eq.s32.totalorder %s55, 0
      %p176 = por %p174, %p175
      %p177 = scmp.ne.s32.totalorder %s165, %s166
      %p178 = scmp.eq.s32.totalorder %s56, 3
      %p179 = por %p177, %p178
      %p181 = scmp.ne.s32.totalorder %s166, %s180
      %p182 = scmp.eq.s32.totalorder %s56, 0
      %p183 = por %p181, %p182
      %s184 = ssub.s32 %s50, %s57
      %p185 = scmp.eq.s32.totalorder %s184, 0
      %s187 = sadd.s32 %s186, 1
      %s188 = scalar_select %p185, %s186, %s187
      %p191 = pneg %p185
      %p192 = scmp.eq.s32.totalorder %s50, 3
      %p193 = por %p191, %p192
      %p194 = scmp.ne.s32.totalorder %s186, %s189
      %p195 = scmp.eq.s32.totalorder %s50, 0
      %p196 = por %p194, %p195
      %p197 = scmp.ne.s32.totalorder %s186, %s189
      %p198 = scmp.eq.s32.totalorder %s55, 3
      %p199 = por %p197, %p198
      %p200 = scmp.ne.s32.totalorder %s189, %s190
      %p201 = scmp.eq.s32.totalorder %s55, 0
      %p202 = por %p200, %p201
      %p203 = scmp.ne.s32.totalorder %s189, %s190
      %p204 = scmp.eq.s32.totalorder %s56, 3
      %p205 = por %p203, %p204
      %p207 = scmp.ne.s32.totalorder %s190, %s206
      %p208 = scmp.eq.s32.totalorder %s56, 0
      %p209 = por %p207, %p208
      %s210 = ssub.s32 %s50, %s57
      %p211 = scmp.eq.s32.totalorder %s210, 0
      %s213 = sadd.s32 %s212, 1
      %s214 = scalar_select %p211, %s212, %s213
      %p217 = pneg %p211
      %p218 = scmp.eq.s32.totalorder %s50, 3
      %p219 = por %p217, %p218
      %p220 = scmp.ne.s32.totalorder %s212, %s215
      %p221 = scmp.eq.s32.totalorder %s50, 0
      %p222 = por %p220, %p221
      %p223 = scmp.ne.s32.totalorder %s212, %s215
      %p224 = scmp.eq.s32.totalorder %s55, 3
      %p225 = por %p223, %p224
      %p226 = scmp.ne.s32.totalorder %s215, %s216
      %p227 = scmp.eq.s32.totalorder %s55, 0
      %p228 = por %p226, %p227
      %p229 = scmp.ne.s32.totalorder %s215, %s216
      %p230 = scmp.eq.s32.totalorder %s56, 3
      %p231 = por %p229, %p230
      %p233 = scmp.ne.s32.totalorder %s216, %s232
      %p234 = scmp.eq.s32.totalorder %s56, 0
      %p235 = por %p233, %p234
      %s236 = ssub.s32 %s50, %s57
      %p237 = scmp.eq.s32.totalorder %s236, 0
      %s239 = sadd.s32 %s238, 1
      %s240 = scalar_select %p237, %s238, %s239
      %p243 = pneg %p237
      %p244 = scmp.eq.s32.totalorder %s50, 3
      %p245 = por %p243, %p244
      %p246 = scmp.ne.s32.totalorder %s238, %s241
      %p247 = scmp.eq.s32.totalorder %s50, 0
      %p248 = por %p246, %p247
      %p249 = scmp.ne.s32.totalorder %s238, %s241
      %p250 = scmp.eq.s32.totalorder %s55, 3
      %p251 = por %p249, %p250
      %p252 = scmp.ne.s32.totalorder %s241, %s242
      %p253 = scmp.eq.s32.totalorder %s55, 0
      %p254 = por %p252, %p253
      %p255 = scmp.ne.s32.totalorder %s241, %s242
      %p256 = scmp.eq.s32.totalorder %s56, 3
      %p257 = por %p255, %p256
      %p259 = scmp.ne.s32.totalorder %s242, %s258
      %p260 = scmp.eq.s32.totalorder %s56, 0
      %p261 = por %p259, %p260
      %s262 = ssub.s32 %s50, %s57
      %p263 = scmp.eq.s32.totalorder %s262, 0
      %s265 = sadd.s32 %s264, 1
      %s266 = scalar_select %p263, %s264, %s265
      %p269 = pneg %p263
      %p270 = scmp.eq.s32.totalorder %s50, 3
      %p271 = por %p269, %p270
      %p272 = scmp.ne.s32.totalorder %s264, %s267
      %p273 = scmp.eq.s32.totalorder %s50, 0
      %p274 = por %p272, %p273
      %p275 = scmp.ne.s32.totalorder %s264, %s267
      %p276 = scmp.eq.s32.totalorder %s55, 3
      %p277 = por %p275, %p276
      %p278 = scmp.ne.s32.totalorder %s267, %s268
      %p279 = scmp.eq.s32.totalorder %s55, 0
      %p280 = por %p278, %p279
      %p281 = scmp.ne.s32.totalorder %s267, %s268
      %p282 = scmp.eq.s32.totalorder %s56, 3
      %p283 = por %p281, %p282
      %p285 = scmp.ne.s32.totalorder %s268, %s284
      %p286 = scmp.eq.s32.totalorder %s56, 0
      %p287 = por %p285, %p286
      %s288 = ssub.s32 %s50, %s57
      %p289 = scmp.eq.s32.totalorder %s288, 0
      %s291 = sadd.s32 %s290, 1
      %s292 = scalar_select %p289, %s290, %s291
      %p295 = pneg %p289
      %p296 = scmp.eq.s32.totalorder %s50, 3
      %p297 = por %p295, %p296
      %p298 = scmp.ne.s32.totalorder %s290, %s293
      %p299 = scmp.eq.s32.totalorder %s50, 0
      %p300 = por %p298, %p299
      %p301 = scmp.ne.s32.totalorder %s290, %s293
      %p302 = scmp.eq.s32.totalorder %s55, 3
      %p303 = por %p301, %p302
      %p304 = scmp.ne.s32.totalorder %s293, %s294
      %p305 = scmp.eq.s32.totalorder %s55, 0
      %p306 = por %p304, %p305
      %p307 = scmp.ne.s32.totalorder %s293, %s294
      %p308 = scmp.eq.s32.totalorder %s56, 3
      %p309 = por %p307, %p308
      %p311 = scmp.ne.s32.totalorder %s294, %s310
      %p312 = scmp.eq.s32.totalorder %s56, 0
      %p313 = por %p311, %p312
      %s314 = ssub.s32 %s50, %s57
      %p315 = scmp.eq.s32.totalorder %s314, 0
      %s317 = sadd.s32 %s316, 1
      %s318 = scalar_select %p315, %s316, %s317
      %p321 = pneg %p315
      %p322 = scmp.eq.s32.totalorder %s50, 3
      %p323 = por %p321, %p322
      %p324 = scmp.ne.s32.totalorder %s316, %s319
      %p325 = scmp.eq.s32.totalorder %s50, 0
      %p326 = por %p324, %p325
      %p327 = scmp.ne.s32.totalorder %s316, %s319
      %p328 = scmp.eq.s32.totalorder %s55, 3
      %p329 = por %p327, %p328
      %p330 = scmp.ne.s32.totalorder %s319, %s320
      %p331 = scmp.eq.s32.totalorder %s55, 0
      %p332 = por %p330, %p331
      %p333 = scmp.ne.s32.totalorder %s319, %s320
      %p334 = scmp.eq.s32.totalorder %s56, 3
      %p335 = por %p333, %p334
      %p337 = scmp.ne.s32.totalorder %s320, %s336
      %p338 = scmp.eq.s32.totalorder %s56, 0
      %p339 = por %p337, %p338
      %s340 = ssub.s32 %s50, %s57
      %p341 = scmp.eq.s32.totalorder %s340, 0
      %s343 = sadd.s32 %s342, 1
      %s344 = scalar_select %p341, %s342, %s343
      %p347 = pneg %p341
      %p348 = scmp.eq.s32.totalorder %s50, 3
      %p349 = por %p347, %p348
      %p350 = scmp.ne.s32.totalorder %s342, %s345
      %p351 = scmp.eq.s32.totalorder %s50, 0
      %p352 = por %p350, %p351
      %p353 = scmp.ne.s32.totalorder %s342, %s345
      %p354 = scmp.eq.s32.totalorder %s55, 3
      %p355 = por %p353, %p354
      %p356 = scmp.ne.s32.totalorder %s345, %s346
      %p357 = scmp.eq.s32.totalorder %s55, 0
      %p358 = por %p356, %p357
      %p359 = scmp.ne.s32.totalorder %s345, %s346
      %p360 = scmp.eq.s32.totalorder %s56, 3
      %p361 = por %p359, %p360
      %p363 = scmp.ne.s32.totalorder %s346, %s362
      %p364 = scmp.eq.s32.totalorder %s56, 0
      %p365 = por %p363, %p364
      %s366 = ssub.s32 %s50, %s57
      %p367 = scmp.eq.s32.totalorder %s366, 0
      %s369 = sadd.s32 %s368, 1
      %s370 = scalar_select %p367, %s368, %s369
      %p373 = pneg %p367
      %p374 = scmp.eq.s32.totalorder %s50, 3
      %p375 = por %p373, %p374
      %p376 = scmp.ne.s32.totalorder %s368, %s371
      %p377 = scmp.eq.s32.totalorder %s50, 0
      %p378 = por %p376, %p377
      %p379 = scmp.ne.s32.totalorder %s368, %s371
      %p380 = scmp.eq.s32.totalorder %s55, 3
      %p381 = por %p379, %p380
      %p382 = scmp.ne.s32.totalorder %s371, %s372
      %p383 = scmp.eq.s32.totalorder %s55, 0
      %p384 = por %p382, %p383
      %p385 = scmp.ne.s32.totalorder %s371, %s372
      %p386 = scmp.eq.s32.totalorder %s56, 3
      %p387 = por %p385, %p386
      %p389 = scmp.ne.s32.totalorder %s372, %s388
      %p390 = scmp.eq.s32.totalorder %s56, 0
      %p391 = por %p389, %p390
      %s392 = ssub.s32 %s50, %s57
      %p393 = scmp.eq.s32.totalorder %s392, 0
      %s395 = sadd.s32 %s394, 1
      %s396 = scalar_select %p393, %s394, %s395
      %p399 = pneg %p393
      %p400 = scmp.eq.s32.totalorder %s50, 3
      %p401 = por %p399, %p400
      %p402 = scmp.ne.s32.totalorder %s394, %s397
      %p403 = scmp.eq.s32.totalorder %s50, 0
      %p404 = por %p402, %p403
      %p405 = scmp.ne.s32.totalorder %s394, %s397
      %p406 = scmp.eq.s32.totalorder %s55, 3
      %p407 = por %p405, %p406
      %p408 = scmp.ne.s32.totalorder %s397, %s398
      %p409 = scmp.eq.s32.totalorder %s55, 0
      %p410 = por %p408, %p409
      %p411 = scmp.ne.s32.totalorder %s397, %s398
      %p412 = scmp.eq.s32.totalorder %s56, 3
      %p413 = por %p411, %p412
      %p415 = scmp.ne.s32.totalorder %s398, %s414
      %p416 = scmp.eq.s32.totalorder %s56, 0
      %p417 = por %p415, %p416
      %s418 = ssub.s32 %s50, %s57
      %p419 = scmp.eq.s32.totalorder %s418, 0
      %s421 = sadd.s32 %s420, 1
      %s422 = scalar_select %p419, %s420, %s421
      %p425 = pneg %p419
      %p426 = scmp.eq.s32.totalorder %s50, 3
      %p427 = por %p425, %p426
      %p428 = scmp.ne.s32.totalorder %s420, %s423
      %p429 = scmp.eq.s32.totalorder %s50, 0
      %p430 = por %p428, %p429
      %p431 = scmp.ne.s32.totalorder %s420, %s423
      %p432 = scmp.eq.s32.totalorder %s55, 3
      %p433 = por %p431, %p432
      %p434 = scmp.ne.s32.totalorder %s423, %s424
      %p435 = scmp.eq.s32.totalorder %s55, 0
      %p436 = por %p434, %p435
      %p437 = scmp.ne.s32.totalorder %s423, %s424
      %p438 = scmp.eq.s32.totalorder %s56, 3
      %p439 = por %p437, %p438
      %p441 = scmp.ne.s32.totalorder %s424, %s440
      %p442 = scmp.eq.s32.totalorder %s56, 0
      %p443 = por %p441, %p442
      %s444 = ssub.s32 %s50, %s57
      %p445 = scmp.eq.s32.totalorder %s444, 0
      %s447 = sadd.s32 %s446, 1
      %s448 = scalar_select %p445, %s446, %s447
      %p451 = pneg %p445
      %p452 = scmp.eq.s32.totalorder %s50, 3
      %p453 = por %p451, %p452
      %p454 = scmp.ne.s32.totalorder %s446, %s449
      %p455 = scmp.eq.s32.totalorder %s50, 0
      %p456 = por %p454, %p455
      %p457 = scmp.ne.s32.totalorder %s446, %s449
      %p458 = scmp.eq.s32.totalorder %s55, 3
      %p459 = por %p457, %p458
      %p460 = scmp.ne.s32.totalorder %s449, %s450
      %p461 = scmp.eq.s32.totalorder %s55, 0
      %p462 = por %p460, %p461
      %p463 = scmp.ne.s32.totalorder %s449, %s450
      %p464 = scmp.eq.s32.totalorder %s56, 3
      %p465 = por %p463, %p464
      %p467 = scmp.ne.s32.totalorder %s450, %s466
      %p468 = scmp.eq.s32.totalorder %s56, 0
      %p469 = por %p467, %p468
      %s470 = ssub.s32 %s50, %s57
      %p471 = scmp.eq.s32.totalorder %s470, 0
      %s473 = sadd.s32 %s472, 1
      %s474 = scalar_select %p471, %s472, %s473
      %p477 = pneg %p471
      %p478 = scmp.eq.s32.totalorder %s50, 3
      %p479 = por %p477, %p478
      %p480 = scmp.ne.s32.totalorder %s472, %s475
      %p481 = scmp.eq.s32.totalorder %s50, 0
      %p482 = por %p480, %p481
      %p483 = scmp.ne.s32.totalorder %s472, %s475
      %p484 = scmp.eq.s32.totalorder %s55, 3
      %p485 = por %p483, %p484
      %p486 = scmp.ne.s32.totalorder %s475, %s476
      %p487 = scmp.eq.s32.totalorder %s55, 0
      %p488 = por %p486, %p487
      %p489 = scmp.ne.s32.totalorder %s475, %s476
      %p490 = scmp.eq.s32.totalorder %s56, 3
      %p491 = por %p489, %p490
      %p493 = scmp.ne.s32.totalorder %s476, %s492
      %p494 = scmp.eq.s32.totalorder %s56, 0
      %p495 = por %p493, %p494
      %s496 = ssub.s32 %s50, %s57
      %p497 = scmp.eq.s32.totalorder %s496, 0
      %s499 = sadd.s32 %s498, 1
      %s500 = scalar_select %p497, %s498, %s499
      %p503 = pneg %p497
      %p504 = scmp.eq.s32.totalorder %s50, 3
      %p505 = por %p503, %p504
      %p506 = scmp.ne.s32.totalorder %s498, %s501
      %p507 = scmp.eq.s32.totalorder %s50, 0
      %p508 = por %p506, %p507
      %p509 = scmp.ne.s32.totalorder %s498, %s501
      %p510 = scmp.eq.s32.totalorder %s55, 3
      %p511 = por %p509, %p510
      %p512 = scmp.ne.s32.totalorder %s501, %s502
      %p513 = scmp.eq.s32.totalorder %s55, 0
      %p514 = por %p512, %p513
      %p515 = scmp.ne.s32.totalorder %s501, %s502
      %p516 = scmp.eq.s32.totalorder %s56, 3
      %p517 = por %p515, %p516
      %p519 = scmp.ne.s32.totalorder %s502, %s518
      %p520 = scmp.eq.s32.totalorder %s56, 0
      %p521 = por %p519, %p520
      %s522 = ssub.s32 %s50, %s57
      %p523 = scmp.eq.s32.totalorder %s522, 0
      %s525 = sadd.s32 %s524, 1
      %s526 = scalar_select %p523, %s524, %s525
      %p529 = pneg %p523
      %p530 = scmp.eq.s32.totalorder %s50, 3
      %p531 = por %p529, %p530
      %p532 = scmp.ne.s32.totalorder %s524, %s527
      %p533 = scmp.eq.s32.totalorder %s50, 0
      %p534 = por %p532, %p533
      %p535 = scmp.ne.s32.totalorder %s524, %s527
      %p536 = scmp.eq.s32.totalorder %s55, 3
      %p537 = por %p535, %p536
      %p538 = scmp.ne.s32.totalorder %s527, %s528
      %p539 = scmp.eq.s32.totalorder %s55, 0
      %p540 = por %p538, %p539
      %p541 = scmp.ne.s32.totalorder %s527, %s528
      %p542 = scmp.eq.s32.totalorder %s56, 3
      %p543 = por %p541, %p542
      %p545 = scmp.ne.s32.totalorder %s528, %s544
      %p546 = scmp.eq.s32.totalorder %s56, 0
      %p547 = por %p545, %p546
      %s548 = ssub.s32 %s50, %s57
      %p549 = scmp.eq.s32.totalorder %s548, 0
      %s551 = sadd.s32 %s550, 1
      %s552 = scalar_select %p549, %s550, %s551
      %p555 = pneg %p549
      %p556 = scmp.eq.s32.totalorder %s50, 3
      %p557 = por %p555, %p556
      %p558 = scmp.ne.s32.totalorder %s550, %s553
      %p559 = scmp.eq.s32.totalorder %s50, 0
      %p560 = por %p558, %p559
      %p561 = scmp.ne.s32.totalorder %s550, %s553
      %p562 = scmp.eq.s32.totalorder %s55, 3
      %p563 = por %p561, %p562
      %p564 = scmp.ne.s32.totalorder %s553, %s554
      %p565 = scmp.eq.s32.totalorder %s55, 0
      %p566 = por %p564, %p565
      %p567 = scmp.ne.s32.totalorder %s553, %s554
      %p568 = scmp.eq.s32.totalorder %s56, 3
      %p569 = por %p567, %p568
      %p571 = scmp.ne.s32.totalorder %s554, %s570
      %p572 = scmp.eq.s32.totalorder %s56, 0
      %p573 = por %p571, %p572
      %s574 = ssub.s32 %s50, %s57
      %p575 = scmp.eq.s32.totalorder %s574, 0
      %s577 = sadd.s32 %s576, 1
      %s578 = scalar_select %p575, %s576, %s577
      %p581 = pneg %p575
      %p582 = scmp.eq.s32.totalorder %s50, 3
      %p583 = por %p581, %p582
      %p584 = scmp.ne.s32.totalorder %s576, %s579
      %p585 = scmp.eq.s32.totalorder %s50, 0
      %p586 = por %p584, %p585
      %p587 = scmp.ne.s32.totalorder %s576, %s579
      %p588 = scmp.eq.s32.totalorder %s55, 3
      %p589 = por %p587, %p588
      %p590 = scmp.ne.s32.totalorder %s579, %s580
      %p591 = scmp.eq.s32.totalorder %s55, 0
      %p592 = por %p590, %p591
      %p593 = scmp.ne.s32.totalorder %s579, %s580
      %p594 = scmp.eq.s32.totalorder %s56, 3
      %p595 = por %p593, %p594
      %p597 = scmp.ne.s32.totalorder %s580, %s596
      %p598 = scmp.eq.s32.totalorder %s56, 0
      %p599 = por %p597, %p598
      %s601 = sadd.s32 %s600, 1
      %p604 = scmp.eq.s32.totalorder %s50, 3
      %p605 = scmp.ne.s32.totalorder %s600, %s602
      %p606 = scmp.eq.s32.totalorder %s50, 0
      %p607 = por %p605, %p606
      %p608 = scmp.ne.s32.totalorder %s600, %s602
      %p609 = scmp.eq.s32.totalorder %s55, 3
      %p610 = por %p608, %p609
      %p611 = scmp.ne.s32.totalorder %s602, %s603
      %p612 = scmp.eq.s32.totalorder %s55, 0
      %p613 = por %p611, %p612
      %p614 = scmp.ne.s32.totalorder %s602, %s603
      %p615 = scmp.eq.s32.totalorder %s56, 3
      %p616 = por %p614, %p615
      %p618 = scmp.ne.s32.totalorder %s603, %s617
      %p619 = scmp.eq.s32.totalorder %s56, 0
      %p620 = por %p618, %p619
      %s622 = sadd.s32 %s621, 1
      %p625 = scmp.eq.s32.totalorder %s50, 3
      %p626 = scmp.ne.s32.totalorder %s621, %s623
      %p627 = scmp.eq.s32.totalorder %s50, 0
      %p628 = por %p626, %p627
      %p629 = scmp.ne.s32.totalorder %s621, %s623
      %p630 = scmp.eq.s32.totalorder %s55, 3
      %p631 = por %p629, %p630
      %p632 = scmp.ne.s32.totalorder %s623, %s624
      %p633 = scmp.eq.s32.totalorder %s55, 0
      %p634 = por %p632, %p633
      %p635 = scmp.ne.s32.totalorder %s623, %s624
      %p636 = scmp.eq.s32.totalorder %s56, 3
      %p637 = por %p635, %p636
      %p639 = scmp.ne.s32.totalorder %s624, %s638
      %p640 = scmp.eq.s32.totalorder %s56, 0
      %p641 = por %p639, %p640
      %p642 = scmp.le.s32.totalorder 1, %s50
      %p643 = scmp.lt.s32.totalorder %s50, 5
      %p644 = pnand %p642, %p643
      %p645 = pneg %p644
      // Predicated region
      $region9: #{egnn_forward.1} parent=5 // pred_check
        _
      $region10: #{egnn_forward.1} parent=5 // pred_check_branch
        %647 = sbr.rel (%p644) target = $region12
      $region11: #{egnn_forward.1} parent=5 // pred_region
        %s648 = ssub.s32 %s50, 1
        // Predicated region
        $region13: #{egnn_forward.1} parent=11 // pred_check
          %p649 = pneg %p71
        $region14: #{egnn_forward.1} parent=11 // pred_check_branch
          %651 = sbr.rel (%p649) target = $region16
        $region15: #{egnn_forward.1} parent=11 // pred_region
          %s653 = ssub.s32 256, 256
          %654 = vsyncadd [#allocation3], %s653
          %s655 = sshll.u32 [#allocation2], 4
          %s656 = int_to_ptr.vmem [resolvable:$true] %s655
          %661 = dma.hbm_to_vmem [thread:$0]  %s0, 256, %s656, [#allocation3], 128, 128, 8
        $region16: #{egnn_forward.1} parent=11 // pred_fallthru
          _
        // Predicated region
        $region17: #{egnn_forward.1} parent=11 // pred_check
          %p662 = pneg %p92
        $region18: #{egnn_forward.1} parent=11 // pred_check_branch
          %664 = sbr.rel (%p662) target = $region20
        $region19: #{egnn_forward.1} parent=11 // pred_region
          _
        $region20: #{egnn_forward.1} parent=11 // pred_fallthru
          _
        // Predicated region
        $region21: #{egnn_forward.1} parent=11 // pred_check
          %p665 = pneg %p113
        $region22: #{egnn_forward.1} parent=11 // pred_check_branch
          %667 = sbr.rel (%p665) target = $region24
        $region23: #{egnn_forward.1} parent=11 // pred_region
          _
        $region24: #{egnn_forward.1} parent=11 // pred_fallthru
          _
        // Predicated region
        $region25: #{egnn_forward.1} parent=11 // pred_check
          %p668 = pneg %p134
        $region26: #{egnn_forward.1} parent=11 // pred_check_branch
          %670 = sbr.rel (%p668) target = $region28
        $region27: #{egnn_forward.1} parent=11 // pred_region
          _
        $region28: #{egnn_forward.1} parent=11 // pred_fallthru
          _
        // Predicated region
        $region29: #{egnn_forward.1} parent=11 // pred_check
          %p671 = pneg %p155
        $region30: #{egnn_forward.1} parent=11 // pred_check_branch
          %673 = sbr.rel (%p671) target = $region32
        $region31: #{egnn_forward.1} parent=11 // pred_region
          _
        $region32: #{egnn_forward.1} parent=11 // pred_fallthru
          _
        // Predicated region
        $region33: #{egnn_forward.1} parent=11 // pred_check
          %p674 = pneg %p176
        $region34: #{egnn_forward.1} parent=11 // pred_check_branch
          %676 = sbr.rel (%p674) target = $region36
        $region35: #{egnn_forward.1} parent=11 // pred_region
          _
        $region36: #{egnn_forward.1} parent=11 // pred_fallthru
          _
      $region12: #{egnn_forward.1} parent=5 // pred_fallthru
        _
      %p677 = scmp.lt.s32.totalorder %s50, 4
      // Predicated region
      $region37: #{egnn_forward.1} parent=5 // pred_check
        %p678 = pneg %p677
      $region38: #{egnn_forward.1} parent=5 // pred_check_branch
        %680 = sbr.rel (%p678) target = $region40
      $region39: #{egnn_forward.1} parent=5 // pred_region
        // Predicated region
        $region41: #{egnn_forward.1} parent=39 // pred_check
          %p681 = pneg %p196
        $region42: #{egnn_forward.1} parent=39 // pred_check_branch
          %683 = sbr.rel (%p681) target = $region44
        $region43: #{egnn_forward.1} parent=39 // pred_region
          %s684 = sand.u32 %s50, 1
          %s685 = scalar_lea.sflag [#allocation6], %s684
          %s686 = sand.u32 %s186, 1
          %s687 = smul.addr %s686, 4
          %s688 = scalar_lea.vmem [#allocation5], %s687
          %s690 = ssub.s32 64, 64
          %691 = vsyncadd %s685, %s690
          %s692 = smul.addr %s50, 64
          %s693 = scalar_lea.hbm %s6, %s692
          %s695 = sshll.u32 %s688, 4
          %s696 = int_to_ptr.vmem [resolvable:$true] %s695
          %698 = dma.hbm_to_vmem [thread:$0]  %s693, 64, %s696, %s685
        $region44: #{egnn_forward.1} parent=39 // pred_fallthru
          _
        // Predicated region
        $region45: #{egnn_forward.1} parent=39 // pred_check
          %p699 = pneg %p222
        $region46: #{egnn_forward.1} parent=39 // pred_check_branch
          %701 = sbr.rel (%p699) target = $region48
        $region47: #{egnn_forward.1} parent=39 // pred_region
          %s702 = sand.u32 %s50, 1
          %s703 = scalar_lea.sflag [#allocation6], %s702
          %s704 = sand.u32 %s212, 1
          %s705 = scalar_lea.vmem [#allocation7], %s704
          %s707 = ssub.s32 16, 16
          %708 = vsyncadd %s703, %s707
          %s709 = smul.addr %s50, 16
          %s710 = scalar_lea.hbm %s7, %s709
          %s712 = sshll.u32 %s705, 4
          %s713 = int_to_ptr.vmem [resolvable:$true] %s712
          %715 = dma.hbm_to_vmem [thread:$0]  %s710, 16, %s713, %s703
        $region48: #{egnn_forward.1} parent=39 // pred_fallthru
          _
        // Predicated region
        $region49: #{egnn_forward.1} parent=39 // pred_check
          %p716 = pneg %p248
        $region50: #{egnn_forward.1} parent=39 // pred_check_branch
          %718 = sbr.rel (%p716) target = $region52
        $region51: #{egnn_forward.1} parent=39 // pred_region
          %s719 = sand.u32 %s50, 1
          %s720 = scalar_lea.sflag [#allocation9], %s719
          %s721 = sand.u32 %s238, 1
          %s722 = scalar_lea.vmem [#allocation8], %s721
          %s724 = ssub.s32 16, 16
          %725 = vsyncadd %s720, %s724
          %s726 = smul.addr %s50, 16
          %s727 = scalar_lea.hbm %s8, %s726
          %s729 = sshll.u32 %s722, 4
          %s730 = int_to_ptr.vmem [resolvable:$true] %s729
          %732 = dma.hbm_to_vmem [thread:$0]  %s727, 16, %s730, %s720
        $region52: #{egnn_forward.1} parent=39 // pred_fallthru
          _
        // Predicated region
        $region53: #{egnn_forward.1} parent=39 // pred_check
          %p733 = pneg %p274
        $region54: #{egnn_forward.1} parent=39 // pred_check_branch
          %735 = sbr.rel (%p733) target = $region56
        $region55: #{egnn_forward.1} parent=39 // pred_region
          %p736 = scmp.lt.s32.totalorder %s50, 3
          %s737 = scalar_select %p736, %s50, 3
          %s738 = smul.addr %s737, 4
          %s739 = smul.addr %s738, 8
          %s740 = scalar_lea.vmem %s9, %s739
        $region56: #{egnn_forward.1} parent=39 // pred_fallthru
          _
        // Predicated region
        $region57: #{egnn_forward.1} parent=39 // pred_check
          %p741 = pneg %p300
        $region58: #{egnn_forward.1} parent=39 // pred_check_branch
          %743 = sbr.rel (%p741) target = $region60
        $region59: #{egnn_forward.1} parent=39 // pred_region
          %s744 = sand.u32 %s50, 1
          %s745 = scalar_lea.sflag [#allocation9], %s744
          %s746 = sand.u32 %s290, 1
          %s747 = scalar_lea.vmem [#allocation10], %s746
          %s749 = ssub.s32 16, 16
          %750 = vsyncadd %s745, %s749
          %s751 = smul.addr %s50, 16
          %s752 = scalar_lea.hbm %s10, %s751
          %s754 = sshll.u32 %s747, 4
          %s755 = int_to_ptr.vmem [resolvable:$true] %s754
          %757 = dma.hbm_to_vmem [thread:$0]  %s752, 16, %s755, %s745
        $region60: #{egnn_forward.1} parent=39 // pred_fallthru
          _
        // Predicated region
        $region61: #{egnn_forward.1} parent=39 // pred_check
          %p758 = pneg %p326
        $region62: #{egnn_forward.1} parent=39 // pred_check_branch
          %760 = sbr.rel (%p758) target = $region64
        $region63: #{egnn_forward.1} parent=39 // pred_region
          %p761 = scmp.lt.s32.totalorder %s50, 3
          %s762 = scalar_select %p761, %s50, 3
          %s763 = smul.addr %s762, 4
          %s764 = smul.addr %s763, 8
          %s765 = scalar_lea.vmem %s11, %s764
        $region64: #{egnn_forward.1} parent=39 // pred_fallthru
          _
        // Predicated region
        $region65: #{egnn_forward.1} parent=39 // pred_check
          %p766 = pneg %p352
        $region66: #{egnn_forward.1} parent=39 // pred_check_branch
          %768 = sbr.rel (%p766) target = $region68
        $region67: #{egnn_forward.1} parent=39 // pred_region
          %s769 = sand.u32 %s50, 1
          %s770 = scalar_lea.sflag [#allocation12], %s769
          %s771 = sand.u32 %s342, 1
          %s772 = smul.addr %s771, 32
          %s773 = scalar_lea.vmem [#allocation11], %s772
          %s775 = ssub.s32 512, 512
          %776 = vsyncadd %s770, %s775
          %s777 = smul.addr %s50, 4
          %s778 = smul.addr %s777, 128
          %s779 = scalar_lea.hbm %s12, %s778
          %s780 = sshll.u32 %s773, 4
          %s781 = int_to_ptr.vmem [resolvable:$true] %s780
          %786 = dma.hbm_to_vmem [thread:$0]  %s779, 512, %s781, %s770, 128, 128, 8
        $region68: #{egnn_forward.1} parent=39 // pred_fallthru
          _
        // Predicated region
        $region69: #{egnn_forward.1} parent=39 // pred_check
          %p787 = pneg %p378
        $region70: #{egnn_forward.1} parent=39 // pred_check_branch
          %789 = sbr.rel (%p787) target = $region72
        $region71: #{egnn_forward.1} parent=39 // pred_region
          %s790 = sand.u32 %s50, 1
          %s791 = scalar_lea.sflag [#allocation12], %s790
          %s792 = sand.u32 %s368, 1
          %s793 = smul.addr %s792, 32
          %s794 = scalar_lea.vmem [#allocation13], %s793
          %s796 = ssub.s32 512, 512
          %797 = vsyncadd %s791, %s796
          %s798 = smul.addr %s50, 4
          %s799 = smul.addr %s798, 128
          %s800 = scalar_lea.hbm %s13, %s799
          %s801 = sshll.u32 %s794, 4
          %s802 = int_to_ptr.vmem [resolvable:$true] %s801
          %807 = dma.hbm_to_vmem [thread:$0]  %s800, 512, %s802, %s791, 128, 128, 8
        $region72: #{egnn_forward.1} parent=39 // pred_fallthru
          _
        // Predicated region
        $region73: #{egnn_forward.1} parent=39 // pred_check
          %p808 = pneg %p404
        $region74: #{egnn_forward.1} parent=39 // pred_check_branch
          %810 = sbr.rel (%p808) target = $region76
        $region75: #{egnn_forward.1} parent=39 // pred_region
          %p811 = scmp.lt.s32.totalorder %s50, 3
          %s812 = scalar_select %p811, %s50, 3
          %s813 = scalar_lea.vmem %s14, %s812
        $region76: #{egnn_forward.1} parent=39 // pred_fallthru
          _
        // Predicated region
        $region77: #{egnn_forward.1} parent=39 // pred_check
          %p814 = pneg %p430
        $region78: #{egnn_forward.1} parent=39 // pred_check_branch
          %816 = sbr.rel (%p814) target = $region80
        $region79: #{egnn_forward.1} parent=39 // pred_region
          %s817 = sand.u32 %s50, 1
          %s818 = scalar_lea.sflag [#allocation15], %s817
          %s819 = sand.u32 %s420, 1
          %s820 = smul.addr %s819, 32
          %s821 = scalar_lea.vmem [#allocation14], %s820
          %s823 = ssub.s32 512, 512
          %824 = vsyncadd %s818, %s823
          %s825 = smul.addr %s50, 4
          %s826 = smul.addr %s825, 128
          %s827 = scalar_lea.hbm %s15, %s826
          %s828 = sshll.u32 %s821, 4
          %s829 = int_to_ptr.vmem [resolvable:$true] %s828
          %834 = dma.hbm_to_vmem [thread:$0]  %s827, 512, %s829, %s818, 128, 128, 8
        $region80: #{egnn_forward.1} parent=39 // pred_fallthru
          _
        // Predicated region
        $region81: #{egnn_forward.1} parent=39 // pred_check
          %p835 = pneg %p456
        $region82: #{egnn_forward.1} parent=39 // pred_check_branch
          %837 = sbr.rel (%p835) target = $region84
        $region83: #{egnn_forward.1} parent=39 // pred_region
          %p838 = scmp.lt.s32.totalorder %s50, 3
          %s839 = scalar_select %p838, %s50, 3
          %s840 = scalar_lea.vmem %s16, %s839
        $region84: #{egnn_forward.1} parent=39 // pred_fallthru
          _
        // Predicated region
        $region85: #{egnn_forward.1} parent=39 // pred_check
          %p841 = pneg %p482
        $region86: #{egnn_forward.1} parent=39 // pred_check_branch
          %843 = sbr.rel (%p841) target = $region88
        $region87: #{egnn_forward.1} parent=39 // pred_region
          %s844 = sand.u32 %s50, 1
          %s845 = scalar_lea.sflag [#allocation15], %s844
          %s846 = sand.u32 %s472, 1
          %s847 = smul.addr %s846, 32
          %s848 = scalar_lea.vmem [#allocation16], %s847
          %s850 = ssub.s32 512, 512
          %851 = vsyncadd %s845, %s850
          %s852 = smul.addr %s50, 4
          %s853 = smul.addr %s852, 128
          %s854 = scalar_lea.hbm %s17, %s853
          %s855 = sshll.u32 %s848, 4
          %s856 = int_to_ptr.vmem [resolvable:$true] %s855
          %861 = dma.hbm_to_vmem [thread:$0]  %s854, 512, %s856, %s845, 128, 128, 8
        $region88: #{egnn_forward.1} parent=39 // pred_fallthru
          _
        // Predicated region
        $region89: #{egnn_forward.1} parent=39 // pred_check
          %p862 = pneg %p508
        $region90: #{egnn_forward.1} parent=39 // pred_check_branch
          %864 = sbr.rel (%p862) target = $region92
        $region91: #{egnn_forward.1} parent=39 // pred_region
          %s865 = sand.u32 %s50, 1
          %s866 = scalar_lea.sflag [#allocation18], %s865
          %s867 = sand.u32 %s498, 1
          %s868 = scalar_lea.vmem [#allocation17], %s867
          %s870 = ssub.s32 16, 16
          %871 = vsyncadd %s866, %s870
          %s872 = smul.addr %s50, 16
          %s873 = scalar_lea.hbm %s18, %s872
          %s875 = sshll.u32 %s868, 4
          %s876 = int_to_ptr.vmem [resolvable:$true] %s875
          %878 = dma.hbm_to_vmem [thread:$0]  %s873, 16, %s876, %s866
        $region92: #{egnn_forward.1} parent=39 // pred_fallthru
          _
        // Predicated region
        $region93: #{egnn_forward.1} parent=39 // pred_check
          %p879 = pneg %p534
        $region94: #{egnn_forward.1} parent=39 // pred_check_branch
          %881 = sbr.rel (%p879) target = $region96
        $region95: #{egnn_forward.1} parent=39 // pred_region
          %s882 = sand.u32 %s50, 1
          %s883 = scalar_lea.sflag [#allocation18], %s882
          %s884 = sand.u32 %s524, 1
          %s885 = scalar_lea.vmem [#allocation19], %s884
          %s887 = ssub.s32 16, 16
          %888 = vsyncadd %s883, %s887
          %s889 = smul.addr %s50, 16
          %s890 = scalar_lea.hbm %s19, %s889
          %s892 = sshll.u32 %s885, 4
          %s893 = int_to_ptr.vmem [resolvable:$true] %s892
          %895 = dma.hbm_to_vmem [thread:$0]  %s890, 16, %s893, %s883
        $region96: #{egnn_forward.1} parent=39 // pred_fallthru
          _
        // Predicated region
        $region97: #{egnn_forward.1} parent=39 // pred_check
          %p896 = pneg %p560
        $region98: #{egnn_forward.1} parent=39 // pred_check_branch
          %898 = sbr.rel (%p896) target = $region100
        $region99: #{egnn_forward.1} parent=39 // pred_region
          %p899 = scmp.lt.s32.totalorder %s50, 3
          %s900 = scalar_select %p899, %s50, 3
          %s901 = scalar_lea.vmem %s20, %s900
        $region100: #{egnn_forward.1} parent=39 // pred_fallthru
          _
        // Predicated region
        $region101: #{egnn_forward.1} parent=39 // pred_check
          %p902 = pneg %p586
        $region102: #{egnn_forward.1} parent=39 // pred_check_branch
          %904 = sbr.rel (%p902) target = $region104
        $region103: #{egnn_forward.1} parent=39 // pred_region
          %s905 = sand.u32 %s576, 1
          %s906 = scalar_lea.sflag [#allocation21], %s905
          %s907 = sand.u32 %s576, 1
          %s908 = scalar_lea.vmem [#allocation20], %s907
          %s910 = ssub.s32 16, 16
          %911 = vsyncadd %s906, %s910
          %s912 = smul.addr %s50, 16
          %s913 = scalar_lea.hbm %s21, %s912
          %s915 = sshll.u32 %s908, 4
          %s916 = int_to_ptr.vmem [resolvable:$true] %s915
          %918 = dma.hbm_to_vmem [thread:$0]  %s913, 16, %s916, %s906
        $region104: #{egnn_forward.1} parent=39 // pred_fallthru
          _
      $region40: #{egnn_forward.1} parent=5 // pred_fallthru
        _
      %p919 = scmp.le.s32.totalorder 1, %s50
      %p920 = scmp.lt.s32.totalorder %s50, 5
      %p921 = pnand %p919, %p920
      %p922 = pneg %p921
      // Predicated region
      $region105: #{egnn_forward.1} parent=5 // pred_check
        _
      $region106: #{egnn_forward.1} parent=5 // pred_check_branch
        %924 = sbr.rel (%p921) target = $region108
      $region107: #{egnn_forward.1} parent=5 // pred_region
        %s925 = ssub.s32 %s50, 1
        // Predicated region
        $region109: #{egnn_forward.1} parent=107 // pred_check
          %p926 = pneg %p71
        $region110: #{egnn_forward.1} parent=107 // pred_check_branch
          %928 = sbr.rel (%p926) target = $region112
        $region111: #{egnn_forward.1} parent=107 // pred_region
          %929 = dma.done [#allocation3], 256
        $region112: #{egnn_forward.1} parent=107 // pred_fallthru
          _
        %s930 = sand.u32 %s55, 1
        %s931 = scalar_lea.sflag [#allocation6], %s930
        %s932 = sand.u32 %s189, 1
        %s933 = smul.addr %s932, 4
        %s934 = scalar_lea.vmem [#allocation5], %s933
        // Predicated region
        $region113: #{egnn_forward.1} parent=107 // pred_check
          %p935 = pneg %p202
        $region114: #{egnn_forward.1} parent=107 // pred_check_branch
          %937 = sbr.rel (%p935) target = $region116
        $region115: #{egnn_forward.1} parent=107 // pred_region
          %938 = dma.done %s931, 64
        $region116: #{egnn_forward.1} parent=107 // pred_fallthru
          _
        %s939 = sand.u32 %s55, 1
        %s940 = scalar_lea.sflag [#allocation6], %s939
        %s941 = sand.u32 %s215, 1
        %s942 = scalar_lea.vmem [#allocation7], %s941
        // Predicated region
        $region117: #{egnn_forward.1} parent=107 // pred_check
          %p943 = pneg %p228
        $region118: #{egnn_forward.1} parent=107 // pred_check_branch
          %945 = sbr.rel (%p943) target = $region120
        $region119: #{egnn_forward.1} parent=107 // pred_region
          %946 = dma.done %s940, 16
        $region120: #{egnn_forward.1} parent=107 // pred_fallthru
          _
        %s947 = sand.u32 %s55, 1
        %s948 = scalar_lea.sflag [#allocation9], %s947
        %s949 = sand.u32 %s241, 1
        %s950 = scalar_lea.vmem [#allocation8], %s949
        // Predicated region
        $region121: #{egnn_forward.1} parent=107 // pred_check
          %p951 = pneg %p254
        $region122: #{egnn_forward.1} parent=107 // pred_check_branch
          %953 = sbr.rel (%p951) target = $region124
        $region123: #{egnn_forward.1} parent=107 // pred_region
          %954 = dma.done %s948, 16
        $region124: #{egnn_forward.1} parent=107 // pred_fallthru
          _
        %s955 = sand.u32 %s55, 1
        %s956 = scalar_lea.sflag [#allocation9], %s955
        %s957 = sand.u32 %s293, 1
        %s958 = scalar_lea.vmem [#allocation10], %s957
        // Predicated region
        $region125: #{egnn_forward.1} parent=107 // pred_check
          %p959 = pneg %p306
        $region126: #{egnn_forward.1} parent=107 // pred_check_branch
          %961 = sbr.rel (%p959) target = $region128
        $region127: #{egnn_forward.1} parent=107 // pred_region
          %962 = dma.done %s956, 16
        $region128: #{egnn_forward.1} parent=107 // pred_fallthru
          _
        %s963 = sand.u32 %s55, 1
        %s964 = scalar_lea.sflag [#allocation12], %s963
        %s965 = sand.u32 %s345, 1
        %s966 = smul.addr %s965, 32
        %s967 = scalar_lea.vmem [#allocation11], %s966
        // Predicated region
        $region129: #{egnn_forward.1} parent=107 // pred_check
          %p968 = pneg %p358
        $region130: #{egnn_forward.1} parent=107 // pred_check_branch
          %970 = sbr.rel (%p968) target = $region132
        $region131: #{egnn_forward.1} parent=107 // pred_region
          %971 = dma.done %s964, 512
        $region132: #{egnn_forward.1} parent=107 // pred_fallthru
          _
        %s972 = sand.u32 %s55, 1
        %s973 = scalar_lea.sflag [#allocation12], %s972
        %s974 = sand.u32 %s371, 1
        %s975 = smul.addr %s974, 32
        %s976 = scalar_lea.vmem [#allocation13], %s975
        // Predicated region
        $region133: #{egnn_forward.1} parent=107 // pred_check
          %p977 = pneg %p384
        $region134: #{egnn_forward.1} parent=107 // pred_check_branch
          %979 = sbr.rel (%p977) target = $region136
        $region135: #{egnn_forward.1} parent=107 // pred_region
          %980 = dma.done %s973, 512
        $region136: #{egnn_forward.1} parent=107 // pred_fallthru
          _
        %s981 = sand.u32 %s55, 1
        %s982 = scalar_lea.sflag [#allocation15], %s981
        %s983 = sand.u32 %s423, 1
        %s984 = smul.addr %s983, 32
        %s985 = scalar_lea.vmem [#allocation14], %s984
        // Predicated region
        $region137: #{egnn_forward.1} parent=107 // pred_check
          %p986 = pneg %p436
        $region138: #{egnn_forward.1} parent=107 // pred_check_branch
          %988 = sbr.rel (%p986) target = $region140
        $region139: #{egnn_forward.1} parent=107 // pred_region
          %989 = dma.done %s982, 512
        $region140: #{egnn_forward.1} parent=107 // pred_fallthru
          _
        %s990 = sand.u32 %s55, 1
        %s991 = scalar_lea.sflag [#allocation15], %s990
        %s992 = sand.u32 %s475, 1
        %s993 = smul.addr %s992, 32
        %s994 = scalar_lea.vmem [#allocation16], %s993
        // Predicated region
        $region141: #{egnn_forward.1} parent=107 // pred_check
          %p995 = pneg %p488
        $region142: #{egnn_forward.1} parent=107 // pred_check_branch
          %997 = sbr.rel (%p995) target = $region144
        $region143: #{egnn_forward.1} parent=107 // pred_region
          %998 = dma.done %s991, 512
        $region144: #{egnn_forward.1} parent=107 // pred_fallthru
          _
        %s999 = sand.u32 %s55, 1
        %s1000 = scalar_lea.sflag [#allocation18], %s999
        %s1001 = sand.u32 %s501, 1
        %s1002 = scalar_lea.vmem [#allocation17], %s1001
        // Predicated region
        $region145: #{egnn_forward.1} parent=107 // pred_check
          %p1003 = pneg %p514
        $region146: #{egnn_forward.1} parent=107 // pred_check_branch
          %1005 = sbr.rel (%p1003) target = $region148
        $region147: #{egnn_forward.1} parent=107 // pred_region
          %1006 = dma.done %s1000, 16
        $region148: #{egnn_forward.1} parent=107 // pred_fallthru
          _
        %s1007 = sand.u32 %s55, 1
        %s1008 = scalar_lea.sflag [#allocation18], %s1007
        %s1009 = sand.u32 %s527, 1
        %s1010 = scalar_lea.vmem [#allocation19], %s1009
        // Predicated region
        $region149: #{egnn_forward.1} parent=107 // pred_check
          %p1011 = pneg %p540
        $region150: #{egnn_forward.1} parent=107 // pred_check_branch
          %1013 = sbr.rel (%p1011) target = $region152
        $region151: #{egnn_forward.1} parent=107 // pred_region
          %1014 = dma.done %s1008, 16
        $region152: #{egnn_forward.1} parent=107 // pred_fallthru
          _
        %s1015 = sand.u32 %s579, 1
        %s1016 = scalar_lea.sflag [#allocation21], %s1015
        %s1017 = sand.u32 %s579, 1
        %s1018 = scalar_lea.vmem [#allocation20], %s1017
        // Predicated region
        $region153: #{egnn_forward.1} parent=107 // pred_check
          %p1019 = pneg %p592
        $region154: #{egnn_forward.1} parent=107 // pred_check_branch
          %1021 = sbr.rel (%p1019) target = $region156
        $region155: #{egnn_forward.1} parent=107 // pred_region
          %1022 = dma.done %s1016, 16
        $region156: #{egnn_forward.1} parent=107 // pred_fallthru
          _
        %p1023 = pneg %p71
        %p1024 = pneg %p68
        %p1025 = pneg %p92
        %p1026 = pneg %p89
        %p1027 = pneg %p113
        %p1028 = pneg %p110
        %p1029 = pneg %p134
        %p1030 = pneg %p131
        %p1031 = pneg %p155
        %p1032 = pneg %p152
        %p1033 = pneg %p176
        %p1034 = pneg %p173
        %s1035 = sand.u32 %s55, 1
        %s1036 = scalar_lea.sflag [#allocation6], %s1035
        %s1037 = sand.u32 %s189, 1
        %s1038 = smul.addr %s1037, 4
        %s1039 = scalar_lea.vmem [#allocation5], %s1038
        %p1040 = pneg %p202
        %p1041 = pneg %p199
        %s1042 = sand.u32 %s55, 1
        %s1043 = scalar_lea.sflag [#allocation6], %s1042
        %s1044 = sand.u32 %s215, 1
        %s1045 = scalar_lea.vmem [#allocation7], %s1044
        %p1046 = pneg %p228
        %p1047 = pneg %p225
        %s1048 = sand.u32 %s55, 1
        %s1049 = scalar_lea.sflag [#allocation9], %s1048
        %s1050 = sand.u32 %s241, 1
        %s1051 = scalar_lea.vmem [#allocation8], %s1050
        %p1052 = pneg %p254
        %p1053 = pneg %p251
        %p1054 = scmp.lt.s32.totalorder %s55, 3
        %s1055 = scalar_select %p1054, %s55, 3
        %s1056 = smul.addr %s1055, 4
        %s1057 = smul.addr %s1056, 8
        %s1058 = scalar_lea.vmem %s9, %s1057
        %p1059 = pneg %p280
        %p1060 = pneg %p277
        %s1061 = sand.u32 %s55, 1
        %s1062 = scalar_lea.sflag [#allocation9], %s1061
        %s1063 = sand.u32 %s293, 1
        %s1064 = scalar_lea.vmem [#allocation10], %s1063
        %p1065 = pneg %p306
        %p1066 = pneg %p303
        %p1067 = scmp.lt.s32.totalorder %s55, 3
        %s1068 = scalar_select %p1067, %s55, 3
        %s1069 = smul.addr %s1068, 4
        %s1070 = smul.addr %s1069, 8
        %s1071 = scalar_lea.vmem %s11, %s1070
        %p1072 = pneg %p332
        %p1073 = pneg %p329
        %s1074 = sand.u32 %s55, 1
        %s1075 = scalar_lea.sflag [#allocation12], %s1074
        %s1076 = sand.u32 %s345, 1
        %s1077 = smul.addr %s1076, 32
        %s1078 = scalar_lea.vmem [#allocation11], %s1077
        %p1079 = pneg %p358
        %p1080 = pneg %p355
        %s1081 = sand.u32 %s55, 1
        %s1082 = scalar_lea.sflag [#allocation12], %s1081
        %s1083 = sand.u32 %s371, 1
        %s1084 = smul.addr %s1083, 32
        %s1085 = scalar_lea.vmem [#allocation13], %s1084
        %p1086 = pneg %p384
        %p1087 = pneg %p381
        %p1088 = scmp.lt.s32.totalorder %s55, 3
        %s1089 = scalar_select %p1088, %s55, 3
        %s1090 = scalar_lea.vmem %s14, %s1089
        %p1091 = pneg %p410
        %p1092 = pneg %p407
        %s1093 = sand.u32 %s55, 1
        %s1094 = scalar_lea.sflag [#allocation15], %s1093
        %s1095 = sand.u32 %s423, 1
        %s1096 = smul.addr %s1095, 32
        %s1097 = scalar_lea.vmem [#allocation14], %s1096
        %p1098 = pneg %p436
        %p1099 = pneg %p433
        %p1100 = scmp.lt.s32.totalorder %s55, 3
        %s1101 = scalar_select %p1100, %s55, 3
        %s1102 = scalar_lea.vmem %s16, %s1101
        %p1103 = pneg %p462
        %p1104 = pneg %p459
        %s1105 = sand.u32 %s55, 1
        %s1106 = scalar_lea.sflag [#allocation15], %s1105
        %s1107 = sand.u32 %s475, 1
        %s1108 = smul.addr %s1107, 32
        %s1109 = scalar_lea.vmem [#allocation16], %s1108
        %p1110 = pneg %p488
        %p1111 = pneg %p485
        %s1112 = sand.u32 %s55, 1
        %s1113 = scalar_lea.sflag [#allocation18], %s1112
        %s1114 = sand.u32 %s501, 1
        %s1115 = scalar_lea.vmem [#allocation17], %s1114
        %p1116 = pneg %p514
        %p1117 = pneg %p511
        %s1118 = sand.u32 %s55, 1
        %s1119 = scalar_lea.sflag [#allocation18], %s1118
        %s1120 = sand.u32 %s527, 1
        %s1121 = scalar_lea.vmem [#allocation19], %s1120
        %p1122 = pneg %p540
        %p1123 = pneg %p537
        %p1124 = scmp.lt.s32.totalorder %s55, 3
        %s1125 = scalar_select %p1124, %s55, 3
        %s1126 = scalar_lea.vmem %s20, %s1125
        %p1127 = pneg %p566
        %p1128 = pneg %p563
        %s1129 = sand.u32 %s579, 1
        %s1130 = scalar_lea.sflag [#allocation21], %s1129
        %s1131 = sand.u32 %s579, 1
        %s1132 = scalar_lea.vmem [#allocation20], %s1131
        %p1133 = pneg %p592
        %p1134 = pneg %p589
        %p1135 = pneg %p613
        %p1136 = pneg %p610
        %p1137 = pneg %p634
        %p1138 = pneg %p631
        %p1139 = scmp.lt.s32.totalorder %s55, 3
        %s1140 = scalar_select %p1139, %s55, 3
        %s1141 = smul.addr %s1140, 4
        %s1142 = smul.addr %s1141, 8
        %s1143 = scalar_lea.vmem %s9, %s1142
        %p1144 = scmp.lt.s32.totalorder %s55, 3
        %s1145 = scalar_select %p1144, %s55, 3
        %s1146 = smul.addr %s1145, 4
        %s1147 = smul.addr %s1146, 8
        %s1148 = scalar_lea.vmem %s11, %s1147
        %p1149 = scmp.lt.s32.totalorder %s55, 3
        %s1150 = scalar_select %p1149, %s55, 3
        %s1151 = scalar_lea.vmem %s14, %s1150
        %p1152 = scmp.lt.s32.totalorder %s55, 3
        %s1153 = scalar_select %p1152, %s55, 3
        %s1154 = scalar_lea.vmem %s16, %s1153
        %p1155 = scmp.lt.s32.totalorder %s55, 3
        %s1156 = scalar_select %p1155, %s55, 3
        %s1157 = scalar_lea.vmem %s20, %s1156
        %p1158 = scmp.eq.s32.totalorder %s55, 0
        // Predicated region
        $region157: #{egnn_forward.1} parent=107 // pred_check
          %p1159 = pneg %p1158
        $region158: #{egnn_forward.1} parent=107 // pred_check_branch
          %1161 = sbr.rel (%p1159) target = $region160
        $region159: #{egnn_forward.1} parent=107 // pred_region
          %v1162 = vld [vmem:[#allocation2] sm:$0xff]
          %v1163 = vld [vmem:[#allocation2 + $0x8] sm:$0xff]
          %vm1164 = vcmask 261120
          %1165 = vst.msk [vmem:[#allocation22] sm:$0xff] %vm1164, %v1162
          %1166 = vst.msk [vmem:[#allocation22 + $0x8] sm:$0xff] %vm1164, %v1163
          %v1167 = vld [vmem:[%s1] sm:$0xff]
          %v1168 = vld [vmem:[%s1 + $0x8] sm:$0xff]
          %vm1169 = vcmask 23552
          %1170 = vst.msk [vmem:[%s23] sm:$0xff] %vm1169, %v1167
          %1171 = vst.msk [vmem:[%s23 + $0x8] sm:$0xff] %vm1169, %v1168
        $region160: #{egnn_forward.1} parent=107 // pred_fallthru
          _
        %v1172 = vld [vmem:[#allocation22] sm:$0xff]
        %v1173 = vld [vmem:[#allocation22 + $0x8] sm:$0xff]
        %v1174 = vld [vmem:[%s23] sm:$0xff]
        %v1175 = vld [vmem:[%s23 + $0x8] sm:$0xff]
        %v1176 = vld [vmem:[%s2] sm:$0xff]
        %v1177 = vld [vmem:[%s2 + $0x8] sm:$0xff]
        %v1178 = vld [vmem:[%s2 + $0x10] sm:$0xff]
        %v1179 = vld [vmem:[%s2 + $0x18] sm:$0xff]
        %v1180 = vld [vmem:[%s2 + $0x20] sm:$0xff]
        %v1181 = vld [vmem:[%s2 + $0x28] sm:$0xff]
        %v1182 = vld [vmem:[%s3] sm:$0xff]
        %v1183 = vld [vmem:[%s3 + $0x8] sm:$0xff]
        %v1184 = vld [vmem:[%s3 + $0x10] sm:$0xff]
        %v1185 = vld [vmem:[%s3 + $0x18] sm:$0xff]
        %v1186 = vld [vmem:[%s3 + $0x20] sm:$0xff]
        %v1187 = vld [vmem:[%s3 + $0x28] sm:$0xff]
        %v1188 = vld [vmem:[%s4] sm:$0xff]
        %v1189 = vld [vmem:[%s4 + $0x8] sm:$0xff]
        %v1190 = vld [vmem:[%s4 + $0x10] sm:$0xff]
        %v1191 = vld [vmem:[%s4 + $0x18] sm:$0xff]
        %v1192 = vld [vmem:[%s4 + $0x20] sm:$0xff]
        %v1193 = vld [vmem:[%s4 + $0x28] sm:$0xff]
        %v1194 = vld [vmem:[%s5] sm:$0xff]
        %v1195 = vld [vmem:[%s5 + $0x8] sm:$0xff]
        %vm1196 = vcmask 23552
        %v1197 = vsel %vm1196, %v1174, 0.0
        %v1198 = vsel %vm1196, %v1175, 0.0
        %v1199 = vadd.f32 %v1197, %v1198
        %v1200 = vrot.slane %v1199, 4
        %v1201 = vadd.f32 %v1199, %v1200
        %v1202 = vrot.slane %v1201, 2
        %v1203 = vadd.f32 %v1201, %v1202
        %v1204 = vrot.slane %v1203, 1
        %v1205 = vadd.f32 %v1203, %v1204
        %v1206 = vrcp.pop 16.0
        %v1207 = vmul.f32 %v1205, %v1206
        %v1208 = vsub.f32 %v1174, %v1207
        %v1209 = vsub.f32 %v1175, %v1207
        %v1210 = vmul.f32 %v1208, %v1208
        %v1211 = vmul.f32 %v1209, %v1209
        %v1212 = vsel %vm1196, %v1210, 0.0
        %v1213 = vsel %vm1196, %v1211, 0.0
        %v1214 = vadd.f32 %v1212, %v1213
        %v1215 = vrot.slane %v1214, 4
        %v1216 = vadd.f32 %v1214, %v1215
        %v1217 = vrot.slane %v1216, 2
        %v1218 = vadd.f32 %v1216, %v1217
        %v1219 = vrot.slane %v1218, 1
        %v1220 = vadd.f32 %v1218, %v1219
        %v1221 = vrcp.pop 15.0
        %v1222 = vmul.f32 %v1220, %v1221
        %v1223 = vrsqrt.pop %v1222
        %v1224 = vmul.f32 %v1222, %v1223
        %vm1225 = vcmp.eq.f32.partialorder %v1222, inf
        %v1226 = vsel %vm1225, %v1222, %v1224
        %vm1227 = vcmp.eq.f32.partialorder %v1222, 0.0
        %v1228 = vand.u32 %v1222, 2147483648
        %v1229 = vsel %vm1227, %v1228, %v1226
        %v1230 = vmax.f32 %v1229, 1e-08
        %v1231 = vrcp.pop %v1230
        %v1232 = vmul.f32 %v1208, %v1231
        %v1233 = vmul.f32 %v1209, %v1231
        %v1234 = vld [vmem:[%s1148] sm:$0xff]
        %v1235 = vld [vmem:[%s1148 + $0x8] sm:$0xff]
        %v1236 = vld [vmem:[%s1148 + $0x10] sm:$0xff]
        %v1237 = vld [vmem:[%s1148 + $0x18] sm:$0xff]
        %vm1238 = vcmask 261120
        %v1240 = vsel %vm1238, %v1172, 0
        %v1243 = vsel %vm1238, %v1173, 0
        %1245 = vmatprep.subr.mxu0 0.0
        %1246 = vmatpush1.msra.mxu0 %v1234
        %1247 = vmatprep.subr.mxu0 0.0
        %1248 = vmatpush1.msra.mxu0 %v1235
        %1249 = vmatprep.subr.mxu0 0.0
        %1250 = vmatpush1.msra.mxu0 %v1236
        %1251 = vmatprep.subr.mxu0 0.0
        %1252 = vmatpush1.msra.mxu0 %v1237
        %1253 = vmatprep.subr.mxu0 0.0
        %1254 = vmatpush1.msra.mxu0 0.0
        %1255 = vmatprep.subr.mxu0 0.0
        %1256 = vmatpush1.msra.mxu0 0.0
        %1257 = vmatprep.subr.mxu0 0.0
        %1258 = vmatpush1.msra.mxu0 0.0
        %1259 = vmatprep.subr.mxu0 0.0
        %1260 = vmatpush1.msra.mxu0 0.0
        %1261 = vmatprep.subr.mxu0 0.0
        %1262 = vmatpush1.msra.mxu0 0.0
        %1263 = vmatprep.subr.mxu0 0.0
        %1264 = vmatpush1.msra.mxu0 0.0
        %1265 = vmatprep.subr.mxu0 0.0
        %1266 = vmatpush1.msra.mxu0 0.0
        %1267 = vmatprep.subr.mxu0 0.0
        %1268 = vmatpush1.msra.mxu0 0.0
        %1269 = vmatprep.subr.mxu0 0.0
        %1270 = vmatpush1.msra.mxu0 0.0
        %1271 = vmatprep.subr.mxu0 0.0
        %1272 = vmatpush1.msra.mxu0 0.0
        %1273 = vmatprep.subr.mxu0 0.0
        %1274 = vmatpush1.msra.mxu0 0.0
        %1275 = vmatprep.subr.mxu0 0.0
        %1276 = vmatpush1.msra.mxu0 0.0
        %1277 = vmatprep.subr.mxu0 0.0
        %1278 = vmatpush1.msra.mxu0 0.0
        %1279 = vmatprep.subr.mxu0 0.0
        %1280 = vmatpush1.msra.mxu0 0.0
        %1281 = vmatprep.subr.mxu0 0.0
        %1282 = vmatpush1.msra.mxu0 0.0
        %1283 = vmatprep.subr.mxu0 0.0
        %1284 = vmatpush1.msra.mxu0 0.0
        %1285 = vmatprep.subr.mxu0 0.0
        %1286 = vmatpush1.msra.mxu0 0.0
        %1287 = vmatprep.subr.mxu0 0.0
        %1288 = vmatpush1.msra.mxu0 0.0
        %1289 = vmatprep.subr.mxu0 0.0
        %1290 = vmatpush1.msra.mxu0 0.0
        %1291 = vmatprep.subr.mxu0 0.0
        %1292 = vmatpush1.msra.mxu0 0.0
        %1293 = vmatprep.subr.mxu0 0.0
        %1294 = vmatpush1.msra.mxu0 0.0
        %1295 = vmatprep.subr.mxu0 0.0
        %1296 = vmatpush1.msra.mxu0 0.0
        %1297 = vmatprep.subr.mxu0 0.0
        %1298 = vmatpush1.msra.mxu0 0.0
        %1299 = vmatprep.subr.mxu0 0.0
        %1300 = vmatpush1.msra.mxu0 0.0
        %1301 = vmatprep.subr.mxu0 0.0
        %1302 = vmatpush1.msra.mxu0 0.0
        %1303 = vmatprep.subr.mxu0 0.0
        %1304 = vmatpush1.msra.mxu0 0.0
        %1305 = vmatprep.subr.mxu0 0.0
        %1306 = vmatpush1.msra.mxu0 0.0
        %1307 = vmatprep.subr.mxu0 0.0
        %1308 = vmatpush1.msra.mxu0 0.0
        %1309 = vmatprep.mubr.f32.mxu0 0.0
        %1310 = vmatmul.mubr.f32.gmra.mrb[0].mxu0 %v1240
        %v1311 = vpop.f32.mrb[0].mxu0
        %v1312 = vadd.f32 0.0, %v1311
        %v1313 = vpop.f32.mrb[0].mxu0
        %1314 = vmatprep.mubr.f32.mxu0 0.0
        %1315 = vmatmul.mubr.f32.gmra.mrb[0].mxu0 %v1243
        %v1316 = vpop.f32.mrb[0].mxu0
        %v1317 = vadd.f32 0.0, %v1316
        %v1318 = vpop.f32.mrb[0].mxu0
        %1319 = vdwg.mxu0
        %v1320 = vld [vmem:[%s967] sm:$0xff]
        %v1321 = vld [vmem:[%s967 + $0x8] sm:$0xff]
        %v1322 = vld [vmem:[%s967 + $0x10] sm:$0xff]
        %v1323 = vld [vmem:[%s967 + $0x18] sm:$0xff]
        %1324 = vmatprep.subr.mxu0 0.0
        %1325 = vmatpush1.msra.mxu0 %v1320
        %1326 = vmatprep.subr.mxu0 0.0
        %1327 = vmatpush1.msra.mxu0 %v1321
        %1328 = vmatprep.subr.mxu0 0.0
        %1329 = vmatpush1.msra.mxu0 %v1322
        %1330 = vmatprep.subr.mxu0 0.0
        %1331 = vmatpush1.msra.mxu0 %v1323
        %1332 = vmatprep.subr.mxu0 0.0
        %1333 = vmatpush1.msra.mxu0 0.0
        %1334 = vmatprep.subr.mxu0 0.0
        %1335 = vmatpush1.msra.mxu0 0.0
        %1336 = vmatprep.subr.mxu0 0.0
        %1337 = vmatpush1.msra.mxu0 0.0
        %1338 = vmatprep.subr.mxu0 0.0
        %1339 = vmatpush1.msra.mxu0 0.0
        %1340 = vmatprep.subr.mxu0 0.0
        %1341 = vmatpush1.msra.mxu0 0.0
        %1342 = vmatprep.subr.mxu0 0.0
        %1343 = vmatpush1.msra.mxu0 0.0
        %1344 = vmatprep.subr.mxu0 0.0
        %1345 = vmatpush1.msra.mxu0 0.0
        %1346 = vmatprep.subr.mxu0 0.0
        %1347 = vmatpush1.msra.mxu0 0.0
        %1348 = vmatprep.subr.mxu0 0.0
        %1349 = vmatpush1.msra.mxu0 0.0
        %1350 = vmatprep.subr.mxu0 0.0
        %1351 = vmatpush1.msra.mxu0 0.0
        %1352 = vmatprep.subr.mxu0 0.0
        %1353 = vmatpush1.msra.mxu0 0.0
        %1354 = vmatprep.subr.mxu0 0.0
        %1355 = vmatpush1.msra.mxu0 0.0
        %1356 = vmatprep.subr.mxu0 0.0
        %1357 = vmatpush1.msra.mxu0 0.0
        %1358 = vmatprep.subr.mxu0 0.0
        %1359 = vmatpush1.msra.mxu0 0.0
        %1360 = vmatprep.subr.mxu0 0.0
        %1361 = vmatpush1.msra.mxu0 0.0
        %1362 = vmatprep.subr.mxu0 0.0
        %1363 = vmatpush1.msra.mxu0 0.0
        %1364 = vmatprep.subr.mxu0 0.0
        %1365 = vmatpush1.msra.mxu0 0.0
        %1366 = vmatprep.subr.mxu0 0.0
        %1367 = vmatpush1.msra.mxu0 0.0
        %1368 = vmatprep.subr.mxu0 0.0
        %1369 = vmatpush1.msra.mxu0 0.0
        %1370 = vmatprep.subr.mxu0 0.0
        %1371 = vmatpush1.msra.mxu0 0.0
        %1372 = vmatprep.subr.mxu0 0.0
        %1373 = vmatpush1.msra.mxu0 0.0
        %1374 = vmatprep.subr.mxu0 0.0
        %1375 = vmatpush1.msra.mxu0 0.0
        %1376 = vmatprep.subr.mxu0 0.0
        %1377 = vmatpush1.msra.mxu0 0.0
        %1378 = vmatprep.subr.mxu0 0.0
        %1379 = vmatpush1.msra.mxu0 0.0
        %1380 = vmatprep.subr.mxu0 0.0
        %1381 = vmatpush1.msra.mxu0 0.0
        %1382 = vmatprep.subr.mxu0 0.0
        %1383 = vmatpush1.msra.mxu0 0.0
        %1384 = vmatprep.subr.mxu0 0.0
        %1385 = vmatpush1.msra.mxu0 0.0
        %1386 = vmatprep.subr.mxu0 0.0
        %1387 = vmatpush1.msra.mxu0 0.0
        %1388 = vmatprep.mubr.f32.mxu0 0.0
        %1389 = vmatmul.mubr.f32.gmra.mrb[0].mxu0 %v1240
        %v1390 = vpop.f32.mrb[0].mxu0
        %v1391 = vadd.f32 0.0, %v1390
        %v1392 = vpop.f32.mrb[0].mxu0
        %1393 = vmatprep.mubr.f32.mxu0 0.0
        %1394 = vmatmul.mubr.f32.gmra.mrb[0].mxu0 %v1243
        %v1395 = vpop.f32.mrb[0].mxu0
        %v1396 = vadd.f32 0.0, %v1395
        %v1397 = vpop.f32.mrb[0].mxu0
        %1398 = vdwg.mxu0
        %vm1399 = vcmask 130048
        %v1401 = vsel %vm1399, %v1182, 0
        %v1404 = vsel %vm1399, %v1183, 0
        %v1407 = vsel %vm1399, %v1184, 0
        %v1410 = vsel %vm1399, %v1185, 0
        %v1413 = vsel %vm1399, %v1186, 0
        %v1416 = vsel %vm1399, %v1187, 0
        %1418 = vmatprep.subr.mxu0 0.0
        %1419 = vmatpush1.msra.mxu0 %v1391
        %1420 = vmatprep.subr.mxu0 0.0
        %1421 = vmatpush1.msra.mxu0 %v1396
        %1422 = vmatprep.subr.mxu0 0.0
        %1423 = vmatpush1.msra.mxu0 0.0
        %1424 = vmatprep.subr.mxu0 0.0
        %1425 = vmatpush1.msra.mxu0 0.0
        %1426 = vmatprep.subr.mxu0 0.0
        %1427 = vmatpush1.msra.mxu0 0.0
        %1428 = vmatprep.subr.mxu0 0.0
        %1429 = vmatpush1.msra.mxu0 0.0
        %1430 = vmatprep.subr.mxu0 0.0
        %1431 = vmatpush1.msra.mxu0 0.0
        %1432 = vmatprep.subr.mxu0 0.0
        %1433 = vmatpush1.msra.mxu0 0.0
        %1434 = vmatprep.subr.mxu0 0.0
        %1435 = vmatpush1.msra.mxu0 0.0
        %1436 = vmatprep.subr.mxu0 0.0
        %1437 = vmatpush1.msra.mxu0 0.0
        %1438 = vmatprep.subr.mxu0 0.0
        %1439 = vmatpush1.msra.mxu0 0.0
        %1440 = vmatprep.subr.mxu0 0.0
        %1441 = vmatpush1.msra.mxu0 0.0
        %1442 = vmatprep.subr.mxu0 0.0
        %1443 = vmatpush1.msra.mxu0 0.0
        %1444 = vmatprep.subr.mxu0 0.0
        %1445 = vmatpush1.msra.mxu0 0.0
        %1446 = vmatprep.subr.mxu0 0.0
        %1447 = vmatpush1.msra.mxu0 0.0
        %1448 = vmatprep.subr.mxu0 0.0
        %1449 = vmatpush1.msra.mxu0 0.0
        %1450 = vmatprep.subr.mxu0 0.0
        %1451 = vmatpush1.msra.mxu0 0.0
        %1452 = vmatprep.subr.mxu0 0.0
        %1453 = vmatpush1.msra.mxu0 0.0
        %1454 = vmatprep.subr.mxu0 0.0
        %1455 = vmatpush1.msra.mxu0 0.0
        %1456 = vmatprep.subr.mxu0 0.0
        %1457 = vmatpush1.msra.mxu0 0.0
        %1458 = vmatprep.subr.mxu0 0.0
        %1459 = vmatpush1.msra.mxu0 0.0
        %1460 = vmatprep.subr.mxu0 0.0
        %1461 = vmatpush1.msra.mxu0 0.0
        %1462 = vmatprep.subr.mxu0 0.0
        %1463 = vmatpush1.msra.mxu0 0.0
        %1464 = vmatprep.subr.mxu0 0.0
        %1465 = vmatpush1.msra.mxu0 0.0
        %1466 = vmatprep.subr.mxu0 0.0
        %1467 = vmatpush1.msra.mxu0 0.0
        %1468 = vmatprep.subr.mxu0 0.0
        %1469 = vmatpush1.msra.mxu0 0.0
        %1470 = vmatprep.subr.mxu0 0.0
        %1471 = vmatpush1.msra.mxu0 0.0
        %1472 = vmatprep.subr.mxu0 0.0
        %1473 = vmatpush1.msra.mxu0 0.0
        %1474 = vmatprep.subr.mxu0 0.0
        %1475 = vmatpush1.msra.mxu0 0.0
        %1476 = vmatprep.subr.mxu0 0.0
        %1477 = vmatpush1.msra.mxu0 0.0
        %1478 = vmatprep.subr.mxu0 0.0
        %1479 = vmatpush1.msra.mxu0 0.0
        %1480 = vmatprep.subr.mxu0 0.0
        %1481 = vmatpush1.msra.mxu0 0.0
        %1482 = vmatprep.mubr.f32.mxu0 0.0
        %1483 = vmatmul.mubr.f32.gmra.mrb[0].mxu0 %v1401
        %v1484 = vpop.f32.mrb[0].mxu0
        %v1485 = vadd.f32 0.0, %v1484
        %v1486 = vpop.f32.mrb[0].mxu0
        %1487 = vmatprep.mubr.f32.mxu0 0.0
        %1488 = vmatmul.mubr.f32.gmra.mrb[0].mxu0 %v1404
        %v1489 = vpop.f32.mrb[0].mxu0
        %v1490 = vadd.f32 0.0, %v1489
        %v1491 = vpop.f32.mrb[0].mxu0
        %1492 = vmatprep.mubr.f32.mxu0 0.0
        %1493 = vmatmul.mubr.f32.gmra.mrb[0].mxu0 %v1407
        %v1494 = vpop.f32.mrb[0].mxu0
        %v1495 = vadd.f32 0.0, %v1494
        %v1496 = vpop.f32.mrb[0].mxu0
        %1497 = vmatprep.mubr.f32.mxu0 0.0
        %1498 = vmatmul.mubr.f32.gmra.mrb[0].mxu0 %v1410
        %v1499 = vpop.f32.mrb[0].mxu0
        %v1500 = vadd.f32 0.0, %v1499
        %v1501 = vpop.f32.mrb[0].mxu0
        %1502 = vmatprep.mubr.f32.mxu0 0.0
        %1503 = vmatmul.mubr.f32.gmra.mrb[0].mxu0 %v1413
        %v1504 = vpop.f32.mrb[0].mxu0
        %v1505 = vadd.f32 0.0, %v1504
        %v1506 = vpop.f32.mrb[0].mxu0
        %1507 = vmatprep.mubr.f32.mxu0 0.0
        %1508 = vmatmul.mubr.f32.gmra.mrb[0].mxu0 %v1416
        %v1509 = vpop.f32.mrb[0].mxu0
        %v1510 = vadd.f32 0.0, %v1509
        %v1511 = vpop.f32.mrb[0].mxu0
        %1512 = vdwg.mxu0
        %v1514 = vsel %vm1399, %v1176, 0
        %v1517 = vsel %vm1399, %v1177, 0
        %v1520 = vsel %vm1399, %v1178, 0
        %v1523 = vsel %vm1399, %v1179, 0
        %v1526 = vsel %vm1399, %v1180, 0
        %v1529 = vsel %vm1399, %v1181, 0
        %1531 = vmatprep.subr.mxu0 0.0
        %1532 = vmatpush1.msra.mxu0 %v1232
        %1533 = vmatprep.subr.mxu0 0.0
        %1534 = vmatpush1.msra.mxu0 %v1233
        %1535 = vmatprep.subr.mxu0 0.0
        %1536 = vmatpush1.msra.mxu0 0.0
        %1537 = vmatprep.subr.mxu0 0.0
        %1538 = vmatpush1.msra.mxu0 0.0
        %1539 = vmatprep.subr.mxu0 0.0
        %1540 = vmatpush1.msra.mxu0 0.0
        %1541 = vmatprep.subr.mxu0 0.0
        %1542 = vmatpush1.msra.mxu0 0.0
        %1543 = vmatprep.subr.mxu0 0.0
        %1544 = vmatpush1.msra.mxu0 0.0
        %1545 = vmatprep.subr.mxu0 0.0
        %1546 = vmatpush1.msra.mxu0 0.0
        %1547 = vmatprep.subr.mxu0 0.0
        %1548 = vmatpush1.msra.mxu0 0.0
        %1549 = vmatprep.subr.mxu0 0.0
        %1550 = vmatpush1.msra.mxu0 0.0
        %1551 = vmatprep.subr.mxu0 0.0
        %1552 = vmatpush1.msra.mxu0 0.0
        %1553 = vmatprep.subr.mxu0 0.0
        %1554 = vmatpush1.msra.mxu0 0.0
        %1555 = vmatprep.subr.mxu0 0.0
        %1556 = vmatpush1.msra.mxu0 0.0
        %1557 = vmatprep.subr.mxu0 0.0
        %1558 = vmatpush1.msra.mxu0 0.0
        %1559 = vmatprep.subr.mxu0 0.0
        %1560 = vmatpush1.msra.mxu0 0.0
        %1561 = vmatprep.subr.mxu0 0.0
        %1562 = vmatpush1.msra.mxu0 0.0
        %1563 = vmatprep.subr.mxu0 0.0
        %1564 = vmatpush1.msra.mxu0 0.0
        %1565 = vmatprep.subr.mxu0 0.0
        %1566 = vmatpush1.msra.mxu0 0.0
        %1567 = vmatprep.subr.mxu0 0.0
        %1568 = vmatpush1.msra.mxu0 0.0
        %1569 = vmatprep.subr.mxu0 0.0
        %1570 = vmatpush1.msra.mxu0 0.0
        %1571 = vmatprep.subr.mxu0 0.0
        %1572 = vmatpush1.msra.mxu0 0.0
        %1573 = vmatprep.subr.mxu0 0.0
        %1574 = vmatpush1.msra.mxu0 0.0
        %1575 = vmatprep.subr.mxu0 0.0
        %1576 = vmatpush1.msra.mxu0 0.0
        %1577 = vmatprep.subr.mxu0 0.0
        %1578 = vmatpush1.msra.mxu0 0.0
        %1579 = vmatprep.subr.mxu0 0.0
        %1580 = vmatpush1.msra.mxu0 0.0
        %1581 = vmatprep.subr.mxu0 0.0
        %1582 = vmatpush1.msra.mxu0 0.0
        %1583 = vmatprep.subr.mxu0 0.0
        %1584 = vmatpush1.msra.mxu0 0.0
        %1585 = vmatprep.subr.mxu0 0.0
        %1586 = vmatpush1.msra.mxu0 0.0
        %1587 = vmatprep.subr.mxu0 0.0
        %1588 = vmatpush1.msra.mxu0 0.0
        %1589 = vmatprep.subr.mxu0 0.0
        %1590 = vmatpush1.msra.mxu0 0.0
        %1591 = vmatprep.subr.mxu0 0.0
        %1592 = vmatpush1.msra.mxu0 0.0
        %1593 = vmatprep.subr.mxu0 0.0
        %1594 = vmatpush1.msra.mxu0 0.0
        %1595 = vmatprep.mubr.f32.mxu0 0.0
        %1596 = vmatmul.mubr.f32.gmra.mrb[0].mxu0 %v1514
        %v1597 = vpop.f32.mrb[0].mxu0
        %v1598 = vadd.f32 0.0, %v1597
        %v1599 = vpop.f32.mrb[0].mxu0
        %1600 = vmatprep.mubr.f32.mxu0 0.0
        %1601 = vmatmul.mubr.f32.gmra.mrb[0].mxu0 %v1517
        %v1602 = vpop.f32.mrb[0].mxu0
        %v1603 = vadd.f32 0.0, %v1602
        %v1604 = vpop.f32.mrb[0].mxu0
        %1605 = vmatprep.mubr.f32.mxu0 0.0
        %1606 = vmatmul.mubr.f32.gmra.mrb[0].mxu0 %v1520
        %v1607 = vpop.f32.mrb[0].mxu0
        %v1608 = vadd.f32 0.0, %v1607
        %v1609 = vpop.f32.mrb[0].mxu0
        %1610 = vmatprep.mubr.f32.mxu0 0.0
        %1611 = vmatmul.mubr.f32.gmra.mrb[0].mxu0 %v1523
        %v1612 = vpop.f32.mrb[0].mxu0
        %v1613 = vadd.f32 0.0, %v1612
        %v1614 = vpop.f32.mrb[0].mxu0
        %1615 = vmatprep.mubr.f32.mxu0 0.0
        %1616 = vmatmul.mubr.f32.gmra.mrb[0].mxu0 %v1526
        %v1617 = vpop.f32.mrb[0].mxu0
        %v1618 = vadd.f32 0.0, %v1617
        %v1619 = vpop.f32.mrb[0].mxu0
        %1620 = vmatprep.mubr.f32.mxu0 0.0
        %1621 = vmatmul.mubr.f32.gmra.mrb[0].mxu0 %v1529
        %v1622 = vpop.f32.mrb[0].mxu0
        %v1623 = vadd.f32 0.0, %v1622
        %v1624 = vpop.f32.mrb[0].mxu0
        %1625 = vdwg.mxu0
        %1626 = vmatprep.subr.mxu0 0.0
        %1627 = vmatpush1.msra.mxu0 %v1232
        %1628 = vmatprep.subr.mxu0 0.0
        %1629 = vmatpush1.msra.mxu0 %v1233
        %1630 = vmatprep.subr.mxu0 0.0
        %1631 = vmatpush1.msra.mxu0 0.0
        %1632 = vmatprep.subr.mxu0 0.0
        %1633 = vmatpush1.msra.mxu0 0.0
        %1634 = vmatprep.subr.mxu0 0.0
        %1635 = vmatpush1.msra.mxu0 0.0
        %1636 = vmatprep.subr.mxu0 0.0
        %1637 = vmatpush1.msra.mxu0 0.0
        %1638 = vmatprep.subr.mxu0 0.0
        %1639 = vmatpush1.msra.mxu0 0.0
        %1640 = vmatprep.subr.mxu0 0.0
        %1641 = vmatpush1.msra.mxu0 0.0
        %1642 = vmatprep.subr.mxu0 0.0
        %1643 = vmatpush1.msra.mxu0 0.0
        %1644 = vmatprep.subr.mxu0 0.0
        %1645 = vmatpush1.msra.mxu0 0.0
        %1646 = vmatprep.subr.mxu0 0.0
        %1647 = vmatpush1.msra.mxu0 0.0
        %1648 = vmatprep.subr.mxu0 0.0
        %1649 = vmatpush1.msra.mxu0 0.0
        %1650 = vmatprep.subr.mxu0 0.0
        %1651 = vmatpush1.msra.mxu0 0.0
        %1652 = vmatprep.subr.mxu0 0.0
        %1653 = vmatpush1.msra.mxu0 0.0
        %1654 = vmatprep.subr.mxu0 0.0
        %1655 = vmatpush1.msra.mxu0 0.0
        %1656 = vmatprep.subr.mxu0 0.0
        %1657 = vmatpush1.msra.mxu0 0.0
        %1658 = vmatprep.subr.mxu0 0.0
        %1659 = vmatpush1.msra.mxu0 0.0
        %1660 = vmatprep.subr.mxu0 0.0
        %1661 = vmatpush1.msra.mxu0 0.0
        %1662 = vmatprep.subr.mxu0 0.0
        %1663 = vmatpush1.msra.mxu0 0.0
        %1664 = vmatprep.subr.mxu0 0.0
        %1665 = vmatpush1.msra.mxu0 0.0
        %1666 = vmatprep.subr.mxu0 0.0
        %1667 = vmatpush1.msra.mxu0 0.0
        %1668 = vmatprep.subr.mxu0 0.0
        %1669 = vmatpush1.msra.mxu0 0.0
        %1670 = vmatprep.subr.mxu0 0.0
        %1671 = vmatpush1.msra.mxu0 0.0
        %1672 = vmatprep.subr.mxu0 0.0
        %1673 = vmatpush1.msra.mxu0 0.0
        %1674 = vmatprep.subr.mxu0 0.0
        %1675 = vmatpush1.msra.mxu0 0.0
        %1676 = vmatprep.subr.mxu0 0.0
        %1677 = vmatpush1.msra.mxu0 0.0
        %1678 = vmatprep.subr.mxu0 0.0
        %1679 = vmatpush1.msra.mxu0 0.0
        %1680 = vmatprep.subr.mxu0 0.0
        %1681 = vmatpush1.msra.mxu0 0.0
        %1682 = vmatprep.subr.mxu0 0.0
        %1683 = vmatpush1.msra.mxu0 0.0
        %1684 = vmatprep.subr.mxu0 0.0
        %1685 = vmatpush1.msra.mxu0 0.0
        %1686 = vmatprep.subr.mxu0 0.0
        %1687 = vmatpush1.msra.mxu0 0.0
        %1688 = vmatprep.subr.mxu0 0.0
        %1689 = vmatpush1.msra.mxu0 0.0
        %1690 = vmatprep.mubr.f32.mxu0 0.0
        %1691 = vmatmul.mubr.f32.gmra.mrb[0].mxu0 %v1401
        %v1692 = vpop.f32.mrb[0].mxu0
        %v1693 = vadd.f32 0.0, %v1692
        %v1694 = vpop.f32.mrb[0].mxu0
        %1695 = vmatprep.mubr.f32.mxu0 0.0
        %1696 = vmatmul.mubr.f32.gmra.mrb[0].mxu0 %v1404
        %v1697 = vpop.f32.mrb[0].mxu0
        %v1698 = vadd.f32 0.0, %v1697
        %v1699 = vpop.f32.mrb[0].mxu0
        %1700 = vmatprep.mubr.f32.mxu0 0.0
        %1701 = vmatmul.mubr.f32.gmra.mrb[0].mxu0 %v1407
        %v1702 = vpop.f32.mrb[0].mxu0
        %v1703 = vadd.f32 0.0, %v1702
        %v1704 = vpop.f32.mrb[0].mxu0
        %1705 = vmatprep.mubr.f32.mxu0 0.0
        %1706 = vmatmul.mubr.f32.gmra.mrb[0].mxu0 %v1410
        %v1707 = vpop.f32.mrb[0].mxu0
        %v1708 = vadd.f32 0.0, %v1707
        %v1709 = vpop.f32.mrb[0].mxu0
        %1710 = vmatprep.mubr.f32.mxu0 0.0
        %1711 = vmatmul.mubr.f32.gmra.mrb[0].mxu0 %v1413
        %v1712 = vpop.f32.mrb[0].mxu0
        %v1713 = vadd.f32 0.0, %v1712
        %v1714 = vpop.f32.mrb[0].mxu0
        %1715 = vmatprep.mubr.f32.mxu0 0.0
        %1716 = vmatmul.mubr.f32.gmra.mrb[0].mxu0 %v1416
        %v1717 = vpop.f32.mrb[0].mxu0
        %v1718 = vadd.f32 0.0, %v1717
        %v1719 = vpop.f32.mrb[0].mxu0
        %1720 = vdwg.mxu0
        %v1721 = vsub.f32 %v1598, %v1693
        %v1722 = vsub.f32 %v1603, %v1698
        %v1723 = vsub.f32 %v1608, %v1703
        %v1724 = vsub.f32 %v1613, %v1708
        %v1725 = vsub.f32 %v1618, %v1713
        %v1726 = vsub.f32 %v1623, %v1718
        %v1727 = vmul.f32 %v1721, %v1721
        %v1728 = vmul.f32 %v1722, %v1722
        %v1729 = vmul.f32 %v1723, %v1723
        %v1730 = vmul.f32 %v1724, %v1724
        %v1731 = vmul.f32 %v1725, %v1725
        %v1732 = vmul.f32 %v1726, %v1726
        %v1733 = vsel %vm1196, %v1727, 0.0
        %1734 = vadd.xlane.f32.xlu0 %v1733
        %v1735 = vpop.xlane.xlu0 %1734
        %v1736 = vsel %vm1196, %v1728, 0.0
        %1737 = vadd.xlane.f32.xlu0 %v1736
        %v1738 = vpop.xlane.xlu0 %1737
        %v1739 = vsel %vm1196, %v1729, 0.0
        %1740 = vadd.xlane.f32.xlu0 %v1739
        %v1741 = vpop.xlane.xlu0 %1740
        %v1742 = vsel %vm1196, %v1730, 0.0
        %1743 = vadd.xlane.f32.xlu0 %v1742
        %v1744 = vpop.xlane.xlu0 %1743
        %v1745 = vsel %vm1196, %v1731, 0.0
        %1746 = vadd.xlane.f32.xlu0 %v1745
        %v1747 = vpop.xlane.xlu0 %1746
        %v1748 = vsel %vm1196, %v1732, 0.0
        %1749 = vadd.xlane.f32.xlu0 %v1748
        %v1750 = vpop.xlane.xlu0 %1749
        %v1751 = vrsqrt.pop %v1735
        %v1752 = vmul.f32 %v1735, %v1751
        %vm1753 = vcmp.eq.f32.partialorder %v1735, inf
        %v1754 = vsel %vm1753, %v1735, %v1752
        %vm1755 = vcmp.eq.f32.partialorder %v1735, 0.0
        %v1756 = vand.u32 %v1735, 2147483648
        %v1757 = vsel %vm1755, %v1756, %v1754
        %v1758 = vrsqrt.pop %v1738
        %v1759 = vmul.f32 %v1738, %v1758
        %vm1760 = vcmp.eq.f32.partialorder %v1738, inf
        %v1761 = vsel %vm1760, %v1738, %v1759
        %vm1762 = vcmp.eq.f32.partialorder %v1738, 0.0
        %v1763 = vand.u32 %v1738, 2147483648
        %v1764 = vsel %vm1762, %v1763, %v1761
        %v1765 = vrsqrt.pop %v1741
        %v1766 = vmul.f32 %v1741, %v1765
        %vm1767 = vcmp.eq.f32.partialorder %v1741, inf
        %v1768 = vsel %vm1767, %v1741, %v1766
        %vm1769 = vcmp.eq.f32.partialorder %v1741, 0.0
        %v1770 = vand.u32 %v1741, 2147483648
        %v1771 = vsel %vm1769, %v1770, %v1768
        %v1772 = vrsqrt.pop %v1744
        %v1773 = vmul.f32 %v1744, %v1772
        %vm1774 = vcmp.eq.f32.partialorder %v1744, inf
        %v1775 = vsel %vm1774, %v1744, %v1773
        %vm1776 = vcmp.eq.f32.partialorder %v1744, 0.0
        %v1777 = vand.u32 %v1744, 2147483648
        %v1778 = vsel %vm1776, %v1777, %v1775
        %v1779 = vrsqrt.pop %v1747
        %v1780 = vmul.f32 %v1747, %v1779
        %vm1781 = vcmp.eq.f32.partialorder %v1747, inf
        %v1782 = vsel %vm1781, %v1747, %v1780
        %vm1783 = vcmp.eq.f32.partialorder %v1747, 0.0
        %v1784 = vand.u32 %v1747, 2147483648
        %v1785 = vsel %vm1783, %v1784, %v1782
        %v1786 = vrsqrt.pop %v1750
        %v1787 = vmul.f32 %v1750, %v1786
        %vm1788 = vcmp.eq.f32.partialorder %v1750, inf
        %v1789 = vsel %vm1788, %v1750, %v1787
        %vm1790 = vcmp.eq.f32.partialorder %v1750, 0.0
        %v1791 = vand.u32 %v1750, 2147483648
        %v1792 = vsel %vm1790, %v1791, %v1789
        %v1793 = vld [vmem:[%s934] sm:$0xf]
        %v1794 = vld [vmem:[%s942] sm:$0x1]
        %v1796 = vlaneseq
        %v1797 = vshrl.u32 %v1796, 7
        %v1798 = vsub.s32 0, %v1797
        %v1799 = vrot.slane %v1794, %v1798
        %v1801 = vmul.f32 %v1757, %v1799
        %v1802 = vmul.f32 %v1764, %v1799
        %v1803 = vmul.f32 %v1771, %v1799
        %v1804 = vmul.f32 %v1778, %v1799
        %v1805 = vmul.f32 %v1785, %v1799
        %v1806 = vmul.f32 %v1792, %v1799
        %vm1807 = vcmask 31744
        %v1809 = vsel %vm1807, %v1188, 0
        %v1812 = vsel %vm1807, %v1189, 0
        %v1815 = vsel %vm1807, %v1190, 0
        %v1818 = vsel %vm1807, %v1191, 0
        %v1821 = vsel %vm1807, %v1192, 0
        %v1824 = vsel %vm1807, %v1193, 0
        %vm1826 = vcmask 1043456
        %v1828 = vsel %vm1826, %v1793, 0
        %1830 = vmatprep.subr.mxu0 0.0
        %1831 = vmatpush1.msra.mxu0 %v1828
        %1832 = vmatprep.subr.mxu0 0.0
        %1833 = vmatpush1.msra.mxu0 0.0
        %1834 = vmatprep.subr.mxu0 0.0
        %1835 = vmatpush1.msra.mxu0 0.0
        %1836 = vmatprep.subr.mxu0 0.0
        %1837 = vmatpush1.msra.mxu0 0.0
        %1838 = vmatprep.subr.mxu0 0.0
        %1839 = vmatpush1.msra.mxu0 0.0
        %1840 = vmatprep.subr.mxu0 0.0
        %1841 = vmatpush1.msra.mxu0 0.0
        %1842 = vmatprep.subr.mxu0 0.0
        %1843 = vmatpush1.msra.mxu0 0.0
        %1844 = vmatprep.subr.mxu0 0.0
        %1845 = vmatpush1.msra.mxu0 0.0
        %1846 = vmatprep.subr.mxu0 0.0
        %1847 = vmatpush1.msra.mxu0 0.0
        %1848 = vmatprep.subr.mxu0 0.0
        %1849 = vmatpush1.msra.mxu0 0.0
        %1850 = vmatprep.subr.mxu0 0.0
        %1851 = vmatpush1.msra.mxu0 0.0
        %1852 = vmatprep.subr.mxu0 0.0
        %1853 = vmatpush1.msra.mxu0 0.0
        %1854 = vmatprep.subr.mxu0 0.0
        %1855 = vmatpush1.msra.mxu0 0.0
        %1856 = vmatprep.subr.mxu0 0.0
        %1857 = vmatpush1.msra.mxu0 0.0
        %1858 = vmatprep.subr.mxu0 0.0
        %1859 = vmatpush1.msra.mxu0 0.0
        %1860 = vmatprep.subr.mxu0 0.0
        %1861 = vmatpush1.msra.mxu0 0.0
        %1862 = vmatprep.subr.mxu0 0.0
        %1863 = vmatpush1.msra.mxu0 0.0
        %1864 = vmatprep.subr.mxu0 0.0
        %1865 = vmatpush1.msra.mxu0 0.0
        %1866 = vmatprep.subr.mxu0 0.0
        %1867 = vmatpush1.msra.mxu0 0.0
        %1868 = vmatprep.subr.mxu0 0.0
        %1869 = vmatpush1.msra.mxu0 0.0
        %1870 = vmatprep.subr.mxu0 0.0
        %1871 = vmatpush1.msra.mxu0 0.0
        %1872 = vmatprep.subr.mxu0 0.0
        %1873 = vmatpush1.msra.mxu0 0.0
        %1874 = vmatprep.subr.mxu0 0.0
        %1875 = vmatpush1.msra.mxu0 0.0
        %1876 = vmatprep.subr.mxu0 0.0
        %1877 = vmatpush1.msra.mxu0 0.0
        %1878 = vmatprep.subr.mxu0 0.0
        %1879 = vmatpush1.msra.mxu0 0.0
        %1880 = vmatprep.subr.mxu0 0.0
        %1881 = vmatpush1.msra.mxu0 0.0
        %1882 = vmatprep.subr.mxu0 0.0
        %1883 = vmatpush1.msra.mxu0 0.0
        %1884 = vmatprep.subr.mxu0 0.0
        %1885 = vmatpush1.msra.mxu0 0.0
        %1886 = vmatprep.subr.mxu0 0.0
        %1887 = vmatpush1.msra.mxu0 0.0
        %1888 = vmatprep.subr.mxu0 0.0
        %1889 = vmatpush1.msra.mxu0 0.0
        %1890 = vmatprep.subr.mxu0 0.0
        %1891 = vmatpush1.msra.mxu0 0.0
        %1892 = vmatprep.subr.mxu0 0.0
        %1893 = vmatpush1.msra.mxu0 0.0
        %1894 = vmatprep.mubr.f32.mxu0 0.0
        %1895 = vmatmul.mubr.f32.gmra.mrb[0].mxu0 %v1809
        %v1896 = vpop.f32.mrb[0].mxu0
        %v1897 = vadd.f32 %v1801, %v1896
        %v1898 = vpop.f32.mrb[0].mxu0
        %1899 = vmatprep.mubr.f32.mxu0 0.0
        %1900 = vmatmul.mubr.f32.gmra.mrb[0].mxu0 %v1812
        %v1901 = vpop.f32.mrb[0].mxu0
        %v1902 = vadd.f32 %v1802, %v1901
        %v1903 = vpop.f32.mrb[0].mxu0
        %1904 = vmatprep.mubr.f32.mxu0 0.0
        %1905 = vmatmul.mubr.f32.gmra.mrb[0].mxu0 %v1815
        %v1906 = vpop.f32.mrb[0].mxu0
        %v1907 = vadd.f32 %v1803, %v1906
        %v1908 = vpop.f32.mrb[0].mxu0
        %1909 = vmatprep.mubr.f32.mxu0 0.0
        %1910 = vmatmul.mubr.f32.gmra.mrb[0].mxu0 %v1818
        %v1911 = vpop.f32.mrb[0].mxu0
        %v1912 = vadd.f32 %v1804, %v1911
        %v1913 = vpop.f32.mrb[0].mxu0
        %1914 = vmatprep.mubr.f32.mxu0 0.0
        %1915 = vmatmul.mubr.f32.gmra.mrb[0].mxu0 %v1821
        %v1916 = vpop.f32.mrb[0].mxu0
        %v1917 = vadd.f32 %v1805, %v1916
        %v1918 = vpop.f32.mrb[0].mxu0
        %1919 = vmatprep.mubr.f32.mxu0 0.0
        %1920 = vmatmul.mubr.f32.gmra.mrb[0].mxu0 %v1824
        %v1921 = vpop.f32.mrb[0].mxu0
        %v1922 = vadd.f32 %v1806, %v1921
        %v1923 = vpop.f32.mrb[0].mxu0
        %1924 = vdwg.mxu0
        %v1925 = vld [vmem:[%s950] sm:$0x1]
        %v1927 = vlaneseq
        %v1928 = vshrl.u32 %v1927, 7
        %v1929 = vsub.s32 0, %v1928
        %v1930 = vrot.slane %v1925, %v1929
        %v1932 = vadd.f32 %v1897, %v1930
        %v1933 = vadd.f32 %v1902, %v1930
        %v1934 = vadd.f32 %v1907, %v1930
        %v1935 = vadd.f32 %v1912, %v1930
        %v1936 = vadd.f32 %v1917, %v1930
        %v1937 = vadd.f32 %v1922, %v1930
        %v1938 = vxor.u32 %v1932, 2147483648
        %v1939 = vxor.u32 %v1933, 2147483648
        %v1940 = vxor.u32 %v1934, 2147483648
        %v1941 = vxor.u32 %v1935, 2147483648
        %v1942 = vxor.u32 %v1936, 2147483648
        %v1943 = vxor.u32 %v1937, 2147483648
        %v1944 = vmul.f32 %v1938, 1.442695
        %v1945 = vpow.pop %v1944
        %v1946 = vmul.f32 %v1939, 1.442695
        %v1947 = vpow.pop %v1946
        %v1948 = vmul.f32 %v1940, 1.442695
        %v1949 = vpow.pop %v1948
        %v1950 = vmul.f32 %v1941, 1.442695
        %v1951 = vpow.pop %v1950
        %v1952 = vmul.f32 %v1942, 1.442695
        %v1953 = vpow.pop %v1952
        %v1954 = vmul.f32 %v1943, 1.442695
        %v1955 = vpow.pop %v1954
        %v1956 = vadd.f32 %v1945, 1.0
        %v1957 = vadd.f32 %v1947, 1.0
        %v1958 = vadd.f32 %v1949, 1.0
        %v1959 = vadd.f32 %v1951, 1.0
        %v1960 = vadd.f32 %v1953, 1.0
        %v1961 = vadd.f32 %v1955, 1.0
        %v1962 = vrcp.pop %v1956
        %v1963 = vmul.f32 1.0, %v1962
        %v1964 = vrcp.pop %v1957
        %v1965 = vmul.f32 1.0, %v1964
        %v1966 = vrcp.pop %v1958
        %v1967 = vmul.f32 1.0, %v1966
        %v1968 = vrcp.pop %v1959
        %v1969 = vmul.f32 1.0, %v1968
        %v1970 = vrcp.pop %v1960
        %v1971 = vmul.f32 1.0, %v1970
        %v1972 = vrcp.pop %v1961
        %v1973 = vmul.f32 1.0, %v1972
        %v1974 = vmul.f32 %v1932, %v1963
        %v1975 = vmul.f32 %v1933, %v1965
        %v1976 = vmul.f32 %v1934, %v1967
        %v1977 = vmul.f32 %v1935, %v1969
        %v1978 = vmul.f32 %v1936, %v1971
        %v1979 = vmul.f32 %v1937, %v1973
        %v1980 = vld [vmem:[%s1143] sm:$0xff]
        %v1981 = vld [vmem:[%s1143 + $0x8] sm:$0xff]
        %v1982 = vld [vmem:[%s1143 + $0x10] sm:$0xff]
        %v1983 = vld [vmem:[%s1143 + $0x18] sm:$0xff]
        %v1984 = vld [vmem:[%s958] sm:$0x1]
        %v1986 = vlaneseq
        %v1987 = vshrl.u32 %v1986, 7
        %v1988 = vsub.s32 0, %v1987
        %v1989 = vrot.slane %v1984, %v1988
        %v1992 = vsel %vm1238, %v1974, 0
        %v1995 = vsel %vm1238, %v1975, 0
        %v1998 = vsel %vm1238, %v1976, 0
        %v2001 = vsel %vm1238, %v1977, 0
        %v2004 = vsel %vm1238, %v1978, 0
        %v2007 = vsel %vm1238, %v1979, 0
        %2009 = vmatprep.subr.mxu0 0.0
        %2010 = vmatpush1.msra.mxu0 %v1980
        %2011 = vmatprep.subr.mxu0 0.0
        %2012 = vmatpush1.msra.mxu0 %v1981
        %2013 = vmatprep.subr.mxu0 0.0
        %2014 = vmatpush1.msra.mxu0 %v1982
        %2015 = vmatprep.subr.mxu0 0.0
        %2016 = vmatpush1.msra.mxu0 %v1983
        %2017 = vmatprep.subr.mxu0 0.0
        %2018 = vmatpush1.msra.mxu0 0.0
        %2019 = vmatprep.subr.mxu0 0.0
        %2020 = vmatpush1.msra.mxu0 0.0
        %2021 = vmatprep.subr.mxu0 0.0
        %2022 = vmatpush1.msra.mxu0 0.0
        %2023 = vmatprep.subr.mxu0 0.0
        %2024 = vmatpush1.msra.mxu0 0.0
        %2025 = vmatprep.subr.mxu0 0.0
        %2026 = vmatpush1.msra.mxu0 0.0
        %2027 = vmatprep.subr.mxu0 0.0
        %2028 = vmatpush1.msra.mxu0 0.0
        %2029 = vmatprep.subr.mxu0 0.0
        %2030 = vmatpush1.msra.mxu0 0.0
        %2031 = vmatprep.subr.mxu0 0.0
        %2032 = vmatpush1.msra.mxu0 0.0
        %2033 = vmatprep.subr.mxu0 0.0
        %2034 = vmatpush1.msra.mxu0 0.0
        %2035 = vmatprep.subr.mxu0 0.0
        %2036 = vmatpush1.msra.mxu0 0.0
        %2037 = vmatprep.subr.mxu0 0.0
        %2038 = vmatpush1.msra.mxu0 0.0
        %2039 = vmatprep.subr.mxu0 0.0
        %2040 = vmatpush1.msra.mxu0 0.0
        %2041 = vmatprep.subr.mxu0 0.0
        %2042 = vmatpush1.msra.mxu0 0.0
        %2043 = vmatprep.subr.mxu0 0.0
        %2044 = vmatpush1.msra.mxu0 0.0
        %2045 = vmatprep.subr.mxu0 0.0
        %2046 = vmatpush1.msra.mxu0 0.0
        %2047 = vmatprep.subr.mxu0 0.0
        %2048 = vmatpush1.msra.mxu0 0.0
        %2049 = vmatprep.subr.mxu0 0.0
        %2050 = vmatpush1.msra.mxu0 0.0
        %2051 = vmatprep.subr.mxu0 0.0
        %2052 = vmatpush1.msra.mxu0 0.0
        %2053 = vmatprep.subr.mxu0 0.0
        %2054 = vmatpush1.msra.mxu0 0.0
        %2055 = vmatprep.subr.mxu0 0.0
        %2056 = vmatpush1.msra.mxu0 0.0
        %2057 = vmatprep.subr.mxu0 0.0
        %2058 = vmatpush1.msra.mxu0 0.0
        %2059 = vmatprep.subr.mxu0 0.0
        %2060 = vmatpush1.msra.mxu0 0.0
        %2061 = vmatprep.subr.mxu0 0.0
        %2062 = vmatpush1.msra.mxu0 0.0
        %2063 = vmatprep.subr.mxu0 0.0
        %2064 = vmatpush1.msra.mxu0 0.0
        %2065 = vmatprep.subr.mxu0 0.0
        %2066 = vmatpush1.msra.mxu0 0.0
        %2067 = vmatprep.subr.mxu0 0.0
        %2068 = vmatpush1.msra.mxu0 0.0
        %2069 = vmatprep.subr.mxu0 0.0
        %2070 = vmatpush1.msra.mxu0 0.0
        %2071 = vmatprep.subr.mxu0 0.0
        %2072 = vmatpush1.msra.mxu0 0.0
        %2073 = vmatprep.mubr.f32.mxu0 0.0
        %2074 = vmatmul.mubr.f32.gmra.mrb[0].mxu0 %v1992
        %v2075 = vpop.f32.mrb[0].mxu0
        %v2076 = vadd.f32 %v1989, %v2075
        %v2077 = vpop.f32.mrb[0].mxu0
        %2078 = vmatprep.mubr.f32.mxu0 0.0
        %2079 = vmatmul.mubr.f32.gmra.mrb[0].mxu0 %v1995
        %v2080 = vpop.f32.mrb[0].mxu0
        %v2081 = vadd.f32 %v1989, %v2080
        %v2082 = vpop.f32.mrb[0].mxu0
        %2083 = vmatprep.mubr.f32.mxu0 0.0
        %2084 = vmatmul.mubr.f32.gmra.mrb[0].mxu0 %v1998
        %v2085 = vpop.f32.mrb[0].mxu0
        %v2086 = vadd.f32 %v1989, %v2085
        %v2087 = vpop.f32.mrb[0].mxu0
        %2088 = vmatprep.mubr.f32.mxu0 0.0
        %2089 = vmatmul.mubr.f32.gmra.mrb[0].mxu0 %v2001
        %v2090 = vpop.f32.mrb[0].mxu0
        %v2091 = vadd.f32 %v1989, %v2090
        %v2092 = vpop.f32.mrb[0].mxu0
        %2093 = vmatprep.mubr.f32.mxu0 0.0
        %2094 = vmatmul.mubr.f32.gmra.mrb[0].mxu0 %v2004
        %v2095 = vpop.f32.mrb[0].mxu0
        %v2096 = vadd.f32 %v1989, %v2095
        %v2097 = vpop.f32.mrb[0].mxu0
        %2098 = vmatprep.mubr.f32.mxu0 0.0
        %2099 = vmatmul.mubr.f32.gmra.mrb[0].mxu0 %v2007
        %v2100 = vpop.f32.mrb[0].mxu0
        %v2101 = vadd.f32 %v1989, %v2100
        %v2102 = vpop.f32.mrb[0].mxu0
        %2103 = vdwg.mxu0
        %2104 = vmatprep.subr.mxu0 0.0
        %2105 = vmatpush1.msra.mxu0 %v1312
        %2106 = vmatprep.subr.mxu0 0.0
        %2107 = vmatpush1.msra.mxu0 %v1317
        %2108 = vmatprep.subr.mxu0 0.0
        %2109 = vmatpush1.msra.mxu0 0.0
        %2110 = vmatprep.subr.mxu0 0.0
        %2111 = vmatpush1.msra.mxu0 0.0
        %2112 = vmatprep.subr.mxu0 0.0
        %2113 = vmatpush1.msra.mxu0 0.0
        %2114 = vmatprep.subr.mxu0 0.0
        %2115 = vmatpush1.msra.mxu0 0.0
        %2116 = vmatprep.subr.mxu0 0.0
        %2117 = vmatpush1.msra.mxu0 0.0
        %2118 = vmatprep.subr.mxu0 0.0
        %2119 = vmatpush1.msra.mxu0 0.0
        %2120 = vmatprep.subr.mxu0 0.0
        %2121 = vmatpush1.msra.mxu0 0.0
        %2122 = vmatprep.subr.mxu0 0.0
        %2123 = vmatpush1.msra.mxu0 0.0
        %2124 = vmatprep.subr.mxu0 0.0
        %2125 = vmatpush1.msra.mxu0 0.0
        %2126 = vmatprep.subr.mxu0 0.0
        %2127 = vmatpush1.msra.mxu0 0.0
        %2128 = vmatprep.subr.mxu0 0.0
        %2129 = vmatpush1.msra.mxu0 0.0
        %2130 = vmatprep.subr.mxu0 0.0
        %2131 = vmatpush1.msra.mxu0 0.0
        %2132 = vmatprep.subr.mxu0 0.0
        %2133 = vmatpush1.msra.mxu0 0.0
        %2134 = vmatprep.subr.mxu0 0.0
        %2135 = vmatpush1.msra.mxu0 0.0
        %2136 = vmatprep.subr.mxu0 0.0
        %2137 = vmatpush1.msra.mxu0 0.0
        %2138 = vmatprep.subr.mxu0 0.0
        %2139 = vmatpush1.msra.mxu0 0.0
        %2140 = vmatprep.subr.mxu0 0.0
        %2141 = vmatpush1.msra.mxu0 0.0
        %2142 = vmatprep.subr.mxu0 0.0
        %2143 = vmatpush1.msra.mxu0 0.0
        %2144 = vmatprep.subr.mxu0 0.0
        %2145 = vmatpush1.msra.mxu0 0.0
        %2146 = vmatprep.subr.mxu0 0.0
        %2147 = vmatpush1.msra.mxu0 0.0
        %2148 = vmatprep.subr.mxu0 0.0
        %2149 = vmatpush1.msra.mxu0 0.0
        %2150 = vmatprep.subr.mxu0 0.0
        %2151 = vmatpush1.msra.mxu0 0.0
        %2152 = vmatprep.subr.mxu0 0.0
        %2153 = vmatpush1.msra.mxu0 0.0
        %2154 = vmatprep.subr.mxu0 0.0
        %2155 = vmatpush1.msra.mxu0 0.0
        %2156 = vmatprep.subr.mxu0 0.0
        %2157 = vmatpush1.msra.mxu0 0.0
        %2158 = vmatprep.subr.mxu0 0.0
        %2159 = vmatpush1.msra.mxu0 0.0
        %2160 = vmatprep.subr.mxu0 0.0
        %2161 = vmatpush1.msra.mxu0 0.0
        %2162 = vmatprep.subr.mxu0 0.0
        %2163 = vmatpush1.msra.mxu0 0.0
        %2164 = vmatprep.subr.mxu0 0.0
        %2165 = vmatpush1.msra.mxu0 0.0
        %2166 = vmatprep.subr.mxu0 0.0
        %2167 = vmatpush1.msra.mxu0 0.0
        %2168 = vmatprep.mubr.f32.mxu0 0.0
        %2169 = vmatmul.mubr.f32.gmra.mrb[0].mxu0 %v1514
        %v2170 = vpop.f32.mrb[0].mxu0
        %v2171 = vadd.f32 %v1485, %v2170
        %v2172 = vpop.f32.mrb[0].mxu0
        %2173 = vmatprep.mubr.f32.mxu0 0.0
        %2174 = vmatmul.mubr.f32.gmra.mrb[0].mxu0 %v1517
        %v2175 = vpop.f32.mrb[0].mxu0
        %v2176 = vadd.f32 %v1490, %v2175
        %v2177 = vpop.f32.mrb[0].mxu0
        %2178 = vmatprep.mubr.f32.mxu0 0.0
        %2179 = vmatmul.mubr.f32.gmra.mrb[0].mxu0 %v1520
        %v2180 = vpop.f32.mrb[0].mxu0
        %v2181 = vadd.f32 %v1495, %v2180
        %v2182 = vpop.f32.mrb[0].mxu0
        %2183 = vmatprep.mubr.f32.mxu0 0.0
        %2184 = vmatmul.mubr.f32.gmra.mrb[0].mxu0 %v1523
        %v2185 = vpop.f32.mrb[0].mxu0
        %v2186 = vadd.f32 %v1500, %v2185
        %v2187 = vpop.f32.mrb[0].mxu0
        %2188 = vmatprep.mubr.f32.mxu0 0.0
        %2189 = vmatmul.mubr.f32.gmra.mrb[0].mxu0 %v1526
        %v2190 = vpop.f32.mrb[0].mxu0
        %v2191 = vadd.f32 %v1505, %v2190
        %v2192 = vpop.f32.mrb[0].mxu0
        %2193 = vmatprep.mubr.f32.mxu0 0.0
        %2194 = vmatmul.mubr.f32.gmra.mrb[0].mxu0 %v1529
        %v2195 = vpop.f32.mrb[0].mxu0
        %v2196 = vadd.f32 %v1510, %v2195
        %v2197 = vpop.f32.mrb[0].mxu0
        %2198 = vdwg.mxu0
        %v2199 = vld [vmem:[%s976] sm:$0xff]
        %v2200 = vld [vmem:[%s976 + $0x8] sm:$0xff]
        %v2201 = vld [vmem:[%s976 + $0x10] sm:$0xff]
        %v2202 = vld [vmem:[%s976 + $0x18] sm:$0xff]
        %v2204 = vsel %vm1238, %v2076, 0
        %v2207 = vsel %vm1238, %v2081, 0
        %v2210 = vsel %vm1238, %v2086, 0
        %v2213 = vsel %vm1238, %v2091, 0
        %v2216 = vsel %vm1238, %v2096, 0
        %v2219 = vsel %vm1238, %v2101, 0
        %2221 = vmatprep.subr.mxu0 0.0
        %2222 = vmatpush1.msra.mxu0 %v2199
        %2223 = vmatprep.subr.mxu0 0.0
        %2224 = vmatpush1.msra.mxu0 %v2200
        %2225 = vmatprep.subr.mxu0 0.0
        %2226 = vmatpush1.msra.mxu0 %v2201
        %2227 = vmatprep.subr.mxu0 0.0
        %2228 = vmatpush1.msra.mxu0 %v2202
        %2229 = vmatprep.subr.mxu0 0.0
        %2230 = vmatpush1.msra.mxu0 0.0
        %2231 = vmatprep.subr.mxu0 0.0
        %2232 = vmatpush1.msra.mxu0 0.0
        %2233 = vmatprep.subr.mxu0 0.0
        %2234 = vmatpush1.msra.mxu0 0.0
        %2235 = vmatprep.subr.mxu0 0.0
        %2236 = vmatpush1.msra.mxu0 0.0
        %2237 = vmatprep.subr.mxu0 0.0
        %2238 = vmatpush1.msra.mxu0 0.0
        %2239 = vmatprep.subr.mxu0 0.0
        %2240 = vmatpush1.msra.mxu0 0.0
        %2241 = vmatprep.subr.mxu0 0.0
        %2242 = vmatpush1.msra.mxu0 0.0
        %2243 = vmatprep.subr.mxu0 0.0
        %2244 = vmatpush1.msra.mxu0 0.0
        %2245 = vmatprep.subr.mxu0 0.0
        %2246 = vmatpush1.msra.mxu0 0.0
        %2247 = vmatprep.subr.mxu0 0.0
        %2248 = vmatpush1.msra.mxu0 0.0
        %2249 = vmatprep.subr.mxu0 0.0
        %2250 = vmatpush1.msra.mxu0 0.0
        %2251 = vmatprep.subr.mxu0 0.0
        %2252 = vmatpush1.msra.mxu0 0.0
        %2253 = vmatprep.subr.mxu0 0.0
        %2254 = vmatpush1.msra.mxu0 0.0
        %2255 = vmatprep.subr.mxu0 0.0
        %2256 = vmatpush1.msra.mxu0 0.0
        %2257 = vmatprep.subr.mxu0 0.0
        %2258 = vmatpush1.msra.mxu0 0.0
        %2259 = vmatprep.subr.mxu0 0.0
        %2260 = vmatpush1.msra.mxu0 0.0
        %2261 = vmatprep.subr.mxu0 0.0
        %2262 = vmatpush1.msra.mxu0 0.0
        %2263 = vmatprep.subr.mxu0 0.0
        %2264 = vmatpush1.msra.mxu0 0.0
        %2265 = vmatprep.subr.mxu0 0.0
        %2266 = vmatpush1.msra.mxu0 0.0
        %2267 = vmatprep.subr.mxu0 0.0
        %2268 = vmatpush1.msra.mxu0 0.0
        %2269 = vmatprep.subr.mxu0 0.0
        %2270 = vmatpush1.msra.mxu0 0.0
        %2271 = vmatprep.subr.mxu0 0.0
        %2272 = vmatpush1.msra.mxu0 0.0
        %2273 = vmatprep.subr.mxu0 0.0
        %2274 = vmatpush1.msra.mxu0 0.0
        %2275 = vmatprep.subr.mxu0 0.0
        %2276 = vmatpush1.msra.mxu0 0.0
        %2277 = vmatprep.subr.mxu0 0.0
        %2278 = vmatpush1.msra.mxu0 0.0
        %2279 = vmatprep.subr.mxu0 0.0
        %2280 = vmatpush1.msra.mxu0 0.0
        %2281 = vmatprep.subr.mxu0 0.0
        %2282 = vmatpush1.msra.mxu0 0.0
        %2283 = vmatprep.subr.mxu0 0.0
        %2284 = vmatpush1.msra.mxu0 0.0
        %2285 = vmatprep.mubr.f32.mxu0 0.0
        %2286 = vmatmul.mubr.f32.gmra.mrb[0].mxu0 %v2204
        %v2287 = vpop.f32.mrb[0].mxu0
        %v2288 = vadd.f32 0.0, %v2287
        %v2289 = vpop.f32.mrb[0].mxu0
        %2290 = vmatprep.mubr.f32.mxu0 0.0
        %2291 = vmatmul.mubr.f32.gmra.mrb[0].mxu0 %v2207
        %v2292 = vpop.f32.mrb[0].mxu0
        %v2293 = vadd.f32 0.0, %v2292
        %v2294 = vpop.f32.mrb[0].mxu0
        %2295 = vmatprep.mubr.f32.mxu0 0.0
        %2296 = vmatmul.mubr.f32.gmra.mrb[0].mxu0 %v2210
        %v2297 = vpop.f32.mrb[0].mxu0
        %v2298 = vadd.f32 0.0, %v2297
        %v2299 = vpop.f32.mrb[0].mxu0
        %2300 = vmatprep.mubr.f32.mxu0 0.0
        %2301 = vmatmul.mubr.f32.gmra.mrb[0].mxu0 %v2213
        %v2302 = vpop.f32.mrb[0].mxu0
        %v2303 = vadd.f32 0.0, %v2302
        %v2304 = vpop.f32.mrb[0].mxu0
        %2305 = vmatprep.mubr.f32.mxu0 0.0
        %2306 = vmatmul.mubr.f32.gmra.mrb[0].mxu0 %v2216
        %v2307 = vpop.f32.mrb[0].mxu0
        %v2308 = vadd.f32 0.0, %v2307
        %v2309 = vpop.f32.mrb[0].mxu0
        %2310 = vmatprep.mubr.f32.mxu0 0.0
        %2311 = vmatmul.mubr.f32.gmra.mrb[0].mxu0 %v2219
        %v2312 = vpop.f32.mrb[0].mxu0
        %v2313 = vadd.f32 0.0, %v2312
        %v2314 = vpop.f32.mrb[0].mxu0
        %2315 = vdwg.mxu0
        %v2316 = vadd.f32 %v2171, %v2288
        %v2317 = vadd.f32 %v2176, %v2293
        %v2318 = vadd.f32 %v2181, %v2298
        %v2319 = vadd.f32 %v2186, %v2303
        %v2320 = vadd.f32 %v2191, %v2308
        %v2321 = vadd.f32 %v2196, %v2313
        %v2322 = vld [vmem:[%s1151] sm:$0x1]
        %v2324 = vlaneseq
        %v2325 = vshrl.u32 %v2324, 7
        %v2326 = vsub.s32 0, %v2325
        %v2327 = vrot.slane %v2322, %v2326
        %v2329 = vadd.f32 %v2316, %v2327
        %v2330 = vadd.f32 %v2317, %v2327
        %v2331 = vadd.f32 %v2318, %v2327
        %v2332 = vadd.f32 %v2319, %v2327
        %v2333 = vadd.f32 %v2320, %v2327
        %v2334 = vadd.f32 %v2321, %v2327
        %v2335 = vxor.u32 %v2329, 2147483648
        %v2336 = vxor.u32 %v2330, 2147483648
        %v2337 = vxor.u32 %v2331, 2147483648
        %v2338 = vxor.u32 %v2332, 2147483648
        %v2339 = vxor.u32 %v2333, 2147483648
        %v2340 = vxor.u32 %v2334, 2147483648
        %v2341 = vmul.f32 %v2335, 1.442695
        %v2342 = vpow.pop %v2341
        %v2343 = vmul.f32 %v2336, 1.442695
        %v2344 = vpow.pop %v2343
        %v2345 = vmul.f32 %v2337, 1.442695
        %v2346 = vpow.pop %v2345
        %v2347 = vmul.f32 %v2338, 1.442695
        %v2348 = vpow.pop %v2347
        %v2349 = vmul.f32 %v2339, 1.442695
        %v2350 = vpow.pop %v2349
        %v2351 = vmul.f32 %v2340, 1.442695
        %v2352 = vpow.pop %v2351
        %v2353 = vadd.f32 %v2342, 1.0
        %v2354 = vadd.f32 %v2344, 1.0
        %v2355 = vadd.f32 %v2346, 1.0
        %v2356 = vadd.f32 %v2348, 1.0
        %v2357 = vadd.f32 %v2350, 1.0
        %v2358 = vadd.f32 %v2352, 1.0
        %v2359 = vrcp.pop %v2353
        %v2360 = vmul.f32 1.0, %v2359
        %v2361 = vrcp.pop %v2354
        %v2362 = vmul.f32 1.0, %v2361
        %v2363 = vrcp.pop %v2355
        %v2364 = vmul.f32 1.0, %v2363
        %v2365 = vrcp.pop %v2356
        %v2366 = vmul.f32 1.0, %v2365
        %v2367 = vrcp.pop %v2357
        %v2368 = vmul.f32 1.0, %v2367
        %v2369 = vrcp.pop %v2358
        %v2370 = vmul.f32 1.0, %v2369
        %v2371 = vmul.f32 %v2329, %v2360
        %v2372 = vmul.f32 %v2330, %v2362
        %v2373 = vmul.f32 %v2331, %v2364
        %v2374 = vmul.f32 %v2332, %v2366
        %v2375 = vmul.f32 %v2333, %v2368
        %v2376 = vmul.f32 %v2334, %v2370
        %v2377 = vld [vmem:[%s985] sm:$0xff]
        %v2378 = vld [vmem:[%s985 + $0x8] sm:$0xff]
        %v2379 = vld [vmem:[%s985 + $0x10] sm:$0xff]
        %v2380 = vld [vmem:[%s985 + $0x18] sm:$0xff]
        %v2381 = vld [vmem:[%s1154] sm:$0x1]
        %v2383 = vlaneseq
        %v2384 = vshrl.u32 %v2383, 7
        %v2385 = vsub.s32 0, %v2384
        %v2386 = vrot.slane %v2381, %v2385
        %v2389 = vsel %vm1238, %v2371, 0
        %v2392 = vsel %vm1238, %v2372, 0
        %v2395 = vsel %vm1238, %v2373, 0
        %v2398 = vsel %vm1238, %v2374, 0
        %v2401 = vsel %vm1238, %v2375, 0
        %v2404 = vsel %vm1238, %v2376, 0
        %2406 = vmatprep.subr.mxu0 0.0
        %2407 = vmatpush1.msra.mxu0 %v2377
        %2408 = vmatprep.subr.mxu0 0.0
        %2409 = vmatpush1.msra.mxu0 %v2378
        %2410 = vmatprep.subr.mxu0 0.0
        %2411 = vmatpush1.msra.mxu0 %v2379
        %2412 = vmatprep.subr.mxu0 0.0
        %2413 = vmatpush1.msra.mxu0 %v2380
        %2414 = vmatprep.subr.mxu0 0.0
        %2415 = vmatpush1.msra.mxu0 0.0
        %2416 = vmatprep.subr.mxu0 0.0
        %2417 = vmatpush1.msra.mxu0 0.0
        %2418 = vmatprep.subr.mxu0 0.0
        %2419 = vmatpush1.msra.mxu0 0.0
        %2420 = vmatprep.subr.mxu0 0.0
        %2421 = vmatpush1.msra.mxu0 0.0
        %2422 = vmatprep.subr.mxu0 0.0
        %2423 = vmatpush1.msra.mxu0 0.0
        %2424 = vmatprep.subr.mxu0 0.0
        %2425 = vmatpush1.msra.mxu0 0.0
        %2426 = vmatprep.subr.mxu0 0.0
        %2427 = vmatpush1.msra.mxu0 0.0
        %2428 = vmatprep.subr.mxu0 0.0
        %2429 = vmatpush1.msra.mxu0 0.0
        %2430 = vmatprep.subr.mxu0 0.0
        %2431 = vmatpush1.msra.mxu0 0.0
        %2432 = vmatprep.subr.mxu0 0.0
        %2433 = vmatpush1.msra.mxu0 0.0
        %2434 = vmatprep.subr.mxu0 0.0
        %2435 = vmatpush1.msra.mxu0 0.0
        %2436 = vmatprep.subr.mxu0 0.0
        %2437 = vmatpush1.msra.mxu0 0.0
        %2438 = vmatprep.subr.mxu0 0.0
        %2439 = vmatpush1.msra.mxu0 0.0
        %2440 = vmatprep.subr.mxu0 0.0
        %2441 = vmatpush1.msra.mxu0 0.0
        %2442 = vmatprep.subr.mxu0 0.0
        %2443 = vmatpush1.msra.mxu0 0.0
        %2444 = vmatprep.subr.mxu0 0.0
        %2445 = vmatpush1.msra.mxu0 0.0
        %2446 = vmatprep.subr.mxu0 0.0
        %2447 = vmatpush1.msra.mxu0 0.0
        %2448 = vmatprep.subr.mxu0 0.0
        %2449 = vmatpush1.msra.mxu0 0.0
        %2450 = vmatprep.subr.mxu0 0.0
        %2451 = vmatpush1.msra.mxu0 0.0
        %2452 = vmatprep.subr.mxu0 0.0
        %2453 = vmatpush1.msra.mxu0 0.0
        %2454 = vmatprep.subr.mxu0 0.0
        %2455 = vmatpush1.msra.mxu0 0.0
        %2456 = vmatprep.subr.mxu0 0.0
        %2457 = vmatpush1.msra.mxu0 0.0
        %2458 = vmatprep.subr.mxu0 0.0
        %2459 = vmatpush1.msra.mxu0 0.0
        %2460 = vmatprep.subr.mxu0 0.0
        %2461 = vmatpush1.msra.mxu0 0.0
        %2462 = vmatprep.subr.mxu0 0.0
        %2463 = vmatpush1.msra.mxu0 0.0
        %2464 = vmatprep.subr.mxu0 0.0
        %2465 = vmatpush1.msra.mxu0 0.0
        %2466 = vmatprep.subr.mxu0 0.0
        %2467 = vmatpush1.msra.mxu0 0.0
        %2468 = vmatprep.subr.mxu0 0.0
        %2469 = vmatpush1.msra.mxu0 0.0
        %2470 = vmatprep.mubr.f32.mxu0 0.0
        %2471 = vmatmul.mubr.f32.gmra.mrb[0].mxu0 %v2389
        %v2472 = vpop.f32.mrb[0].mxu0
        %v2473 = vadd.f32 %v2386, %v2472
        %v2474 = vpop.f32.mrb[0].mxu0
        %2475 = vmatprep.mubr.f32.mxu0 0.0
        %2476 = vmatmul.mubr.f32.gmra.mrb[0].mxu0 %v2392
        %v2477 = vpop.f32.mrb[0].mxu0
        %v2478 = vadd.f32 %v2386, %v2477
        %v2479 = vpop.f32.mrb[0].mxu0
        %2480 = vmatprep.mubr.f32.mxu0 0.0
        %2481 = vmatmul.mubr.f32.gmra.mrb[0].mxu0 %v2395
        %v2482 = vpop.f32.mrb[0].mxu0
        %v2483 = vadd.f32 %v2386, %v2482
        %v2484 = vpop.f32.mrb[0].mxu0
        %2485 = vmatprep.mubr.f32.mxu0 0.0
        %2486 = vmatmul.mubr.f32.gmra.mrb[0].mxu0 %v2398
        %v2487 = vpop.f32.mrb[0].mxu0
        %v2488 = vadd.f32 %v2386, %v2487
        %v2489 = vpop.f32.mrb[0].mxu0
        %2490 = vmatprep.mubr.f32.mxu0 0.0
        %2491 = vmatmul.mubr.f32.gmra.mrb[0].mxu0 %v2401
        %v2492 = vpop.f32.mrb[0].mxu0
        %v2493 = vadd.f32 %v2386, %v2492
        %v2494 = vpop.f32.mrb[0].mxu0
        %2495 = vmatprep.mubr.f32.mxu0 0.0
        %2496 = vmatmul.mubr.f32.gmra.mrb[0].mxu0 %v2404
        %v2497 = vpop.f32.mrb[0].mxu0
        %v2498 = vadd.f32 %v2386, %v2497
        %v2499 = vpop.f32.mrb[0].mxu0
        %2500 = vdwg.mxu0
        %2501 = vxpose.xlu0.b32.start [1/16] %v1176, 128
        %2502 = vxpose.xlu0.b32.cont [2/16] %v1177, 128
        %2503 = vxpose.xlu0.b32.cont [3/16] %v1178, 128
        %2504 = vxpose.xlu0.b32.cont [4/16] %v1179, 128
        %2505 = vxpose.xlu0.b32.cont [5/16] %v1180, 128
        %2506 = vxpose.xlu0.b32.cont [6/16] %v1181, 128
        %2507 = vxpose.xlu0.b32.cont [7/16] 0.0, 128
        %2508 = vxpose.xlu0.b32.cont [8/16] 0.0, 128
        %2509 = vxpose.xlu0.b32.cont [9/16] 0.0, 128
        %2510 = vxpose.xlu0.b32.cont [10/16] 0.0, 128
        %2511 = vxpose.xlu0.b32.cont [11/16] 0.0, 128
        %2512 = vxpose.xlu0.b32.cont [12/16] 0.0, 128
        %2513 = vxpose.xlu0.b32.cont [13/16] 0.0, 128
        %2514 = vxpose.xlu0.b32.cont [14/16] 0.0, 128
        %2515 = vxpose.xlu0.b32.cont [15/16] 0.0, 128
        %2516 = vxpose.xlu0.b32.end [16/16] 0.0, 128
        %v2517 = vpop.trf.xlu0
        %v2518 = vpop.trf.xlu0
        %v2519 = vpop.trf.xlu0
        %v2520 = vpop.trf.xlu0
        %v2521 = vpop.trf.xlu0
        %v2522 = vpop.trf.xlu0
        %v2523 = vpop.trf.xlu0
        %v2524 = vpop.trf.xlu0
        %v2525 = vpop.trf.xlu0
        %v2526 = vpop.trf.xlu0
        %v2527 = vpop.trf.xlu0
        %v2528 = vpop.trf.xlu0
        %v2529 = vpop.trf.xlu0
        %v2530 = vpop.trf.xlu0
        %v2531 = vpop.trf.xlu0
        %v2532 = vpop.trf.xlu0
        %vm2533 = vcmask 392192
        %v2535 = vsel %vm2533, %v2517, 0
        %v2538 = vsel %vm2533, %v2518, 0
        %2540 = vmatprep.subr.mxu0 0.0
        %2541 = vmatpush1.msra.mxu0 %v2473
        %2542 = vmatprep.subr.mxu0 0.0
        %2543 = vmatpush1.msra.mxu0 %v2478
        %2544 = vmatprep.subr.mxu0 0.0
        %2545 = vmatpush1.msra.mxu0 %v2483
        %2546 = vmatprep.subr.mxu0 0.0
        %2547 = vmatpush1.msra.mxu0 %v2488
        %2548 = vmatprep.subr.mxu0 0.0
        %2549 = vmatpush1.msra.mxu0 %v2493
        %2550 = vmatprep.subr.mxu0 0.0
        %2551 = vmatpush1.msra.mxu0 %v2498
        %2552 = vmatprep.subr.mxu0 0.0
        %2553 = vmatpush1.msra.mxu0 0.0
        %2554 = vmatprep.subr.mxu0 0.0
        %2555 = vmatpush1.msra.mxu0 0.0
        %2556 = vmatprep.subr.mxu0 0.0
        %2557 = vmatpush1.msra.mxu0 0.0
        %2558 = vmatprep.subr.mxu0 0.0
        %2559 = vmatpush1.msra.mxu0 0.0
        %2560 = vmatprep.subr.mxu0 0.0
        %2561 = vmatpush1.msra.mxu0 0.0
        %2562 = vmatprep.subr.mxu0 0.0
        %2563 = vmatpush1.msra.mxu0 0.0
        %2564 = vmatprep.subr.mxu0 0.0
        %2565 = vmatpush1.msra.mxu0 0.0
        %2566 = vmatprep.subr.mxu0 0.0
        %2567 = vmatpush1.msra.mxu0 0.0
        %2568 = vmatprep.subr.mxu0 0.0
        %2569 = vmatpush1.msra.mxu0 0.0
        %2570 = vmatprep.subr.mxu0 0.0
        %2571 = vmatpush1.msra.mxu0 0.0
        %2572 = vmatprep.subr.mxu0 0.0
        %2573 = vmatpush1.msra.mxu0 0.0
        %2574 = vmatprep.subr.mxu0 0.0
        %2575 = vmatpush1.msra.mxu0 0.0
        %2576 = vmatprep.subr.mxu0 0.0
        %2577 = vmatpush1.msra.mxu0 0.0
        %2578 = vmatprep.subr.mxu0 0.0
        %2579 = vmatpush1.msra.mxu0 0.0
        %2580 = vmatprep.subr.mxu0 0.0
        %2581 = vmatpush1.msra.mxu0 0.0
        %2582 = vmatprep.subr.mxu0 0.0
        %2583 = vmatpush1.msra.mxu0 0.0
        %2584 = vmatprep.subr.mxu0 0.0
        %2585 = vmatpush1.msra.mxu0 0.0
        %2586 = vmatprep.subr.mxu0 0.0
        %2587 = vmatpush1.msra.mxu0 0.0
        %2588 = vmatprep.subr.mxu0 0.0
        %2589 = vmatpush1.msra.mxu0 0.0
        %2590 = vmatprep.subr.mxu0 0.0
        %2591 = vmatpush1.msra.mxu0 0.0
        %2592 = vmatprep.subr.mxu0 0.0
        %2593 = vmatpush1.msra.mxu0 0.0
        %2594 = vmatprep.subr.mxu0 0.0
        %2595 = vmatpush1.msra.mxu0 0.0
        %2596 = vmatprep.subr.mxu0 0.0
        %2597 = vmatpush1.msra.mxu0 0.0
        %2598 = vmatprep.subr.mxu0 0.0
        %2599 = vmatpush1.msra.mxu0 0.0
        %2600 = vmatprep.subr.mxu0 0.0
        %2601 = vmatpush1.msra.mxu0 0.0
        %2602 = vmatprep.subr.mxu0 0.0
        %2603 = vmatpush1.msra.mxu0 0.0
        %2604 = vmatprep.mubr.f32.mxu0 0.0
        %2605 = vmatmul.mubr.f32.gmra.mrb[0].mxu0 %v2535
        %v2606 = vpop.f32.mrb[0].mxu0
        %v2607 = vadd.f32 0.0, %v2606
        %v2608 = vpop.f32.mrb[0].mxu0
        %2609 = vmatprep.mubr.f32.mxu0 0.0
        %2610 = vmatmul.mubr.f32.gmra.mrb[0].mxu0 %v2538
        %v2611 = vpop.f32.mrb[0].mxu0
        %v2612 = vadd.f32 0.0, %v2611
        %v2613 = vpop.f32.mrb[0].mxu0
        %2614 = vdwg.mxu0
        %2616 = vset.pattern.permute.xlu0 0
        %2617 = vperm.xlu0 %2616, %v1194
        %v2618 = vpop.permute.xlu0 %2617
        %2621 = vset.pattern.permute.xlu0 0
        %2622 = vperm.xlu0 %2621, %v1195
        %v2623 = vpop.permute.xlu0 %2622
        %v2625 = vmul.f32 %v2607, %v2618
        %v2626 = vmul.f32 %v2612, %v2623
        %v2627 = vadd.f32 %v2625, %v1172
        %v2628 = vadd.f32 %v2626, %v1173
        %v2629 = vsel %vm1238, %v2627, 0.0
        %2630 = vadd.xlane.f32.xlu0 %v2629
        %v2631 = vpop.xlane.xlu0 %2630
        %v2632 = vsel %vm1238, %v2628, 0.0
        %2633 = vadd.xlane.f32.xlu0 %v2632
        %v2634 = vpop.xlane.xlu0 %2633
        %v2635 = vrcp.pop 32.0
        %v2636 = vmul.f32 %v2631, %v2635
        %v2637 = vmul.f32 %v2634, %v2635
        %v2638 = vsub.f32 %v2627, %v2636
        %v2639 = vsub.f32 %v2628, %v2637
        %v2640 = vmul.f32 %v2638, %v2638
        %v2641 = vmul.f32 %v2639, %v2639
        %v2642 = vsel %vm1238, %v2640, 0.0
        %2643 = vadd.xlane.f32.xlu0 %v2642
        %v2644 = vpop.xlane.xlu0 %2643
        %v2645 = vsel %vm1238, %v2641, 0.0
        %2646 = vadd.xlane.f32.xlu0 %v2645
        %v2647 = vpop.xlane.xlu0 %2646
        %v2648 = vmul.f32 %v2644, %v2635
        %v2649 = vmul.f32 %v2647, %v2635
        %v2650 = vadd.f32 %v2648, 1e-05
        %v2651 = vadd.f32 %v2649, 1e-05
        %v2652 = vrsqrt.pop %v2650
        %v2653 = vrsqrt.pop %v2651
        %v2654 = vmul.f32 %v2638, %v2652
        %v2655 = vmul.f32 %v2639, %v2653
        %v2656 = vld [vmem:[%s1157] sm:$0x1]
        %v2658 = vlaneseq
        %v2659 = vshrl.u32 %v2658, 7
        %v2660 = vsub.s32 0, %v2659
        %v2661 = vrot.slane %v2656, %v2660
        %v2663 = vmul.f32 %v2654, %v2661
        %v2664 = vmul.f32 %v2655, %v2661
        %v2665 = vld [vmem:[%s1018] sm:$0x1]
        %v2667 = vlaneseq
        %v2668 = vshrl.u32 %v2667, 7
        %v2669 = vsub.s32 0, %v2668
        %v2670 = vrot.slane %v2665, %v2669
        %v2672 = vadd.f32 %v2663, %v2670
        %v2673 = vadd.f32 %v2664, %v2670
        %v2674 = vld [vmem:[%s994] sm:$0xff]
        %v2675 = vld [vmem:[%s994 + $0x8] sm:$0xff]
        %v2676 = vld [vmem:[%s994 + $0x10] sm:$0xff]
        %v2677 = vld [vmem:[%s994 + $0x18] sm:$0xff]
        %v2678 = vld [vmem:[%s1002] sm:$0x1]
        %v2680 = vlaneseq
        %v2681 = vshrl.u32 %v2680, 7
        %v2682 = vsub.s32 0, %v2681
        %v2683 = vrot.slane %v2678, %v2682
        %v2686 = vsel %vm1238, %v2672, 0
        %v2689 = vsel %vm1238, %v2673, 0
        %2691 = vmatprep.subr.mxu0 0.0
        %2692 = vmatpush1.msra.mxu0 %v2674
        %2693 = vmatprep.subr.mxu0 0.0
        %2694 = vmatpush1.msra.mxu0 %v2675
        %2695 = vmatprep.subr.mxu0 0.0
        %2696 = vmatpush1.msra.mxu0 %v2676
        %2697 = vmatprep.subr.mxu0 0.0
        %2698 = vmatpush1.msra.mxu0 %v2677
        %2699 = vmatprep.subr.mxu0 0.0
        %2700 = vmatpush1.msra.mxu0 0.0
        %2701 = vmatprep.subr.mxu0 0.0
        %2702 = vmatpush1.msra.mxu0 0.0
        %2703 = vmatprep.subr.mxu0 0.0
        %2704 = vmatpush1.msra.mxu0 0.0
        %2705 = vmatprep.subr.mxu0 0.0
        %2706 = vmatpush1.msra.mxu0 0.0
        %2707 = vmatprep.subr.mxu0 0.0
        %2708 = vmatpush1.msra.mxu0 0.0
        %2709 = vmatprep.subr.mxu0 0.0
        %2710 = vmatpush1.msra.mxu0 0.0
        %2711 = vmatprep.subr.mxu0 0.0
        %2712 = vmatpush1.msra.mxu0 0.0
        %2713 = vmatprep.subr.mxu0 0.0
        %2714 = vmatpush1.msra.mxu0 0.0
        %2715 = vmatprep.subr.mxu0 0.0
        %2716 = vmatpush1.msra.mxu0 0.0
        %2717 = vmatprep.subr.mxu0 0.0
        %2718 = vmatpush1.msra.mxu0 0.0
        %2719 = vmatprep.subr.mxu0 0.0
        %2720 = vmatpush1.msra.mxu0 0.0
        %2721 = vmatprep.subr.mxu0 0.0
        %2722 = vmatpush1.msra.mxu0 0.0
        %2723 = vmatprep.subr.mxu0 0.0
        %2724 = vmatpush1.msra.mxu0 0.0
        %2725 = vmatprep.subr.mxu0 0.0
        %2726 = vmatpush1.msra.mxu0 0.0
        %2727 = vmatprep.subr.mxu0 0.0
        %2728 = vmatpush1.msra.mxu0 0.0
        %2729 = vmatprep.subr.mxu0 0.0
        %2730 = vmatpush1.msra.mxu0 0.0
        %2731 = vmatprep.subr.mxu0 0.0
        %2732 = vmatpush1.msra.mxu0 0.0
        %2733 = vmatprep.subr.mxu0 0.0
        %2734 = vmatpush1.msra.mxu0 0.0
        %2735 = vmatprep.subr.mxu0 0.0
        %2736 = vmatpush1.msra.mxu0 0.0
        %2737 = vmatprep.subr.mxu0 0.0
        %2738 = vmatpush1.msra.mxu0 0.0
        %2739 = vmatprep.subr.mxu0 0.0
        %2740 = vmatpush1.msra.mxu0 0.0
        %2741 = vmatprep.subr.mxu0 0.0
        %2742 = vmatpush1.msra.mxu0 0.0
        %2743 = vmatprep.subr.mxu0 0.0
        %2744 = vmatpush1.msra.mxu0 0.0
        %2745 = vmatprep.subr.mxu0 0.0
        %2746 = vmatpush1.msra.mxu0 0.0
        %2747 = vmatprep.subr.mxu0 0.0
        %2748 = vmatpush1.msra.mxu0 0.0
        %2749 = vmatprep.subr.mxu0 0.0
        %2750 = vmatpush1.msra.mxu0 0.0
        %2751 = vmatprep.subr.mxu0 0.0
        %2752 = vmatpush1.msra.mxu0 0.0
        %2753 = vmatprep.subr.mxu0 0.0
        %2754 = vmatpush1.msra.mxu0 0.0
        %2755 = vmatprep.mubr.f32.mxu0 0.0
        %2756 = vmatmul.mubr.f32.gmra.mrb[0].mxu0 %v2686
        %v2757 = vpop.f32.mrb[0].mxu0
        %v2758 = vadd.f32 %v2683, %v2757
        %v2759 = vpop.f32.mrb[0].mxu0
        %2760 = vmatprep.mubr.f32.mxu0 0.0
        %2761 = vmatmul.mubr.f32.gmra.mrb[0].mxu0 %v2689
        %v2762 = vpop.f32.mrb[0].mxu0
        %v2763 = vadd.f32 %v2683, %v2762
        %v2764 = vpop.f32.mrb[0].mxu0
        %2765 = vdwg.mxu0
        %v2766 = vxor.u32 %v2758, 2147483648
        %v2767 = vxor.u32 %v2763, 2147483648
        %v2768 = vmul.f32 %v2766, 1.442695
        %v2769 = vpow.pop %v2768
        %v2770 = vmul.f32 %v2767, 1.442695
        %v2771 = vpow.pop %v2770
        %v2772 = vadd.f32 %v2769, 1.0
        %v2773 = vadd.f32 %v2771, 1.0
        %v2774 = vrcp.pop %v2772
        %v2775 = vmul.f32 1.0, %v2774
        %v2776 = vrcp.pop %v2773
        %v2777 = vmul.f32 1.0, %v2776
        %v2778 = vmul.f32 %v2758, %v2775
        %v2779 = vmul.f32 %v2763, %v2777
        %v2780 = vld [vmem:[%s1010] sm:$0x1]
        %v2782 = vlaneseq
        %v2783 = vshrl.u32 %v2782, 7
        %v2784 = vsub.s32 0, %v2783
        %v2785 = vrot.slane %v2780, %v2784
        %v2787 = vmul.f32 %v2778, %v2785
        %v2788 = vmul.f32 %v2779, %v2785
        %v2789 = vsel %vm1238, %v2787, 0.0
        %2790 = vadd.xlane.f32.xlu0 %v2789
        %v2791 = vpop.xlane.xlu0 %2790
        %v2792 = vsel %vm1238, %v2788, 0.0
        %2793 = vadd.xlane.f32.xlu0 %v2792
        %v2794 = vpop.xlane.xlu0 %2793
        %2795 = vmatprep.subr.mxu0 0.0
        %2796 = vmatpush1.msra.mxu0 %v1721
        %2797 = vmatprep.subr.mxu0 0.0
        %2798 = vmatpush1.msra.mxu0 %v1722
        %2799 = vmatprep.subr.mxu0 0.0
        %2800 = vmatpush1.msra.mxu0 %v1723
        %2801 = vmatprep.subr.mxu0 0.0
        %2802 = vmatpush1.msra.mxu0 %v1724
        %2803 = vmatprep.subr.mxu0 0.0
        %2804 = vmatpush1.msra.mxu0 %v1725
        %2805 = vmatprep.subr.mxu0 0.0
        %2806 = vmatpush1.msra.mxu0 %v1726
        %2807 = vmatprep.subr.mxu0 0.0
        %2808 = vmatpush1.msra.mxu0 0.0
        %2809 = vmatprep.subr.mxu0 0.0
        %2810 = vmatpush1.msra.mxu0 0.0
        %2811 = vmatprep.subr.mxu0 0.0
        %2812 = vmatpush1.msra.mxu0 0.0
        %2813 = vmatprep.subr.mxu0 0.0
        %2814 = vmatpush1.msra.mxu0 0.0
        %2815 = vmatprep.subr.mxu0 0.0
        %2816 = vmatpush1.msra.mxu0 0.0
        %2817 = vmatprep.subr.mxu0 0.0
        %2818 = vmatpush1.msra.mxu0 0.0
        %2819 = vmatprep.subr.mxu0 0.0
        %2820 = vmatpush1.msra.mxu0 0.0
        %2821 = vmatprep.subr.mxu0 0.0
        %2822 = vmatpush1.msra.mxu0 0.0
        %2823 = vmatprep.subr.mxu0 0.0
        %2824 = vmatpush1.msra.mxu0 0.0
        %2825 = vmatprep.subr.mxu0 0.0
        %2826 = vmatpush1.msra.mxu0 0.0
        %2827 = vmatprep.subr.mxu0 0.0
        %2828 = vmatpush1.msra.mxu0 0.0
        %2829 = vmatprep.subr.mxu0 0.0
        %2830 = vmatpush1.msra.mxu0 0.0
        %2831 = vmatprep.subr.mxu0 0.0
        %2832 = vmatpush1.msra.mxu0 0.0
        %2833 = vmatprep.subr.mxu0 0.0
        %2834 = vmatpush1.msra.mxu0 0.0
        %2835 = vmatprep.subr.mxu0 0.0
        %2836 = vmatpush1.msra.mxu0 0.0
        %2837 = vmatprep.subr.mxu0 0.0
        %2838 = vmatpush1.msra.mxu0 0.0
        %2839 = vmatprep.subr.mxu0 0.0
        %2840 = vmatpush1.msra.mxu0 0.0
        %2841 = vmatprep.subr.mxu0 0.0
        %2842 = vmatpush1.msra.mxu0 0.0
        %2843 = vmatprep.subr.mxu0 0.0
        %2844 = vmatpush1.msra.mxu0 0.0
        %2845 = vmatprep.subr.mxu0 0.0
        %2846 = vmatpush1.msra.mxu0 0.0
        %2847 = vmatprep.subr.mxu0 0.0
        %2848 = vmatpush1.msra.mxu0 0.0
        %2849 = vmatprep.subr.mxu0 0.0
        %2850 = vmatpush1.msra.mxu0 0.0
        %2851 = vmatprep.subr.mxu0 0.0
        %2852 = vmatpush1.msra.mxu0 0.0
        %2853 = vmatprep.subr.mxu0 0.0
        %2854 = vmatpush1.msra.mxu0 0.0
        %2855 = vmatprep.subr.mxu0 0.0
        %2856 = vmatpush1.msra.mxu0 0.0
        %2857 = vmatprep.subr.mxu0 0.0
        %2858 = vmatpush1.msra.mxu0 0.0
        %2859 = vmatprep.mubr.f32.mxu0 0.0
        %2860 = vmatmul.mubr.f32.gmra.mrb[0].mxu0 %v2535
        %v2861 = vpop.f32.mrb[0].mxu0
        %v2862 = vadd.f32 0.0, %v2861
        %v2863 = vpop.f32.mrb[0].mxu0
        %2864 = vmatprep.mubr.f32.mxu0 0.0
        %2865 = vmatmul.mubr.f32.gmra.mrb[0].mxu0 %v2538
        %v2866 = vpop.f32.mrb[0].mxu0
        %v2867 = vadd.f32 0.0, %v2866
        %v2868 = vpop.f32.mrb[0].mxu0
        %2869 = vdwg.mxu0
        %v2870 = vmul.f32 %v2791, %v2862
        %v2871 = vmul.f32 %v2794, %v2867
        %2872 = vst.msk [vmem:[#allocation22] sm:$0xff] %vm1238, %v2672
        %2873 = vst.msk [vmem:[#allocation22 + $0x8] sm:$0xff] %vm1238, %v2673
        %v2874 = vmul.f32 %v2870, %v1230
        %v2875 = vmul.f32 %v2871, %v1230
        %v2876 = vadd.f32 %v1174, %v2874
        %v2877 = vadd.f32 %v1175, %v2875
        %2878 = vst.msk [vmem:[%s23] sm:$0xff] %vm1196, %v2876
        %2879 = vst.msk [vmem:[%s23 + $0x8] sm:$0xff] %vm1196, %v2877
        // Predicated region
        $region161: #{egnn_forward.1} parent=107 // pred_check
          %p2880 = pneg %p610
        $region162: #{egnn_forward.1} parent=107 // pred_check_branch
          %2882 = sbr.rel (%p2880) target = $region164
        $region163: #{egnn_forward.1} parent=107 // pred_region
          %s2884 = ssub.s32 256, 256
          %2885 = vsyncadd [#allocation4], %s2884
          %s2886 = sshll.u32 [#allocation22], 4
          %s2887 = int_to_ptr.vmem [resolvable:$true] %s2886
          %2892 = dma.vmem_to_hbm [thread:$0]  %s2887, 256, %s22, [#allocation4], 128, 128, 8
        $region164: #{egnn_forward.1} parent=107 // pred_fallthru
          _
        // Predicated region
        $region165: #{egnn_forward.1} parent=107 // pred_check
          %p2893 = pneg %p631
        $region166: #{egnn_forward.1} parent=107 // pred_check_branch
          %2895 = sbr.rel (%p2893) target = $region168
        $region167: #{egnn_forward.1} parent=107 // pred_region
          _
        $region168: #{egnn_forward.1} parent=107 // pred_fallthru
          _
        // Predicated region
        $region169: #{egnn_forward.1} parent=107 // pred_check
          %p2896 = pneg %p610
        $region170: #{egnn_forward.1} parent=107 // pred_check_branch
          %2898 = sbr.rel (%p2896) target = $region172
        $region171: #{egnn_forward.1} parent=107 // pred_region
          %2899 = dma.done [#allocation4], 256
        $region172: #{egnn_forward.1} parent=107 // pred_fallthru
          _
        // Predicated region
        $region173: #{egnn_forward.1} parent=107 // pred_check
          %p2900 = pneg %p631
        $region174: #{egnn_forward.1} parent=107 // pred_check_branch
          %2902 = sbr.rel (%p2900) target = $region176
        $region175: #{egnn_forward.1} parent=107 // pred_region
          _
        $region176: #{egnn_forward.1} parent=107 // pred_fallthru
          _
      $region108: #{egnn_forward.1} parent=5 // pred_fallthru
        _
      %p2903 = scmp.le.s32.totalorder 2, %s50
      // Predicated region
      $region177: #{egnn_forward.1} parent=5 // pred_check
        %p2904 = pneg %p2903
      $region178: #{egnn_forward.1} parent=5 // pred_check_branch
        %2906 = sbr.rel (%p2904) target = $region180
      $region179: #{egnn_forward.1} parent=5 // pred_region
        %s2907 = ssub.s32 %s50, 2
      $region180: #{egnn_forward.1} parent=5 // pred_fallthru
        _
    $region6: #{egnn_forward.1} parent=1 // loop_footer
      %s54 = sadd.s32 1, %s50
    $region7: #{egnn_forward.1} parent=1 // loop_footer_branch
      %49 = sbr.rel target = $region3
    $region8: #{egnn_forward.1} parent=1 // loop_exit
      _
    %2908 = vsyncpa [#allocation3], 1
    %s2909 = scalar_lea.sflag [#allocation3], 1
    %2910 = vsyncpa %s2909, 1
    %2911 = vsyncpa [#allocation6], 1
    %s2912 = scalar_lea.sflag [#allocation6], 1
    %2913 = vsyncpa %s2912, 1
    %2914 = vsyncpa [#allocation9], 1
    %s2915 = scalar_lea.sflag [#allocation9], 1
    %2916 = vsyncpa %s2915, 1
    %2917 = vsyncpa [#allocation12], 1
    %s2918 = scalar_lea.sflag [#allocation12], 1
    %2919 = vsyncpa %s2918, 1
    %2920 = vsyncpa [#allocation15], 1
    %s2921 = scalar_lea.sflag [#allocation15], 1
    %2922 = vsyncpa %s2921, 1
    %2923 = vsyncpa [#allocation18], 1
    %s2924 = scalar_lea.sflag [#allocation18], 1
    %2925 = vsyncpa %s2924, 1
    %2926 = vsyncpa [#allocation21], 1
    %s2927 = scalar_lea.sflag [#allocation21], 1
    %2928 = vsyncpa %s2927, 1
    %2929 = vsyncpa [#allocation4], 1
    %s2930 = scalar_lea.sflag [#allocation4], 1
    %2931 = vsyncpa %s2930, 1

</llo_original>
